<compile_context>
chip_gen: v5e
topology: v5e:2x2
jax: 0.10.0
libtpu: 0.0.40
codegen_flags: <defaults>
</compile_context>

<pallas_src>
import functools
import math

import jax
import jax.numpy as jnp
from jax import lax
from jax.experimental import pallas as pl
from jax.experimental.pallas import tpu as pltpu


def _round_up(a, b):
    return ((a + b - 1) // b) * b


# ----------------------------------------------------------------------------
# Conv kernel: fused im2col (9 shifted taps) + folded-BN bias + PReLU
# ----------------------------------------------------------------------------

def _conv3x3_kernel(x_ref, w_ref, b_ref, a_ref, o_ref):
    """One row-window of one image of one group.

    Blocks:
      x: (1, 1, TH+2, W+2, Cin)  bf16  reflection-padded NHWC window (+halo)
      w: (1, 9, Cin, Cout)       bf16  BN-scale-folded taps (kh*3+kw ordering)
      b: (1, 1, Cout)            f32   folded bias ((conv_b - mean)*s + beta)
      a: (G,)                    f32   PReLU alpha per group (SMEM)
      o: (1, 1, TH, W, Cout)     bf16
    """
    xb = x_ref[0, 0]                                # (TH+2, W+2, Cin)
    thp, wp, cin = xb.shape
    th, w_out = thp - 2, wp - 2
    cout = o_ref.shape[-1]

    acc = jnp.zeros((th * w_out, cout), jnp.float32)
    for kh in range(3):
        for kw in range(3):
            patch = xb[kh:kh + th, kw:kw + w_out, :].reshape(th * w_out, cin)
            acc = acc + jnp.dot(patch, w_ref[0, kh * 3 + kw],
                                preferred_element_type=jnp.float32)

    z = acc + b_ref[0]
    alpha = a_ref[pl.program_id(0)]
    z = jnp.where(z >= 0.0, z, alpha * z)
    # TODO(synk): option (b) of the review -- transpose so M is the lane axis
    # (Cout on sublanes) for fully unmasked stores; masked vst on 4-16 lanes is
    # accepted here since it already cuts writeback 8-32x vs. the padded f32.
    o_ref[0, 0] = z.reshape(th, w_out, cout).astype(o_ref.dtype)


def conv_bn_prelu_group(x, w, b, gamma, beta, mean, var, alpha):
    """ReflectionPad(1) + Conv2d 3x3 (stride 1) + BatchNorm2d(eval) + PReLU for
    G independent parameter groups.

    x: (G, N, H, W, Cin) bf16 NHWC.  w: (G, Cout, Cin, 3, 3).
    b/gamma/beta/mean/var: (G, Cout).  alpha: (G,).
    Returns (G, N, H, W, Cout) bf16 NHWC.
    """
    g, n, h, wd, cin = x.shape
    cout = w.shape[1]

    # Fold BN (eval): y = (conv + b - mean)*s + beta, s = gamma/sqrt(var+eps)
    s = gamma / jnp.sqrt(var + 1e-5)                          # (G, Cout)
    wk = (w * s[:, :, None, None, None]).transpose(0, 3, 4, 2, 1)   # (G,3,3,Cin,Cout)
    wk = wk.reshape(g, 9, cin, cout).astype(jnp.bfloat16)
    bias = ((b - mean) * s + beta).reshape(g, 1, cout).astype(jnp.float32)

    # Reflection pad H and W by 1 (single cheap pass, no 9x patch expansion).
    xp = jnp.pad(x, ((0, 0), (0, 0), (1, 1), (1, 1), (0, 0)), mode="reflect")

    # Row tiling: ~32K output pixels per grid step (fits comfortably in VMEM on
    # v5e/v6e/v7x with double buffering); full image per step when small.
    target = 32768
    if h * wd <= target:
        th = h
    else:
        th = min(h, max(8, (target // wd) // 8 * 8))
    nh = -(-h // th)
    hpad = nh * th
    if hpad != h:
        xp = jnp.pad(xp, ((0, 0), (0, 0), (0, hpad - h), (0, 0), (0, 0)))

    if nh == 1:
        win = xp                                              # (G, N, H+2, W+2, Cin)
    else:
        win = jnp.stack([xp[:, :, i * th:i * th + th + 2] for i in range(nh)],
                        axis=2)                               # (G, N, nh, TH+2, W+2, Cin)
        win = win.reshape(g, n * nh, th + 2, wd + 2, cin)
    win = win.astype(jnp.bfloat16)
    s_axis = n * nh

    # TODO(synk): sweep pipeline_mode=pl.Buffered(3) on the window input once
    # traces confirm DMA is exposed at small per-step tiles.
    out = pl.pallas_call(
        _conv3x3_kernel,
        grid=(g, s_axis),
        in_specs=[
            pl.BlockSpec((1, 1, th + 2, wd + 2, cin), lambda gi, si: (gi, si, 0, 0, 0)),
            pl.BlockSpec((1, 9, cin, cout), lambda gi, si: (gi, 0, 0, 0)),
            pl.BlockSpec((1, 1, cout), lambda gi, si: (gi, 0, 0)),
            pl.BlockSpec(memory_space=pltpu.MemorySpace.SMEM),
        ],
        out_specs=pl.BlockSpec((1, 1, th, wd, cout), lambda gi, si: (gi, si, 0, 0, 0)),
        out_shape=jax.ShapeDtypeStruct((g, s_axis, th, wd, cout), jnp.bfloat16),
        compiler_params=pltpu.CompilerParams(
            dimension_semantics=("parallel", "parallel"),
            vmem_limit_bytes=32 * 1024 * 1024),
    )(win, wk, bias, alpha.astype(jnp.float32))

    out = out.reshape(g, n, nh * th, wd, cout)[:, :, :h]
    return out


def _stack_blocks(blocks):
    out = {key: jnp.stack([jnp.asarray(blk[key]) for blk in blocks])
           for key in ("w", "b", "gamma", "beta", "mean", "var")}
    out["alpha"] = jnp.stack(
        [jnp.asarray(blk["alpha"], jnp.float32).reshape(()) for blk in blocks])
    return out


# ----------------------------------------------------------------------------
# Fused PE + 1-head MHA (eval, flash-style) + residual + MLP
# ----------------------------------------------------------------------------

def _attn_mlp_kernel(xq_ref, xkv_ref, pe_ref,
                     wq_ref, bq_ref, wk_ref, bk_ref, wv_ref, bv_ref,
                     wo_ref, bo_ref, w1_ref, b1_ref, w2_ref, b2_ref,
                     o_ref, q_sc, m_sc, l_sc, acc_sc,
                     *, l_valid, tk, need_mask):
    """grid = (modality, q_tile, kv_tile); online softmax over kv tiles."""
    ki = pl.program_id(2)
    pe = pe_ref[...]                                  # (N, 1, E) f32
    n, tq, e = q_sc.shape

    @pl.when(ki == 0)
    def _():
        xq = xq_ref[0].astype(jnp.float32)            # (N, TQ, E)
        q_in = (xq + pe).reshape(n * tq, e).astype(jnp.bfloat16)
        qp = jnp.dot(q_in, wq_ref[0], preferred_element_type=jnp.float32) + bq_ref[0]
        q_sc[...] = qp.reshape(n, tq, e).astype(jnp.bfloat16)
        m_sc[...] = jnp.full(m_sc.shape, -jnp.inf, jnp.float32)
        l_sc[...] = jnp.zeros(l_sc.shape, jnp.float32)
        acc_sc[...] = jnp.zeros(acc_sc.shape, jnp.float32)

    xkv = xkv_ref[0].astype(jnp.float32)              # (N, TK, E)
    ntk = xkv.shape[1]
    k_in = (xkv + pe).reshape(n * ntk, e).astype(jnp.bfloat16)
    v_in = xkv.reshape(n * ntk, e).astype(jnp.bfloat16)   # V excludes PE (ref quirk)
    kp = jnp.dot(k_in, wk_ref[0], preferred_element_type=jnp.float32) + bk_ref[0]
    vp = jnp.dot(v_in, wv_ref[0], preferred_element_type=jnp.float32) + bv_ref[0]
    kp = kp.reshape(n, ntk, e).astype(jnp.bfloat16)
    vp = vp.reshape(n, ntk, e).astype(jnp.bfloat16)

    # scores already scaled: 1/sqrt(E) folded into Wq/bq at weight-prep time
    scores = jnp.einsum("bqd,bkd->bqk", q_sc[...], kp,
                        preferred_element_type=jnp.float32)     # (N, TQ, TK)
    if need_mask:
        kv_pos = ki * tk + lax.broadcasted_iota(jnp.int32, scores.shape, 2)
        scores = jnp.where(kv_pos < l_valid, scores, -jnp.inf)

    m_prev = m_sc[...]
    m_new = jnp.maximum(m_prev, jnp.max(scores, axis=-1, keepdims=True))
    corr = jnp.exp(m_prev - m_new)
    p = jnp.exp(scores - m_new)
    l_sc[...] = corr * l_sc[...] + jnp.sum(p, axis=-1, keepdims=True)
    acc_sc[...] = corr * acc_sc[...] + jnp.einsum(
        "bqk,bkd->bqd", p.astype(jnp.bfloat16), vp,
        preferred_element_type=jnp.float32)
    m_sc[...] = m_new

    @pl.when(ki == pl.num_programs(2) - 1)
    def _():
        xq = xq_ref[0].astype(jnp.float32)
        ctx = acc_sc[...] * pl.reciprocal(l_sc[...], approx=True)
        ctx = ctx.reshape(n * tq, e).astype(jnp.bfloat16)
        attn_out = (jnp.dot(ctx, wo_ref[0], preferred_element_type=jnp.float32)
                    + bo_ref[0])
        y = attn_out + xq.reshape(n * tq, e)          # residual = pre-PE query
        h = jnp.maximum(
            jnp.dot(y.astype(jnp.bfloat16), w1_ref[0],
                    preferred_element_type=jnp.float32) + b1_ref[0], 0.0)
        out = jnp.dot(h.astype(jnp.bfloat16), w2_ref[0],
                      preferred_element_type=jnp.float32) + b2_ref[0]
        o_ref[0] = out.reshape(n, tq, e).astype(o_ref.dtype)


def _prep_attn_weights(mha, mlp, e):
    scale = 1.0 / math.sqrt(e)                 # fold 1/sqrt(E) into Wq/bq
    in_w, in_b = mha["in_w"], mha["in_b"]
    wq = (in_w[:e].T * scale).astype(jnp.bfloat16)
    wk = in_w[e:2 * e].T.astype(jnp.bfloat16)
    wv = in_w[2 * e:].T.astype(jnp.bfloat16)
    bq = (in_b[:e] * scale)[None, :].astype(jnp.float32)
    bk = in_b[e:2 * e][None, :].astype(jnp.float32)
    bv = in_b[2 * e:][None, :].astype(jnp.float32)
    wo = mha["out_w"].T.astype(jnp.bfloat16)
    bo = mha["out_b"][None, :].astype(jnp.float32)
    w1 = mlp["w1"].T.astype(jnp.bfloat16)
    b1 = mlp["b1"][None, :].astype(jnp.float32)
    w2 = mlp["w2"].T.astype(jnp.bfloat16)
    b2 = mlp["b2"][None, :].astype(jnp.float32)
    return wq, bq, wk, bk, wv, bv, wo, bo, w1, b1, w2, b2


def attn_mlp_pair(xq, xkv, pe, mha_pair, mlp_pair, e):
    """Fused [PE + MHA(eval) + residual + MLP] for both modalities in one call.

    xq/xkv: (2, N, L, E) bf16 tokens.  pe: (N, 1, E) f32.  Returns (2, N, L, E) bf16.
    """
    g, n, l, e_ = xq.shape
    assert e_ == e
    preps = [_prep_attn_weights(m, p, e) for m, p in zip(mha_pair, mlp_pair)]
    wq, bq, wk, bk, wv, bv, wo, bo, w1, b1, w2, b2 = [jnp.stack(t) for t in zip(*preps)]
    hid = w1.shape[-1]

    # q/kv tile size: big enough to pipeline, small enough for v7x's 64 MiB VMEM.
    l8 = _round_up(l, 8)
    tq = min(512, l8)
    lpad = _round_up(l, tq)
    if lpad != l:
        xq = jnp.pad(xq, ((0, 0), (0, 0), (0, lpad - l), (0, 0)))
        xkv = jnp.pad(xkv, ((0, 0), (0, 0), (0, lpad - l), (0, 0)))
    nq = lpad // tq
    nk = nq

    kernel = functools.partial(_attn_mlp_kernel, l_valid=l, tk=tq,
                               need_mask=(lpad != l))

    seq_q = pl.BlockSpec((1, n, tq, e), lambda gi, qi, ki: (gi, 0, qi, 0))
    seq_k = pl.BlockSpec((1, n, tq, e), lambda gi, qi, ki: (gi, 0, ki, 0))
    wspec = lambda r, c: pl.BlockSpec((1, r, c), lambda gi, qi, ki: (gi, 0, 0))

    out = pl.pallas_call(
        kernel,
        grid=(g, nq, nk),
        in_specs=[
            seq_q, seq_k,
            pl.BlockSpec((n, 1, e), lambda gi, qi, ki: (0, 0, 0)),
            wspec(e, e), wspec(1, e),            # Wq*scale, bq*scale
            wspec(e, e), wspec(1, e),            # Wk, bk
            wspec(e, e), wspec(1, e),            # Wv, bv
            wspec(e, e), wspec(1, e),            # Wo, bo
            wspec(e, hid), wspec(1, hid),        # MLP layer 1
            wspec(hid, e), wspec(1, e),          # MLP layer 2
        ],
        out_specs=pl.BlockSpec((1, n, tq, e), lambda gi, qi, ki: (gi, 0, qi, 0)),
        out_shape=jax.ShapeDtypeStruct((g, n, lpad, e), jnp.bfloat16),
        scratch_shapes=[
            pltpu.VMEM((n, tq, e), jnp.bfloat16),   # scaled q projection
            pltpu.VMEM((n, tq, 1), jnp.float32),    # running max
            pltpu.VMEM((n, tq, 1), jnp.float32),    # running denom
            pltpu.VMEM((n, tq, e), jnp.float32),    # running weighted V
        ],
        compiler_params=pltpu.CompilerParams(
            dimension_semantics=("parallel", "parallel", "arbitrary"),
            vmem_limit_bytes=32 * 1024 * 1024),
    )(xq, xkv, pe, wq, bq, wk, bk, wv, bv, wo, bo, w1, b1, w2, b2)
    return out[:, :, :l, :]


# ----------------------------------------------------------------------------
# Fold / Unfold (kernel == stride == 4 -> pure reshapes, PyTorch ordering) + PE
# ----------------------------------------------------------------------------

def positional_encoding(n, d):
    pos = jnp.arange(n, dtype=jnp.float32)[:, None]
    div = jnp.exp(jnp.arange(0, d, 2, dtype=jnp.float32) * (-math.log(10000.0) / d))
    pe = jnp.zeros((n, d), dtype=jnp.float32)
    pe = pe.at[:, 0::2].set(jnp.sin(pos * div))
    pe = pe.at[:, 1::2].set(jnp.cos(pos * div))
    return pe


# ----------------------------------------------------------------------------
# Deterministic parameter initialization (synthetic, not a checkpoint)
# ----------------------------------------------------------------------------

def init_conv_block(key, cin, cout):
    k1, k2, k3, k4, k5, k6 = jax.random.split(key, 6)
    return dict(
        w=0.1 * jax.random.normal(k1, (cout, cin, 3, 3), jnp.float32),
        b=0.1 * jax.random.normal(k2, (cout,), jnp.float32),
        gamma=1.0 + 0.1 * jax.random.normal(k3, (cout,), jnp.float32),
        beta=0.1 * jax.random.normal(k4, (cout,), jnp.float32),
        mean=0.1 * jax.random.normal(k5, (cout,), jnp.float32),
        var=1.0 + 0.1 * jnp.abs(jax.random.normal(k6, (cout,), jnp.float32)),
        alpha=jnp.float32(0.25),
    )


def init_mha(key, e):
    k1, k2, k3, k4 = jax.random.split(key, 4)
    sc = 1.0 / math.sqrt(e)
    return dict(
        in_w=sc * jax.random.normal(k1, (3 * e, e), jnp.float32),
        in_b=0.01 * jax.random.normal(k2, (3 * e,), jnp.float32),
        out_w=sc * jax.random.normal(k3, (e, e), jnp.float32),
        out_b=0.01 * jax.random.normal(k4, (e,), jnp.float32),
    )


def init_mlp(key, d):
    k1, k2, k3, k4 = jax.random.split(key, 4)
    return dict(
        w1=0.05 * jax.random.normal(k1, (2 * d, d), jnp.float32),
        b1=0.01 * jax.random.normal(k2, (2 * d,), jnp.float32),
        w2=0.05 * jax.random.normal(k3, (d, 2 * d), jnp.float32),
        b2=0.01 * jax.random.normal(k4, (d,), jnp.float32),
    )


def init_params(key):
    ks = jax.random.split(key, 16)
    dim = 64
    return dict(
        sw_enc=[init_conv_block(ks[0], 8, 4), init_conv_block(ks[1], 4, 4)],
        lw_enc=[init_conv_block(ks[2], 8, 4), init_conv_block(ks[3], 4, 4)],
        mlp_sa_swir=init_mlp(ks[4], dim),
        mlp_sa_lwir=init_mlp(ks[5], dim),
        mlp_ca_swir=init_mlp(ks[6], dim),
        mlp_ca_lwir=init_mlp(ks[7], dim),
        sa_swir=init_mha(ks[8], dim),
        sa_lwir=init_mha(ks[9], dim),
        ca_swir=init_mha(ks[10], dim),
        ca_lwir=init_mha(ks[11], dim),
        decoder=[init_conv_block(ks[12], 8, 8),
                 init_conv_block(ks[13], 8, 16),
                 init_conv_block(ks[14], 16, 16),
                 init_conv_block(ks[15], 16, 8)],
    )


# ----------------------------------------------------------------------------
# crossFusion forward (eval mode)
# ----------------------------------------------------------------------------

def cross_fusion_forward(feats_sw, feats_lw, params):
    n, _, h, w = feats_sw.shape
    size = 4
    e = size * size * 4          # 64

    # ---- Encoders: NCHW -> NHWC once, both modalities grouped on one grid
    x = jnp.stack([feats_sw, feats_lw], axis=0)                 # (2, N, 8, H, W)
    x = x.transpose(0, 1, 3, 4, 2).astype(jnp.bfloat16)         # (2, N, H, W, 8)
    for layer in range(2):
        blocks = [params["sw_enc"][layer], params["lw_enc"][layer]]
        x = conv_bn_prelu_group(x, **_stack_blocks(blocks))     # (2, N, H, W, 4)
    c = x.shape[-1]

    # ---- unfold (k = stride = 4) with PyTorch (c, kh, kw) feature ordering
    l = (h // size) * (w // size)
    tokens = x.reshape(2, n, h // size, size, w // size, size, c)
    tokens = tokens.transpose(0, 1, 2, 4, 6, 3, 5).reshape(2, n, l, e)   # bf16

    # PositionalEncoding quirk (matches the reference): pe is indexed by the
    # BATCH index and broadcast over the sequence.
    pe = positional_encoding(n, e)[:, None, :]                  # (N, 1, 64) f32

    # ---- self-attention + MLP, then cross-attention (kv = other modality) + MLP
    sa_out = attn_mlp_pair(
        tokens, tokens, pe,
        (params["sa_swir"], params["sa_lwir"]),
        (params["mlp_sa_swir"], params["mlp_sa_lwir"]), e)
    ca_out = attn_mlp_pair(
        sa_out, sa_out[::-1], pe,
        (params["ca_swir"], params["ca_lwir"]),
        (params["mlp_ca_swir"], params["mlp_ca_lwir"]), e)

    # ---- fold back to NHWC images and concat on channels
    def fold_nhwc(t):
        y = t.reshape(n, h // size, w // size, c, size, size)
        return y.transpose(0, 1, 4, 2, 5, 3).reshape(n, h, w, c)

    enhance = jnp.concatenate([fold_nhwc(ca_out[0]), fold_nhwc(ca_out[1])],
                              axis=-1)                          # (N, H, W, 8)
    enhance = enhance[None]                                     # (1, N, H, W, 8)

    # ---- decoder (4 conv blocks), NHWC throughout
    for blk in params["decoder"]:
        enhance = conv_bn_prelu_group(enhance, **_stack_blocks([blk]))

    # back to NCHW f32 at the module boundary only
    return enhance[0].transpose(0, 3, 1, 2).astype(jnp.float32)   # (N, 8, H, W)


# ----------------------------------------------------------------------------
if __name__ == "__main__":
    key = jax.random.PRNGKey(0)
    k_sw, k_lw, k_par = jax.random.split(key, 3)
    # batch=2, in_channels=8 (module expects 8), spatial=16 (divisible by 4)
    feats_sw = jax.random.normal(k_sw, (2, 8, 16, 16), jnp.float32)
    feats_lw = jax.random.normal(k_lw, (2, 8, 16, 16), jnp.float32)

    params = init_params(k_par)

    out = jax.jit(cross_fusion_forward)(feats_sw, feats_lw, params)
    out = jax.block_until_ready(out)

    assert out.shape == (2, 8, 16, 16), out.shape
    assert bool(jnp.all(jnp.isfinite(out)))
    print("KERNEL_OK")
</pallas_src>

<mosaic_0001>
module attributes {stable_mosaic.version = 11 : i64} {
  func.func @_conv3x3_kernel(%arg0: i32, %arg1: i32, %arg2: memref<1x1x18x18x8xbf16, #tpu.memory_space<vmem>>, %arg3: memref<1x9x8x4xbf16, #tpu.memory_space<vmem>>, %arg4: memref<1x1x4xf32, #tpu.memory_space<vmem>>, %arg5: memref<2xf32, #tpu.memory_space<smem>>, %arg6: memref<1x1x16x16x4xbf16, #tpu.memory_space<vmem>>) attributes {dimension_semantics = [#tpu.dimension_semantics<parallel>, #tpu.dimension_semantics<parallel>], iteration_bounds = array<i64: 2, 2>, scalar_prefetch = 0 : i64, scratch_operands = 0 : i64, tpu.core_type = #tpu.core_type<tc>, window_params = [{transform_indices = @transform_0, window_bounds = array<i64: 1, 1, 18, 18, 8>}, {transform_indices = @transform_1, window_bounds = array<i64: 1, 9, 8, 4>}, {transform_indices = @transform_2, window_bounds = array<i64: 1, 1, 4>}, {transform_indices = @transform_3, window_bounds = array<i64: 2>}, {transform_indices = @transform_4, window_bounds = array<i64: 1, 1, 16, 16, 4>}]} {
    %c0 = arith.constant 0 : index
    %c0_0 = arith.constant 0 : index
    %c0_1 = arith.constant 0 : index
    %c0_2 = arith.constant 0 : index
    %c0_3 = arith.constant 0 : index
    %0 = vector.load %arg2[%c0, %c0_0, %c0_1, %c0_2, %c0_3] : memref<1x1x18x18x8xbf16, #tpu.memory_space<vmem>>, vector<1x1x18x18x8xbf16>
    %1 = vector.shape_cast %0 : vector<1x1x18x18x8xbf16> to vector<18x18x8xbf16>
    %cst = arith.constant 0.000000e+00 : f32
    %2 = vector.broadcast %cst : f32 to vector<256x4xf32>
    %3 = vector.extract_strided_slice %1 {offsets = [0, 0, 0], sizes = [16, 16, 8], strides = [1, 1, 1]} : vector<18x18x8xbf16> to vector<16x16x8xbf16>
    %4 = vector.shape_cast %3 : vector<16x16x8xbf16> to vector<256x8xbf16>
    %c0_4 = arith.constant 0 : index
    %c0_5 = arith.constant 0 : index
    %c0_6 = arith.constant 0 : index
    %c0_7 = arith.constant 0 : index
    %5 = vector.load %arg3[%c0_4, %c0_5, %c0_6, %c0_7] : memref<1x9x8x4xbf16, #tpu.memory_space<vmem>>, vector<1x1x8x4xbf16>
    %6 = vector.shape_cast %5 : vector<1x1x8x4xbf16> to vector<8x4xbf16>
    %cst_8 = arith.constant dense<0.000000e+00> : vector<256x4xf32>
    %7 = tpu.matmul %4, %6, %cst_8 {dimension_numbers = #tpu.dot_dimension_numbers<[1], [0], [0], [1], [0, 0, 1, 1], [], []>} : vector<256x8xbf16>, vector<8x4xbf16>, vector<256x4xf32> -> vector<256x4xf32>
    %8 = arith.addf %2, %7 : vector<256x4xf32>
    %9 = vector.extract_strided_slice %1 {offsets = [0, 1, 0], sizes = [16, 16, 8], strides = [1, 1, 1]} : vector<18x18x8xbf16> to vector<16x16x8xbf16>
    %10 = vector.shape_cast %9 : vector<16x16x8xbf16> to vector<256x8xbf16>
    %c0_9 = arith.constant 0 : index
    %c1 = arith.constant 1 : index
    %c0_10 = arith.constant 0 : index
    %c0_11 = arith.constant 0 : index
    %11 = vector.load %arg3[%c0_9, %c1, %c0_10, %c0_11] : memref<1x9x8x4xbf16, #tpu.memory_space<vmem>>, vector<1x1x8x4xbf16>
    %12 = vector.shape_cast %11 : vector<1x1x8x4xbf16> to vector<8x4xbf16>
    %cst_12 = arith.constant dense<0.000000e+00> : vector<256x4xf32>
    %13 = tpu.matmul %10, %12, %cst_12 {dimension_numbers = #tpu.dot_dimension_numbers<[1], [0], [0], [1], [0, 0, 1, 1], [], []>} : vector<256x8xbf16>, vector<8x4xbf16>, vector<256x4xf32> -> vector<256x4xf32>
    %14 = arith.addf %8, %13 : vector<256x4xf32>
    %15 = vector.extract_strided_slice %1 {offsets = [0, 2, 0], sizes = [16, 16, 8], strides = [1, 1, 1]} : vector<18x18x8xbf16> to vector<16x16x8xbf16>
    %16 = vector.shape_cast %15 : vector<16x16x8xbf16> to vector<256x8xbf16>
    %c0_13 = arith.constant 0 : index
    %c2 = arith.constant 2 : index
    %c0_14 = arith.constant 0 : index
    %c0_15 = arith.constant 0 : index
    %17 = vector.load %arg3[%c0_13, %c2, %c0_14, %c0_15] : memref<1x9x8x4xbf16, #tpu.memory_space<vmem>>, vector<1x1x8x4xbf16>
    %18 = vector.shape_cast %17 : vector<1x1x8x4xbf16> to vector<8x4xbf16>
    %cst_16 = arith.constant dense<0.000000e+00> : vector<256x4xf32>
    %19 = tpu.matmul %16, %18, %cst_16 {dimension_numbers = #tpu.dot_dimension_numbers<[1], [0], [0], [1], [0, 0, 1, 1], [], []>} : vector<256x8xbf16>, vector<8x4xbf16>, vector<256x4xf32> -> vector<256x4xf32>
    %20 = arith.addf %14, %19 : vector<256x4xf32>
    %21 = vector.extract_strided_slice %1 {offsets = [1, 0, 0], sizes = [16, 16, 8], strides = [1, 1, 1]} : vector<18x18x8xbf16> to vector<16x16x8xbf16>
    %22 = vector.shape_cast %21 : vector<16x16x8xbf16> to vector<256x8xbf16>
    %c0_17 = arith.constant 0 : index
    %c3 = arith.constant 3 : index
    %c0_18 = arith.constant 0 : index
    %c0_19 = arith.constant 0 : index
    %23 = vector.load %arg3[%c0_17, %c3, %c0_18, %c0_19] : memref<1x9x8x4xbf16, #tpu.memory_space<vmem>>, vector<1x1x8x4xbf16>
    %24 = vector.shape_cast %23 : vector<1x1x8x4xbf16> to vector<8x4xbf16>
    %cst_20 = arith.constant dense<0.000000e+00> : vector<256x4xf32>
    %25 = tpu.matmul %22, %24, %cst_20 {dimension_numbers = #tpu.dot_dimension_numbers<[1], [0], [0], [1], [0, 0, 1, 1], [], []>} : vector<256x8xbf16>, vector<8x4xbf16>, vector<256x4xf32> -> vector<256x4xf32>
    %26 = arith.addf %20, %25 : vector<256x4xf32>
    %27 = vector.extract_strided_slice %1 {offsets = [1, 1, 0], sizes = [16, 16, 8], strides = [1, 1, 1]} : vector<18x18x8xbf16> to vector<16x16x8xbf16>
    %28 = vector.shape_cast %27 : vector<16x16x8xbf16> to vector<256x8xbf16>
    %c0_21 = arith.constant 0 : index
    %c4 = arith.constant 4 : index
    %c0_22 = arith.constant 0 : index
    %c0_23 = arith.constant 0 : index
    %29 = vector.load %arg3[%c0_21, %c4, %c0_22, %c0_23] : memref<1x9x8x4xbf16, #tpu.memory_space<vmem>>, vector<1x1x8x4xbf16>
    %30 = vector.shape_cast %29 : vector<1x1x8x4xbf16> to vector<8x4xbf16>
    %cst_24 = arith.constant dense<0.000000e+00> : vector<256x4xf32>
    %31 = tpu.matmul %28, %30, %cst_24 {dimension_numbers = #tpu.dot_dimension_numbers<[1], [0], [0], [1], [0, 0, 1, 1], [], []>} : vector<256x8xbf16>, vector<8x4xbf16>, vector<256x4xf32> -> vector<256x4xf32>
    %32 = arith.addf %26, %31 : vector<256x4xf32>
    %33 = vector.extract_strided_slice %1 {offsets = [1, 2, 0], sizes = [16, 16, 8], strides = [1, 1, 1]} : vector<18x18x8xbf16> to vector<16x16x8xbf16>
    %34 = vector.shape_cast %33 : vector<16x16x8xbf16> to vector<256x8xbf16>
    %c0_25 = arith.constant 0 : index
    %c5 = arith.constant 5 : index
    %c0_26 = arith.constant 0 : index
    %c0_27 = arith.constant 0 : index
    %35 = vector.load %arg3[%c0_25, %c5, %c0_26, %c0_27] : memref<1x9x8x4xbf16, #tpu.memory_space<vmem>>, vector<1x1x8x4xbf16>
    %36 = vector.shape_cast %35 : vector<1x1x8x4xbf16> to vector<8x4xbf16>
    %cst_28 = arith.constant dense<0.000000e+00> : vector<256x4xf32>
    %37 = tpu.matmul %34, %36, %cst_28 {dimension_numbers = #tpu.dot_dimension_numbers<[1], [0], [0], [1], [0, 0, 1, 1], [], []>} : vector<256x8xbf16>, vector<8x4xbf16>, vector<256x4xf32> -> vector<256x4xf32>
    %38 = arith.addf %32, %37 : vector<256x4xf32>
    %39 = vector.extract_strided_slice %1 {offsets = [2, 0, 0], sizes = [16, 16, 8], strides = [1, 1, 1]} : vector<18x18x8xbf16> to vector<16x16x8xbf16>
    %40 = vector.shape_cast %39 : vector<16x16x8xbf16> to vector<256x8xbf16>
    %c0_29 = arith.constant 0 : index
    %c6 = arith.constant 6 : index
    %c0_30 = arith.constant 0 : index
    %c0_31 = arith.constant 0 : index
    %41 = vector.load %arg3[%c0_29, %c6, %c0_30, %c0_31] : memref<1x9x8x4xbf16, #tpu.memory_space<vmem>>, vector<1x1x8x4xbf16>
    %42 = vector.shape_cast %41 : vector<1x1x8x4xbf16> to vector<8x4xbf16>
    %cst_32 = arith.constant dense<0.000000e+00> : vector<256x4xf32>
    %43 = tpu.matmul %40, %42, %cst_32 {dimension_numbers = #tpu.dot_dimension_numbers<[1], [0], [0], [1], [0, 0, 1, 1], [], []>} : vector<256x8xbf16>, vector<8x4xbf16>, vector<256x4xf32> -> vector<256x4xf32>
    %44 = arith.addf %38, %43 : vector<256x4xf32>
    %45 = vector.extract_strided_slice %1 {offsets = [2, 1, 0], sizes = [16, 16, 8], strides = [1, 1, 1]} : vector<18x18x8xbf16> to vector<16x16x8xbf16>
    %46 = vector.shape_cast %45 : vector<16x16x8xbf16> to vector<256x8xbf16>
    %c0_33 = arith.constant 0 : index
    %c7 = arith.constant 7 : index
    %c0_34 = arith.constant 0 : index
    %c0_35 = arith.constant 0 : index
    %47 = vector.load %arg3[%c0_33, %c7, %c0_34, %c0_35] : memref<1x9x8x4xbf16, #tpu.memory_space<vmem>>, vector<1x1x8x4xbf16>
    %48 = vector.shape_cast %47 : vector<1x1x8x4xbf16> to vector<8x4xbf16>
    %cst_36 = arith.constant dense<0.000000e+00> : vector<256x4xf32>
    %49 = tpu.matmul %46, %48, %cst_36 {dimension_numbers = #tpu.dot_dimension_numbers<[1], [0], [0], [1], [0, 0, 1, 1], [], []>} : vector<256x8xbf16>, vector<8x4xbf16>, vector<256x4xf32> -> vector<256x4xf32>
    %50 = arith.addf %44, %49 : vector<256x4xf32>
    %51 = vector.extract_strided_slice %1 {offsets = [2, 2, 0], sizes = [16, 16, 8], strides = [1, 1, 1]} : vector<18x18x8xbf16> to vector<16x16x8xbf16>
    %52 = vector.shape_cast %51 : vector<16x16x8xbf16> to vector<256x8xbf16>
    %c0_37 = arith.constant 0 : index
    %c8 = arith.constant 8 : index
    %c0_38 = arith.constant 0 : index
    %c0_39 = arith.constant 0 : index
    %53 = vector.load %arg3[%c0_37, %c8, %c0_38, %c0_39] : memref<1x9x8x4xbf16, #tpu.memory_space<vmem>>, vector<1x1x8x4xbf16>
    %54 = vector.shape_cast %53 : vector<1x1x8x4xbf16> to vector<8x4xbf16>
    %cst_40 = arith.constant dense<0.000000e+00> : vector<256x4xf32>
    %55 = tpu.matmul %52, %54, %cst_40 {dimension_numbers = #tpu.dot_dimension_numbers<[1], [0], [0], [1], [0, 0, 1, 1], [], []>} : vector<256x8xbf16>, vector<8x4xbf16>, vector<256x4xf32> -> vector<256x4xf32>
    %56 = arith.addf %50, %55 : vector<256x4xf32>
    %c0_41 = arith.constant 0 : index
    %c0_42 = arith.constant 0 : index
    %c0_43 = arith.constant 0 : index
    %57 = vector.load %arg4[%c0_41, %c0_42, %c0_43] : memref<1x1x4xf32, #tpu.memory_space<vmem>>, vector<1x1x4xf32>
    %58 = vector.shape_cast %57 : vector<1x1x4xf32> to vector<1x4xf32>
    %59 = vector.broadcast %58 : vector<1x4xf32> to vector<256x4xf32>
    %60 = arith.addf %56, %59 : vector<256x4xf32>
    %61 = arith.index_cast %arg0 : i32 to index
    %62 = memref.load %arg5[%61] : memref<2xf32, #tpu.memory_space<smem>>
    %cst_44 = arith.constant 0.000000e+00 : f32
    %63 = vector.broadcast %cst_44 : f32 to vector<256x4xf32>
    %64 = arith.cmpf oge, %60, %63 : vector<256x4xf32>
    %65 = vector.broadcast %62 : f32 to vector<256x4xf32>
    %66 = arith.mulf %65, %60 : vector<256x4xf32>
    %67 = arith.select %64, %60, %66 : vector<256x4xi1>, vector<256x4xf32>
    %68 = vector.shape_cast %67 : vector<256x4xf32> to vector<16x16x4xf32>
    %69 = arith.truncf %68 : vector<16x16x4xf32> to vector<16x16x4xbf16>
    %c0_45 = arith.constant 0 : index
    %c0_46 = arith.constant 0 : index
    %c0_47 = arith.constant 0 : index
    %c0_48 = arith.constant 0 : index
    %c0_49 = arith.constant 0 : index
    %70 = vector.load %arg6[%c0_45, %c0_46, %c0_47, %c0_48, %c0_49] : memref<1x1x16x16x4xbf16, #tpu.memory_space<vmem>>, vector<1x1x16x16x4xbf16>
    %71 = vector.shape_cast %70 : vector<1x1x16x16x4xbf16> to vector<16x16x4xbf16>
    %72 = vector.shape_cast %69 : vector<16x16x4xbf16> to vector<1x1x16x16x4xbf16>
    tpu.vector_store %arg6[%c0_45, %c0_46, %c0_47, %c0_48, %c0_49], %72 {strides = array<i32>} : memref<1x1x16x16x4xbf16, #tpu.memory_space<vmem>>, vector<1x1x16x16x4xbf16>,
    return
  }
  func.func @transform_0(%arg0: i32, %arg1: i32) -> (i32, i32, i32, i32, i32) {
    %c0_i32 = arith.constant 0 : i32
    %c0_i32_0 = arith.constant 0 : i32
    %c0_i32_1 = arith.constant 0 : i32
    %c0_i32_2 = arith.constant 0 : i32
    return %arg0, %arg1, %c0_i32, %c0_i32_0, %c0_i32_1 : i32, i32, i32, i32, i32
  }
  func.func @transform_1(%arg0: i32, %arg1: i32) -> (i32, i32, i32, i32) {
    %c0_i32 = arith.constant 0 : i32
    %c0_i32_0 = arith.constant 0 : i32
    %c0_i32_1 = arith.constant 0 : i32
    %c0_i32_2 = arith.constant 0 : i32
    return %arg0, %c0_i32, %c0_i32_0, %c0_i32_1 : i32, i32, i32, i32
  }
  func.func @transform_2(%arg0: i32, %arg1: i32) -> (i32, i32, i32) {
    %c0_i32 = arith.constant 0 : i32
    %c0_i32_0 = arith.constant 0 : i32
    %c0_i32_1 = arith.constant 0 : i32
    return %arg0, %c0_i32, %c0_i32_0 : i32, i32, i32
  }
  func.func @transform_3(%arg0: i32, %arg1: i32) -> i32 {
    %c0_i32 = arith.constant 0 : i32
    %c0_i32_0 = arith.constant 0 : i32
    return %c0_i32 : i32
  }
  func.func @transform_4(%arg0: i32, %arg1: i32) -> (i32, i32, i32, i32, i32) {
    %c0_i32 = arith.constant 0 : i32
    %c0_i32_0 = arith.constant 0 : i32
    %c0_i32_1 = arith.constant 0 : i32
    %c0_i32_2 = arith.constant 0 : i32
    return %arg0, %arg1, %c0_i32, %c0_i32_0, %c0_i32_1 : i32, i32, i32, i32, i32
  }
}

module attributes {stable_mosaic.version = 11 : i64} {
  func.func @_conv3x3_kernel(%arg0: i32, %arg1: i32, %arg2: memref<1x1x18x18x4xbf16, #tpu.memory_space<vmem>>, %arg3: memref<1x9x4x4xbf16, #tpu.memory_space<vmem>>, %arg4: memref<1x1x4xf32, #tpu.memory_space<vmem>>, %arg5: memref<2xf32, #tpu.memory_space<smem>>, %arg6: memref<1x1x16x16x4xbf16, #tpu.memory_space<vmem>>) attributes {dimension_semantics = [#tpu.dimension_semantics<parallel>, #tpu.dimension_semantics<parallel>], iteration_bounds = array<i64: 2, 2>, scalar_prefetch = 0 : i64, scratch_operands = 0 : i64, tpu.core_type = #tpu.core_type<tc>, window_params = [{transform_indices = @transform_0, window_bounds = array<i64: 1, 1, 18, 18, 4>}, {transform_indices = @transform_1, window_bounds = array<i64: 1, 9, 4, 4>}, {transform_indices = @transform_2, window_bounds = array<i64: 1, 1, 4>}, {transform_indices = @transform_3, window_bounds = array<i64: 2>}, {transform_indices = @transform_4, window_bounds = array<i64: 1, 1, 16, 16, 4>}]} {
    %c0 = arith.constant 0 : index
    %c0_0 = arith.constant 0 : index
    %c0_1 = arith.constant 0 : index
    %c0_2 = arith.constant 0 : index
    %c0_3 = arith.constant 0 : index
    %0 = vector.load %arg2[%c0, %c0_0, %c0_1, %c0_2, %c0_3] : memref<1x1x18x18x4xbf16, #tpu.memory_space<vmem>>, vector<1x1x18x18x4xbf16>
    %1 = vector.shape_cast %0 : vector<1x1x18x18x4xbf16> to vector<18x18x4xbf16>
    %cst = arith.constant 0.000000e+00 : f32
    %2 = vector.broadcast %cst : f32 to vector<256x4xf32>
    %3 = vector.extract_strided_slice %1 {offsets = [0, 0, 0], sizes = [16, 16, 4], strides = [1, 1, 1]} : vector<18x18x4xbf16> to vector<16x16x4xbf16>
    %4 = vector.shape_cast %3 : vector<16x16x4xbf16> to vector<256x4xbf16>
    %c0_4 = arith.constant 0 : index
    %c0_5 = arith.constant 0 : index
    %c0_6 = arith.constant 0 : index
    %c0_7 = arith.constant 0 : index
    %5 = vector.load %arg3[%c0_4, %c0_5, %c0_6, %c0_7] : memref<1x9x4x4xbf16, #tpu.memory_space<vmem>>, vector<1x1x4x4xbf16>
    %6 = vector.shape_cast %5 : vector<1x1x4x4xbf16> to vector<4x4xbf16>
    %cst_8 = arith.constant dense<0.000000e+00> : vector<256x4xf32>
    %7 = tpu.matmul %4, %6, %cst_8 {dimension_numbers = #tpu.dot_dimension_numbers<[1], [0], [0], [1], [0, 0, 1, 1], [], []>} : vector<256x4xbf16>, vector<4x4xbf16>, vector<256x4xf32> -> vector<256x4xf32>
    %8 = arith.addf %2, %7 : vector<256x4xf32>
    %9 = vector.extract_strided_slice %1 {offsets = [0, 1, 0], sizes = [16, 16, 4], strides = [1, 1, 1]} : vector<18x18x4xbf16> to vector<16x16x4xbf16>
    %10 = vector.shape_cast %9 : vector<16x16x4xbf16> to vector<256x4xbf16>
    %c0_9 = arith.constant 0 : index
    %c1 = arith.constant 1 : index
    %c0_10 = arith.constant 0 : index
    %c0_11 = arith.constant 0 : index
    %11 = vector.load %arg3[%c0_9, %c1, %c0_10, %c0_11] : memref<1x9x4x4xbf16, #tpu.memory_space<vmem>>, vector<1x1x4x4xbf16>
    %12 = vector.shape_cast %11 : vector<1x1x4x4xbf16> to vector<4x4xbf16>
    %cst_12 = arith.constant dense<0.000000e+00> : vector<256x4xf32>
    %13 = tpu.matmul %10, %12, %cst_12 {dimension_numbers = #tpu.dot_dimension_numbers<[1], [0], [0], [1], [0, 0, 1, 1], [], []>} : vector<256x4xbf16>, vector<4x4xbf16>, vector<256x4xf32> -> vector<256x4xf32>
    %14 = arith.addf %8, %13 : vector<256x4xf32>
    %15 = vector.extract_strided_slice %1 {offsets = [0, 2, 0], sizes = [16, 16, 4], strides = [1, 1, 1]} : vector<18x18x4xbf16> to vector<16x16x4xbf16>
    %16 = vector.shape_cast %15 : vector<16x16x4xbf16> to vector<256x4xbf16>
    %c0_13 = arith.constant 0 : index
    %c2 = arith.constant 2 : index
    %c0_14 = arith.constant 0 : index
    %c0_15 = arith.constant 0 : index
    %17 = vector.load %arg3[%c0_13, %c2, %c0_14, %c0_15] : memref<1x9x4x4xbf16, #tpu.memory_space<vmem>>, vector<1x1x4x4xbf16>
    %18 = vector.shape_cast %17 : vector<1x1x4x4xbf16> to vector<4x4xbf16>
    %cst_16 = arith.constant dense<0.000000e+00> : vector<256x4xf32>
    %19 = tpu.matmul %16, %18, %cst_16 {dimension_numbers = #tpu.dot_dimension_numbers<[1], [0], [0], [1], [0, 0, 1, 1], [], []>} : vector<256x4xbf16>, vector<4x4xbf16>, vector<256x4xf32> -> vector<256x4xf32>
    %20 = arith.addf %14, %19 : vector<256x4xf32>
    %21 = vector.extract_strided_slice %1 {offsets = [1, 0, 0], sizes = [16, 16, 4], strides = [1, 1, 1]} : vector<18x18x4xbf16> to vector<16x16x4xbf16>
    %22 = vector.shape_cast %21 : vector<16x16x4xbf16> to vector<256x4xbf16>
    %c0_17 = arith.constant 0 : index
    %c3 = arith.constant 3 : index
    %c0_18 = arith.constant 0 : index
    %c0_19 = arith.constant 0 : index
    %23 = vector.load %arg3[%c0_17, %c3, %c0_18, %c0_19] : memref<1x9x4x4xbf16, #tpu.memory_space<vmem>>, vector<1x1x4x4xbf16>
    %24 = vector.shape_cast %23 : vector<1x1x4x4xbf16> to vector<4x4xbf16>
    %cst_20 = arith.constant dense<0.000000e+00> : vector<256x4xf32>
    %25 = tpu.matmul %22, %24, %cst_20 {dimension_numbers = #tpu.dot_dimension_numbers<[1], [0], [0], [1], [0, 0, 1, 1], [], []>} : vector<256x4xbf16>, vector<4x4xbf16>, vector<256x4xf32> -> vector<256x4xf32>
    %26 = arith.addf %20, %25 : vector<256x4xf32>
    %27 = vector.extract_strided_slice %1 {offsets = [1, 1, 0], sizes = [16, 16, 4], strides = [1, 1, 1]} : vector<18x18x4xbf16> to vector<16x16x4xbf16>
    %28 = vector.shape_cast %27 : vector<16x16x4xbf16> to vector<256x4xbf16>
    %c0_21 = arith.constant 0 : index
    %c4 = arith.constant 4 : index
    %c0_22 = arith.constant 0 : index
    %c0_23 = arith.constant 0 : index
    %29 = vector.load %arg3[%c0_21, %c4, %c0_22, %c0_23] : memref<1x9x4x4xbf16, #tpu.memory_space<vmem>>, vector<1x1x4x4xbf16>
    %30 = vector.shape_cast %29 : vector<1x1x4x4xbf16> to vector<4x4xbf16>
    %cst_24 = arith.constant dense<0.000000e+00> : vector<256x4xf32>
    %31 = tpu.matmul %28, %30, %cst_24 {dimension_numbers = #tpu.dot_dimension_numbers<[1], [0], [0], [1], [0, 0, 1, 1], [], []>} : vector<256x4xbf16>, vector<4x4xbf16>, vector<256x4xf32> -> vector<256x4xf32>
    %32 = arith.addf %26, %31 : vector<256x4xf32>
    %33 = vector.extract_strided_slice %1 {offsets = [1, 2, 0], sizes = [16, 16, 4], strides = [1, 1, 1]} : vector<18x18x4xbf16> to vector<16x16x4xbf16>
    %34 = vector.shape_cast %33 : vector<16x16x4xbf16> to vector<256x4xbf16>
    %c0_25 = arith.constant 0 : index
    %c5 = arith.constant 5 : index
    %c0_26 = arith.constant 0 : index
    %c0_27 = arith.constant 0 : index
    %35 = vector.load %arg3[%c0_25, %c5, %c0_26, %c0_27] : memref<1x9x4x4xbf16, #tpu.memory_space<vmem>>, vector<1x1x4x4xbf16>
    %36 = vector.shape_cast %35 : vector<1x1x4x4xbf16> to vector<4x4xbf16>
    %cst_28 = arith.constant dense<0.000000e+00> : vector<256x4xf32>
    %37 = tpu.matmul %34, %36, %cst_28 {dimension_numbers = #tpu.dot_dimension_numbers<[1], [0], [0], [1], [0, 0, 1, 1], [], []>} : vector<256x4xbf16>, vector<4x4xbf16>, vector<256x4xf32> -> vector<256x4xf32>
    %38 = arith.addf %32, %37 : vector<256x4xf32>
    %39 = vector.extract_strided_slice %1 {offsets = [2, 0, 0], sizes = [16, 16, 4], strides = [1, 1, 1]} : vector<18x18x4xbf16> to vector<16x16x4xbf16>
    %40 = vector.shape_cast %39 : vector<16x16x4xbf16> to vector<256x4xbf16>
    %c0_29 = arith.constant 0 : index
    %c6 = arith.constant 6 : index
    %c0_30 = arith.constant 0 : index
    %c0_31 = arith.constant 0 : index
    %41 = vector.load %arg3[%c0_29, %c6, %c0_30, %c0_31] : memref<1x9x4x4xbf16, #tpu.memory_space<vmem>>, vector<1x1x4x4xbf16>
    %42 = vector.shape_cast %41 : vector<1x1x4x4xbf16> to vector<4x4xbf16>
    %cst_32 = arith.constant dense<0.000000e+00> : vector<256x4xf32>
    %43 = tpu.matmul %40, %42, %cst_32 {dimension_numbers = #tpu.dot_dimension_numbers<[1], [0], [0], [1], [0, 0, 1, 1], [], []>} : vector<256x4xbf16>, vector<4x4xbf16>, vector<256x4xf32> -> vector<256x4xf32>
    %44 = arith.addf %38, %43 : vector<256x4xf32>
    %45 = vector.extract_strided_slice %1 {offsets = [2, 1, 0], sizes = [16, 16, 4], strides = [1, 1, 1]} : vector<18x18x4xbf16> to vector<16x16x4xbf16>
    %46 = vector.shape_cast %45 : vector<16x16x4xbf16> to vector<256x4xbf16>
    %c0_33 = arith.constant 0 : index
    %c7 = arith.constant 7 : index
    %c0_34 = arith.constant 0 : index
    %c0_35 = arith.constant 0 : index
    %47 = vector.load %arg3[%c0_33, %c7, %c0_34, %c0_35] : memref<1x9x4x4xbf16, #tpu.memory_space<vmem>>, vector<1x1x4x4xbf16>
    %48 = vector.shape_cast %47 : vector<1x1x4x4xbf16> to vector<4x4xbf16>
    %cst_36 = arith.constant dense<0.000000e+00> : vector<256x4xf32>
    %49 = tpu.matmul %46, %48, %cst_36 {dimension_numbers = #tpu.dot_dimension_numbers<[1], [0], [0], [1], [0, 0, 1, 1], [], []>} : vector<256x4xbf16>, vector<4x4xbf16>, vector<256x4xf32> -> vector<256x4xf32>
    %50 = arith.addf %44, %49 : vector<256x4xf32>
    %51 = vector.extract_strided_slice %1 {offsets = [2, 2, 0], sizes = [16, 16, 4], strides = [1, 1, 1]} : vector<18x18x4xbf16> to vector<16x16x4xbf16>
    %52 = vector.shape_cast %51 : vector<16x16x4xbf16> to vector<256x4xbf16>
    %c0_37 = arith.constant 0 : index
    %c8 = arith.constant 8 : index
    %c0_38 = arith.constant 0 : index
    %c0_39 = arith.constant 0 : index
    %53 = vector.load %arg3[%c0_37, %c8, %c0_38, %c0_39] : memref<1x9x4x4xbf16, #tpu.memory_space<vmem>>, vector<1x1x4x4xbf16>
    %54 = vector.shape_cast %53 : vector<1x1x4x4xbf16> to vector<4x4xbf16>
    %cst_40 = arith.constant dense<0.000000e+00> : vector<256x4xf32>
    %55 = tpu.matmul %52, %54, %cst_40 {dimension_numbers = #tpu.dot_dimension_numbers<[1], [0], [0], [1], [0, 0, 1, 1], [], []>} : vector<256x4xbf16>, vector<4x4xbf16>, vector<256x4xf32> -> vector<256x4xf32>
    %56 = arith.addf %50, %55 : vector<256x4xf32>
    %c0_41 = arith.constant 0 : index
    %c0_42 = arith.constant 0 : index
    %c0_43 = arith.constant 0 : index
    %57 = vector.load %arg4[%c0_41, %c0_42, %c0_43] : memref<1x1x4xf32, #tpu.memory_space<vmem>>, vector<1x1x4xf32>
    %58 = vector.shape_cast %57 : vector<1x1x4xf32> to vector<1x4xf32>
    %59 = vector.broadcast %58 : vector<1x4xf32> to vector<256x4xf32>
    %60 = arith.addf %56, %59 : vector<256x4xf32>
    %61 = arith.index_cast %arg0 : i32 to index
    %62 = memref.load %arg5[%61] : memref<2xf32, #tpu.memory_space<smem>>
    %cst_44 = arith.constant 0.000000e+00 : f32
    %63 = vector.broadcast %cst_44 : f32 to vector<256x4xf32>
    %64 = arith.cmpf oge, %60, %63 : vector<256x4xf32>
    %65 = vector.broadcast %62 : f32 to vector<256x4xf32>
    %66 = arith.mulf %65, %60 : vector<256x4xf32>
    %67 = arith.select %64, %60, %66 : vector<256x4xi1>, vector<256x4xf32>
    %68 = vector.shape_cast %67 : vector<256x4xf32> to vector<16x16x4xf32>
    %69 = arith.truncf %68 : vector<16x16x4xf32> to vector<16x16x4xbf16>
    %c0_45 = arith.constant 0 : index
    %c0_46 = arith.constant 0 : index
    %c0_47 = arith.constant 0 : index
    %c0_48 = arith.constant 0 : index
    %c0_49 = arith.constant 0 : index
    %70 = vector.load %arg6[%c0_45, %c0_46, %c0_47, %c0_48, %c0_49] : memref<1x1x16x16x4xbf16, #tpu.memory_space<vmem>>, vector<1x1x16x16x4xbf16>
    %71 = vector.shape_cast %70 : vector<1x1x16x16x4xbf16> to vector<16x16x4xbf16>
    %72 = vector.shape_cast %69 : vector<16x16x4xbf16> to vector<1x1x16x16x4xbf16>
    tpu.vector_store %arg6[%c0_45, %c0_46, %c0_47, %c0_48, %c0_49], %72 {strides = array<i32>} : memref<1x1x16x16x4xbf16, #tpu.memory_space<vmem>>, vector<1x1x16x16x4xbf16>,
    return
  }
  func.func @transform_0(%arg0: i32, %arg1: i32) -> (i32, i32, i32, i32, i32) {
    %c0_i32 = arith.constant 0 : i32
    %c0_i32_0 = arith.constant 0 : i32
    %c0_i32_1 = arith.constant 0 : i32
    %c0_i32_2 = arith.constant 0 : i32
    return %arg0, %arg1, %c0_i32, %c0_i32_0, %c0_i32_1 : i32, i32, i32, i32, i32
  }
  func.func @transform_1(%arg0: i32, %arg1: i32) -> (i32, i32, i32, i32) {
    %c0_i32 = arith.constant 0 : i32
    %c0_i32_0 = arith.constant 0 : i32
    %c0_i32_1 = arith.constant 0 : i32
    %c0_i32_2 = arith.constant 0 : i32
    return %arg0, %c0_i32, %c0_i32_0, %c0_i32_1 : i32, i32, i32, i32
  }
  func.func @transform_2(%arg0: i32, %arg1: i32) -> (i32, i32, i32) {
    %c0_i32 = arith.constant 0 : i32
    %c0_i32_0 = arith.constant 0 : i32
    %c0_i32_1 = arith.constant 0 : i32
    return %arg0, %c0_i32, %c0_i32_0 : i32, i32, i32
  }
  func.func @transform_3(%arg0: i32, %arg1: i32) -> i32 {
    %c0_i32 = arith.constant 0 : i32
    %c0_i32_0 = arith.constant 0 : i32
    return %c0_i32 : i32
  }
  func.func @transform_4(%arg0: i32, %arg1: i32) -> (i32, i32, i32, i32, i32) {
    %c0_i32 = arith.constant 0 : i32
    %c0_i32_0 = arith.constant 0 : i32
    %c0_i32_1 = arith.constant 0 : i32
    %c0_i32_2 = arith.constant 0 : i32
    return %arg0, %arg1, %c0_i32, %c0_i32_0, %c0_i32_1 : i32, i32, i32, i32, i32
  }
}

module attributes {stable_mosaic.version = 11 : i64} {
  func.func @_attn_mlp_kernel(%arg0: i32, %arg1: i32, %arg2: i32, %arg3: memref<1x2x16x64xbf16, #tpu.memory_space<vmem>>, %arg4: memref<1x2x16x64xbf16, #tpu.memory_space<vmem>>, %arg5: memref<2x1x64xf32, #tpu.memory_space<vmem>>, %arg6: memref<1x64x64xbf16, #tpu.memory_space<vmem>>, %arg7: memref<1x1x64xf32, #tpu.memory_space<vmem>>, %arg8: memref<1x64x64xbf16, #tpu.memory_space<vmem>>, %arg9: memref<1x1x64xf32, #tpu.memory_space<vmem>>, %arg10: memref<1x64x64xbf16, #tpu.memory_space<vmem>>, %arg11: memref<1x1x64xf32, #tpu.memory_space<vmem>>, %arg12: memref<1x64x64xbf16, #tpu.memory_space<vmem>>, %arg13: memref<1x1x64xf32, #tpu.memory_space<vmem>>, %arg14: memref<1x64x128xbf16, #tpu.memory_space<vmem>>, %arg15: memref<1x1x128xf32, #tpu.memory_space<vmem>>, %arg16: memref<1x128x64xbf16, #tpu.memory_space<vmem>>, %arg17: memref<1x1x64xf32, #tpu.memory_space<vmem>>, %arg18: memref<1x2x16x64xbf16, #tpu.memory_space<vmem>>, %arg19: memref<2x16x64xbf16, #tpu.memory_space<vmem>>, %arg20: memref<2x16x1xf32, #tpu.memory_space<vmem>>, %arg21: memref<2x16x1xf32, #tpu.memory_space<vmem>>, %arg22: memref<2x16x64xf32, #tpu.memory_space<vmem>>) attributes {dimension_semantics = [#tpu.dimension_semantics<parallel>, #tpu.dimension_semantics<parallel>, #tpu.dimension_semantics<arbitrary>], iteration_bounds = array<i64: 2, 1, 1>, scalar_prefetch = 0 : i64, scratch_operands = 4 : i64, tpu.core_type = #tpu.core_type<tc>, window_params = [{transform_indices = @transform_0, window_bounds = array<i64: 1, 2, 16, 64>}, {transform_indices = @transform_1, window_bounds = array<i64: 1, 2, 16, 64>}, {pipeline_mode = #tpu.pipeline_mode<synchronous>, transform_indices = @transform_2, window_bounds = array<i64: 2, 1, 64>}, {transform_indices = @transform_3, window_bounds = array<i64: 1, 64, 64>}, {transform_indices = @transform_4, window_bounds = array<i64: 1, 1, 64>}, {transform_indices = @transform_5, window_bounds = array<i64: 1, 64, 64>}, {transform_indices = @transform_6, window_bounds = array<i64: 1, 1, 64>}, {transform_indices = @transform_7, window_bounds = array<i64: 1, 64, 64>}, {transform_indices = @transform_8, window_bounds = array<i64: 1, 1, 64>}, {transform_indices = @transform_9, window_bounds = array<i64: 1, 64, 64>}, {transform_indices = @transform_10, window_bounds = array<i64: 1, 1, 64>}, {transform_indices = @transform_11, window_bounds = array<i64: 1, 64, 128>}, {transform_indices = @transform_12, window_bounds = array<i64: 1, 1, 128>}, {transform_indices = @transform_13, window_bounds = array<i64: 1, 128, 64>}, {transform_indices = @transform_14, window_bounds = array<i64: 1, 1, 64>}, {transform_indices = @transform_15, window_bounds = array<i64: 1, 2, 16, 64>}]} {
    %c0 = arith.constant 0 : index
    %c0_0 = arith.constant 0 : index
    %c0_1 = arith.constant 0 : index
    %0 = vector.load %arg5[%c0, %c0_0, %c0_1] : memref<2x1x64xf32, #tpu.memory_space<vmem>>, vector<2x1x64xf32>
    %c0_i32 = arith.constant 0 : i32
    %1 = arith.cmpi eq, %arg2, %c0_i32 : i32
    %2 = arith.extui %1 : i1 to i32
    %c0_i32_2 = arith.constant 0 : i32
    %3 = arith.cmpi ne, %2, %c0_i32_2 : i32
    scf.if %3 {
      %c0_47 = arith.constant 0 : index
      %c0_48 = arith.constant 0 : index
      %c0_49 = arith.constant 0 : index
      %c0_50 = arith.constant 0 : index
      %59 = vector.load %arg3[%c0_47, %c0_48, %c0_49, %c0_50] : memref<1x2x16x64xbf16, #tpu.memory_space<vmem>>, vector<1x2x16x64xbf16>
      %60 = vector.shape_cast %59 : vector<1x2x16x64xbf16> to vector<2x16x64xbf16>
      %61 = arith.extf %60 : vector<2x16x64xbf16> to vector<2x16x64xf32>
      %62 = vector.broadcast %0 : vector<2x1x64xf32> to vector<2x16x64xf32>
      %63 = arith.addf %61, %62 : vector<2x16x64xf32>
      %64 = vector.shape_cast %63 : vector<2x16x64xf32> to vector<32x64xf32>
      %65 = arith.truncf %64 : vector<32x64xf32> to vector<32x64xbf16>
      %c0_51 = arith.constant 0 : index
      %c0_52 = arith.constant 0 : index
      %c0_53 = arith.constant 0 : index
      %66 = vector.load %arg6[%c0_51, %c0_52, %c0_53] : memref<1x64x64xbf16, #tpu.memory_space<vmem>>, vector<1x64x64xbf16>
      %67 = vector.shape_cast %66 : vector<1x64x64xbf16> to vector<64x64xbf16>
      %cst_54 = arith.constant dense<0.000000e+00> : vector<32x64xf32>
      %68 = tpu.matmul %65, %67, %cst_54 {dimension_numbers = #tpu.dot_dimension_numbers<[1], [0], [0], [1], [0, 0, 1, 1], [], []>} : vector<32x64xbf16>, vector<64x64xbf16>, vector<32x64xf32> -> vector<32x64xf32>
      %c0_55 = arith.constant 0 : index
      %c0_56 = arith.constant 0 : index
      %c0_57 = arith.constant 0 : index
      %69 = vector.load %arg7[%c0_55, %c0_56, %c0_57] : memref<1x1x64xf32, #tpu.memory_space<vmem>>, vector<1x1x64xf32>
      %70 = vector.shape_cast %69 : vector<1x1x64xf32> to vector<1x64xf32>
      %71 = vector.broadcast %70 : vector<1x64xf32> to vector<32x64xf32>
      %72 = arith.addf %68, %71 : vector<32x64xf32>
      %73 = vector.shape_cast %72 : vector<32x64xf32> to vector<2x16x64xf32>
      %74 = arith.truncf %73 : vector<2x16x64xf32> to vector<2x16x64xbf16>
      %c0_58 = arith.constant 0 : index
      %c0_59 = arith.constant 0 : index
      %c0_60 = arith.constant 0 : index
      %75 = vector.load %arg19[%c0_58, %c0_59, %c0_60] : memref<2x16x64xbf16, #tpu.memory_space<vmem>>, vector<2x16x64xbf16>
      tpu.vector_store %arg19[%c0_58, %c0_59, %c0_60], %74 {strides = array<i32>} : memref<2x16x64xbf16, #tpu.memory_space<vmem>>, vector<2x16x64xbf16>,
      %cst_61 = arith.constant 0xFF800000 : f32
      %76 = vector.broadcast %cst_61 : f32 to vector<2x16x1xf32>
      %c0_62 = arith.constant 0 : index
      %c0_63 = arith.constant 0 : index
      %c0_64 = arith.constant 0 : index
      %77 = vector.load %arg20[%c0_62, %c0_63, %c0_64] : memref<2x16x1xf32, #tpu.memory_space<vmem>>, vector<2x16x1xf32>
      tpu.vector_store %arg20[%c0_62, %c0_63, %c0_64], %76 {strides = array<i32>} : memref<2x16x1xf32, #tpu.memory_space<vmem>>, vector<2x16x1xf32>,
      %cst_65 = arith.constant 0.000000e+00 : f32
      %78 = vector.broadcast %cst_65 : f32 to vector<2x16x1xf32>
      %c0_66 = arith.constant 0 : index
      %c0_67 = arith.constant 0 : index
      %c0_68 = arith.constant 0 : index
      %79 = vector.load %arg21[%c0_66, %c0_67, %c0_68] : memref<2x16x1xf32, #tpu.memory_space<vmem>>, vector<2x16x1xf32>
      tpu.vector_store %arg21[%c0_66, %c0_67, %c0_68], %78 {strides = array<i32>} : memref<2x16x1xf32, #tpu.memory_space<vmem>>, vector<2x16x1xf32>,
      %cst_69 = arith.constant 0.000000e+00 : f32
      %80 = vector.broadcast %cst_69 : f32 to vector<2x16x64xf32>
      %c0_70 = arith.constant 0 : index
      %c0_71 = arith.constant 0 : index
      %c0_72 = arith.constant 0 : index
      %81 = vector.load %arg22[%c0_70, %c0_71, %c0_72] : memref<2x16x64xf32, #tpu.memory_space<vmem>>, vector<2x16x64xf32>
      tpu.vector_store %arg22[%c0_70, %c0_71, %c0_72], %80 {strides = array<i32>} : memref<2x16x64xf32, #tpu.memory_space<vmem>>, vector<2x16x64xf32>,
    } else {
    }
    %c0_3 = arith.constant 0 : index
    %c0_4 = arith.constant 0 : index
    %c0_5 = arith.constant 0 : index
    %c0_6 = arith.constant 0 : index
    %4 = vector.load %arg4[%c0_3, %c0_4, %c0_5, %c0_6] : memref<1x2x16x64xbf16, #tpu.memory_space<vmem>>, vector<1x2x16x64xbf16>
    %5 = vector.shape_cast %4 : vector<1x2x16x64xbf16> to vector<2x16x64xbf16>
    %6 = arith.extf %5 : vector<2x16x64xbf16> to vector<2x16x64xf32>
    %7 = vector.broadcast %0 : vector<2x1x64xf32> to vector<2x16x64xf32>
    %8 = arith.addf %6, %7 : vector<2x16x64xf32>
    %9 = vector.shape_cast %8 : vector<2x16x64xf32> to vector<32x64xf32>
    %10 = arith.truncf %9 : vector<32x64xf32> to vector<32x64xbf16>
    %11 = vector.shape_cast %6 : vector<2x16x64xf32> to vector<32x64xf32>
    %12 = arith.truncf %11 : vector<32x64xf32> to vector<32x64xbf16>
    %c0_7 = arith.constant 0 : index
    %c0_8 = arith.constant 0 : index
    %c0_9 = arith.constant 0 : index
    %13 = vector.load %arg8[%c0_7, %c0_8, %c0_9] : memref<1x64x64xbf16, #tpu.memory_space<vmem>>, vector<1x64x64xbf16>
    %14 = vector.shape_cast %13 : vector<1x64x64xbf16> to vector<64x64xbf16>
    %cst = arith.constant dense<0.000000e+00> : vector<32x64xf32>
    %15 = tpu.matmul %10, %14, %cst {dimension_numbers = #tpu.dot_dimension_numbers<[1], [0], [0], [1], [0, 0, 1, 1], [], []>} : vector<32x64xbf16>, vector<64x64xbf16>, vector<32x64xf32> -> vector<32x64xf32>
    %c0_10 = arith.constant 0 : index
    %c0_11 = arith.constant 0 : index
    %c0_12 = arith.constant 0 : index
    %16 = vector.load %arg9[%c0_10, %c0_11, %c0_12] : memref<1x1x64xf32, #tpu.memory_space<vmem>>, vector<1x1x64xf32>
    %17 = vector.shape_cast %16 : vector<1x1x64xf32> to vector<1x64xf32>
    %18 = vector.broadcast %17 : vector<1x64xf32> to vector<32x64xf32>
    %19 = arith.addf %15, %18 : vector<32x64xf32>
    %c0_13 = arith.constant 0 : index
    %c0_14 = arith.constant 0 : index
    %c0_15 = arith.constant 0 : index
    %20 = vector.load %arg10[%c0_13, %c0_14, %c0_15] : memref<1x64x64xbf16, #tpu.memory_space<vmem>>, vector<1x64x64xbf16>
    %21 = vector.shape_cast %20 : vector<1x64x64xbf16> to vector<64x64xbf16>
    %cst_16 = arith.constant dense<0.000000e+00> : vector<32x64xf32>
    %22 = tpu.matmul %12, %21, %cst_16 {dimension_numbers = #tpu.dot_dimension_numbers<[1], [0], [0], [1], [0, 0, 1, 1], [], []>} : vector<32x64xbf16>, vector<64x64xbf16>, vector<32x64xf32> -> vector<32x64xf32>
    %c0_17 = arith.constant 0 : index
    %c0_18 = arith.constant 0 : index
    %c0_19 = arith.constant 0 : index
    %23 = vector.load %arg11[%c0_17, %c0_18, %c0_19] : memref<1x1x64xf32, #tpu.memory_space<vmem>>, vector<1x1x64xf32>
    %24 = vector.shape_cast %23 : vector<1x1x64xf32> to vector<1x64xf32>
    %25 = vector.broadcast %24 : vector<1x64xf32> to vector<32x64xf32>
    %26 = arith.addf %22, %25 : vector<32x64xf32>
    %27 = vector.shape_cast %19 : vector<32x64xf32> to vector<2x16x64xf32>
    %28 = arith.truncf %27 : vector<2x16x64xf32> to vector<2x16x64xbf16>
    %29 = vector.shape_cast %26 : vector<32x64xf32> to vector<2x16x64xf32>
    %30 = arith.truncf %29 : vector<2x16x64xf32> to vector<2x16x64xbf16>
    %c0_20 = arith.constant 0 : index
    %c0_21 = arith.constant 0 : index
    %c0_22 = arith.constant 0 : index
    %31 = vector.load %arg19[%c0_20, %c0_21, %c0_22] : memref<2x16x64xbf16, #tpu.memory_space<vmem>>, vector<2x16x64xbf16>
    "tpu.trace_start"() <{level = 10 : i32, message = "bqd,bkd->bqk"}> : () -> ()
    %cst_23 = arith.constant dense<0.000000e+00> : vector<2x16x16xf32>
    %32 = tpu.matmul %31, %28, %cst_23 {dimension_numbers = #tpu.dot_dimension_numbers<[2], [2], [1], [1], [0, 0, 0, 1, 1, 1], [0], [0]>} : vector<2x16x64xbf16>, vector<2x16x64xbf16>, vector<2x16x16xf32> -> vector<2x16x16xf32>
    "tpu.trace_stop"() : () -> ()
    %c0_24 = arith.constant 0 : index
    %c0_25 = arith.constant 0 : index
    %c0_26 = arith.constant 0 : index
    %33 = vector.load %arg20[%c0_24, %c0_25, %c0_26] : memref<2x16x1xf32, #tpu.memory_space<vmem>>, vector<2x16x1xf32>
    %cst_27 = arith.constant dense<0xFF800000> : vector<2x16xf32>
    %34 = vector.multi_reduction <maximumf>, %32, %cst_27 [2] : vector<2x16x16xf32> to vector<2x16xf32>
    %35 = vector.shape_cast %34 : vector<2x16xf32> to vector<2x16x1xf32>
    %36 = arith.maximumf %33, %35 : vector<2x16x1xf32>
    %37 = arith.subf %33, %36 : vector<2x16x1xf32>
    %38 = math.exp %37 : vector<2x16x1xf32>
    %39 = vector.broadcast %36 : vector<2x16x1xf32> to vector<2x16x16xf32>
    %40 = arith.subf %32, %39 : vector<2x16x16xf32>
    %41 = math.exp %40 : vector<2x16x16xf32>
    %c0_28 = arith.constant 0 : index
    %c0_29 = arith.constant 0 : index
    %c0_30 = arith.constant 0 : index
    %42 = vector.load %arg21[%c0_28, %c0_29, %c0_30] : memref<2x16x1xf32, #tpu.memory_space<vmem>>, vector<2x16x1xf32>
    %43 = arith.mulf %38, %42 : vector<2x16x1xf32>
    %cst_31 = arith.constant dense<0.000000e+00> : vector<2x16xf32>
    %44 = vector.multi_reduction <add>, %41, %cst_31 [2] : vector<2x16x16xf32> to vector<2x16xf32>
    %45 = vector.shape_cast %44 : vector<2x16xf32> to vector<2x16x1xf32>
    %46 = arith.addf %43, %45 : vector<2x16x1xf32>
    %c0_32 = arith.constant 0 : index
    %c0_33 = arith.constant 0 : index
    %c0_34 = arith.constant 0 : index
    %47 = vector.load %arg21[%c0_32, %c0_33, %c0_34] : memref<2x16x1xf32, #tpu.memory_space<vmem>>, vector<2x16x1xf32>
    tpu.vector_store %arg21[%c0_32, %c0_33, %c0_34], %46 {strides = array<i32>} : memref<2x16x1xf32, #tpu.memory_space<vmem>>, vector<2x16x1xf32>,
    %c0_35 = arith.constant 0 : index
    %c0_36 = arith.constant 0 : index
    %c0_37 = arith.constant 0 : index
    %48 = vector.load %arg22[%c0_35, %c0_36, %c0_37] : memref<2x16x64xf32, #tpu.memory_space<vmem>>, vector<2x16x64xf32>
    %49 = vector.broadcast %38 : vector<2x16x1xf32> to vector<2x16x64xf32>
    %50 = arith.mulf %49, %48 : vector<2x16x64xf32>
    %51 = arith.truncf %41 : vector<2x16x16xf32> to vector<2x16x16xbf16>
    "tpu.trace_start"() <{level = 10 : i32, message = "bqk,bkd->bqd"}> : () -> ()
    %cst_38 = arith.constant dense<0.000000e+00> : vector<2x16x64xf32>
    %52 = tpu.matmul %51, %30, %cst_38 {dimension_numbers = #tpu.dot_dimension_numbers<[2], [1], [1], [2], [0, 0, 0, 1, 1, 2], [0], [0]>} : vector<2x16x16xbf16>, vector<2x16x64xbf16>, vector<2x16x64xf32> -> vector<2x16x64xf32>
    "tpu.trace_stop"() : () -> ()
    %53 = arith.addf %50, %52 : vector<2x16x64xf32>
    %c0_39 = arith.constant 0 : index
    %c0_40 = arith.constant 0 : index
    %c0_41 = arith.constant 0 : index
    %54 = vector.load %arg22[%c0_39, %c0_40, %c0_41] : memref<2x16x64xf32, #tpu.memory_space<vmem>>, vector<2x16x64xf32>
    tpu.vector_store %arg22[%c0_39, %c0_40, %c0_41], %53 {strides = array<i32>} : memref<2x16x64xf32, #tpu.memory_space<vmem>>, vector<2x16x64xf32>,
    %c0_42 = arith.constant 0 : index
    %c0_43 = arith.constant 0 : index
    %c0_44 = arith.constant 0 : index
    %55 = vector.load %arg20[%c0_42, %c0_43, %c0_44] : memref<2x16x1xf32, #tpu.memory_space<vmem>>, vector<2x16x1xf32>
    tpu.vector_store %arg20[%c0_42, %c0_43, %c0_44], %36 {strides = array<i32>} : memref<2x16x1xf32, #tpu.memory_space<vmem>>, vector<2x16x1xf32>,
    %c0_i32_45 = arith.constant 0 : i32
    %56 = arith.cmpi eq, %arg2, %c0_i32_45 : i32
    %57 = arith.extui %56 : i1 to i32
    %c0_i32_46 = arith.constant 0 : i32
    %58 = arith.cmpi ne, %57, %c0_i32_46 : i32
    scf.if %58 {
      %c0_47 = arith.constant 0 : index
      %c0_48 = arith.constant 0 : index
      %c0_49 = arith.constant 0 : index
      %c0_50 = arith.constant 0 : index
      %59 = vector.load %arg3[%c0_47, %c0_48, %c0_49, %c0_50] : memref<1x2x16x64xbf16, #tpu.memory_space<vmem>>, vector<1x2x16x64xbf16>
      %60 = vector.shape_cast %59 : vector<1x2x16x64xbf16> to vector<2x16x64xbf16>
      %61 = arith.extf %60 : vector<2x16x64xbf16> to vector<2x16x64xf32>
      %c0_51 = arith.constant 0 : index
      %c0_52 = arith.constant 0 : index
      %c0_53 = arith.constant 0 : index
      %62 = vector.load %arg22[%c0_51, %c0_52, %c0_53] : memref<2x16x64xf32, #tpu.memory_space<vmem>>, vector<2x16x64xf32>
      %c0_54 = arith.constant 0 : index
      %c0_55 = arith.constant 0 : index
      %c0_56 = arith.constant 0 : index
      %63 = vector.load %arg21[%c0_54, %c0_55, %c0_56] : memref<2x16x1xf32, #tpu.memory_space<vmem>>, vector<2x16x1xf32>
      %64 = tpu.reciprocal %63 {approx = true} : vector<2x16x1xf32> -> vector<2x16x1xf32>
      %65 = vector.broadcast %64 : vector<2x16x1xf32> to vector<2x16x64xf32>
      %66 = arith.mulf %62, %65 : vector<2x16x64xf32>
      %67 = vector.shape_cast %66 : vector<2x16x64xf32> to vector<32x64xf32>
      %68 = arith.truncf %67 : vector<32x64xf32> to vector<32x64xbf16>
      %c0_57 = arith.constant 0 : index
      %c0_58 = arith.constant 0 : index
      %c0_59 = arith.constant 0 : index
      %69 = vector.load %arg12[%c0_57, %c0_58, %c0_59] : memref<1x64x64xbf16, #tpu.memory_space<vmem>>, vector<1x64x64xbf16>
      %70 = vector.shape_cast %69 : vector<1x64x64xbf16> to vector<64x64xbf16>
      %cst_60 = arith.constant dense<0.000000e+00> : vector<32x64xf32>
      %71 = tpu.matmul %68, %70, %cst_60 {dimension_numbers = #tpu.dot_dimension_numbers<[1], [0], [0], [1], [0, 0, 1, 1], [], []>} : vector<32x64xbf16>, vector<64x64xbf16>, vector<32x64xf32> -> vector<32x64xf32>
      %c0_61 = arith.constant 0 : index
      %c0_62 = arith.constant 0 : index
      %c0_63 = arith.constant 0 : index
      %72 = vector.load %arg13[%c0_61, %c0_62, %c0_63] : memref<1x1x64xf32, #tpu.memory_space<vmem>>, vector<1x1x64xf32>
      %73 = vector.shape_cast %72 : vector<1x1x64xf32> to vector<1x64xf32>
      %74 = vector.broadcast %73 : vector<1x64xf32> to vector<32x64xf32>
      %75 = arith.addf %71, %74 : vector<32x64xf32>
      %76 = vector.shape_cast %61 : vector<2x16x64xf32> to vector<32x64xf32>
      %77 = arith.addf %75, %76 : vector<32x64xf32>
      %78 = arith.truncf %77 : vector<32x64xf32> to vector<32x64xbf16>
      %c0_64 = arith.constant 0 : index
      %c0_65 = arith.constant 0 : index
      %c0_66 = arith.constant 0 : index
      %79 = vector.load %arg14[%c0_64, %c0_65, %c0_66] : memref<1x64x128xbf16, #tpu.memory_space<vmem>>, vector<1x64x128xbf16>
      %80 = vector.shape_cast %79 : vector<1x64x128xbf16> to vector<64x128xbf16>
      %cst_67 = arith.constant dense<0.000000e+00> : vector<32x128xf32>
      %81 = tpu.matmul %78, %80, %cst_67 {dimension_numbers = #tpu.dot_dimension_numbers<[1], [0], [0], [1], [0, 0, 1, 1], [], []>} : vector<32x64xbf16>, vector<64x128xbf16>, vector<32x128xf32> -> vector<32x128xf32>
      %c0_68 = arith.constant 0 : index
      %c0_69 = arith.constant 0 : index
      %c0_70 = arith.constant 0 : index
      %82 = vector.load %arg15[%c0_68, %c0_69, %c0_70] : memref<1x1x128xf32, #tpu.memory_space<vmem>>, vector<1x1x128xf32>
      %83 = vector.shape_cast %82 : vector<1x1x128xf32> to vector<1x128xf32>
      %84 = vector.broadcast %83 : vector<1x128xf32> to vector<32x128xf32>
      %85 = arith.addf %81, %84 : vector<32x128xf32>
      %cst_71 = arith.constant 0.000000e+00 : f32
      %86 = vector.broadcast %cst_71 : f32 to vector<32x128xf32>
      %87 = arith.maximumf %85, %86 : vector<32x128xf32>
      %88 = arith.truncf %87 : vector<32x128xf32> to vector<32x128xbf16>
      %c0_72 = arith.constant 0 : index
      %c0_73 = arith.constant 0 : index
      %c0_74 = arith.constant 0 : index
      %89 = vector.load %arg16[%c0_72, %c0_73, %c0_74] : memref<1x128x64xbf16, #tpu.memory_space<vmem>>, vector<1x128x64xbf16>
      %90 = vector.shape_cast %89 : vector<1x128x64xbf16> to vector<128x64xbf16>
      %cst_75 = arith.constant dense<0.000000e+00> : vector<32x64xf32>
      %91 = tpu.matmul %88, %90, %cst_75 {dimension_numbers = #tpu.dot_dimension_numbers<[1], [0], [0], [1], [0, 0, 1, 1], [], []>} : vector<32x128xbf16>, vector<128x64xbf16>, vector<32x64xf32> -> vector<32x64xf32>
      %c0_76 = arith.constant 0 : index
      %c0_77 = arith.constant 0 : index
      %c0_78 = arith.constant 0 : index
      %92 = vector.load %arg17[%c0_76, %c0_77, %c0_78] : memref<1x1x64xf32, #tpu.memory_space<vmem>>, vector<1x1x64xf32>
      %93 = vector.shape_cast %92 : vector<1x1x64xf32> to vector<1x64xf32>
      %94 = vector.broadcast %93 : vector<1x64xf32> to vector<32x64xf32>
      %95 = arith.addf %91, %94 : vector<32x64xf32>
      %96 = vector.shape_cast %95 : vector<32x64xf32> to vector<2x16x64xf32>
      %97 = arith.truncf %96 : vector<2x16x64xf32> to vector<2x16x64xbf16>
      %c0_79 = arith.constant 0 : index
      %c0_80 = arith.constant 0 : index
      %c0_81 = arith.constant 0 : index
      %c0_82 = arith.constant 0 : index
      %98 = vector.load %arg18[%c0_79, %c0_80, %c0_81, %c0_82] : memref<1x2x16x64xbf16, #tpu.memory_space<vmem>>, vector<1x2x16x64xbf16>
      %99 = vector.shape_cast %98 : vector<1x2x16x64xbf16> to vector<2x16x64xbf16>
      %100 = vector.shape_cast %97 : vector<2x16x64xbf16> to vector<1x2x16x64xbf16>
      tpu.vector_store %arg18[%c0_79, %c0_80, %c0_81, %c0_82], %100 {strides = array<i32>} : memref<1x2x16x64xbf16, #tpu.memory_space<vmem>>, vector<1x2x16x64xbf16>,
    } else {
    }
    return
  }
  func.func @transform_0(%arg0: i32, %arg1: i32, %arg2: i32) -> (i32, i32, i32, i32) {
    %c0_i32 = arith.constant 0 : i32
    %c0_i32_0 = arith.constant 0 : i32
    %c0_i32_1 = arith.constant 0 : i32
    return %arg0, %c0_i32, %arg1, %c0_i32_0 : i32, i32, i32, i32
  }
  func.func @transform_1(%arg0: i32, %arg1: i32, %arg2: i32) -> (i32, i32, i32, i32) {
    %c0_i32 = arith.constant 0 : i32
    %c0_i32_0 = arith.constant 0 : i32
    %c0_i32_1 = arith.constant 0 : i32
    return %arg0, %c0_i32, %arg2, %c0_i32_0 : i32, i32, i32, i32
  }
  func.func @transform_2(%arg0: i32, %arg1: i32, %arg2: i32) -> (i32, i32, i32) {
    %c0_i32 = arith.constant 0 : i32
    %c0_i32_0 = arith.constant 0 : i32
    %c0_i32_1 = arith.constant 0 : i32
    %c0_i32_2 = arith.constant 0 : i32
    return %c0_i32, %c0_i32_0, %c0_i32_1 : i32, i32, i32
  }
  func.func @transform_3(%arg0: i32, %arg1: i32, %arg2: i32) -> (i32, i32, i32) {
    %c0_i32 = arith.constant 0 : i32
    %c0_i32_0 = arith.constant 0 : i32
    %c0_i32_1 = arith.constant 0 : i32
    return %arg0, %c0_i32, %c0_i32_0 : i32, i32, i32
  }
  func.func @transform_4(%arg0: i32, %arg1: i32, %arg2: i32) -> (i32, i32, i32) {
    %c0_i32 = arith.constant 0 : i32
    %c0_i32_0 = arith.constant 0 : i32
    %c0_i32_1 = arith.constant 0 : i32
    return %arg0, %c0_i32, %c0_i32_0 : i32, i32, i32
  }
  func.func @transform_5(%arg0: i32, %arg1: i32, %arg2: i32) -> (i32, i32, i32) {
    %c0_i32 = arith.constant 0 : i32
    %c0_i32_0 = arith.constant 0 : i32
    %c0_i32_1 = arith.constant 0 : i32
    return %arg0, %c0_i32, %c0_i32_0 : i32, i32, i32
  }
  func.func @transform_6(%arg0: i32, %arg1: i32, %arg2: i32) -> (i32, i32, i32) {
    %c0_i32 = arith.constant 0 : i32
    %c0_i32_0 = arith.constant 0 : i32
    %c0_i32_1 = arith.constant 0 : i32
    return %arg0, %c0_i32, %c0_i32_0 : i32, i32, i32
  }
  func.func @transform_7(%arg0: i32, %arg1: i32, %arg2: i32) -> (i32, i32, i32) {
    %c0_i32 = arith.constant 0 : i32
    %c0_i32_0 = arith.constant 0 : i32
    %c0_i32_1 = arith.constant 0 : i32
    return %arg0, %c0_i32, %c0_i32_0 : i32, i32, i32
  }
  func.func @transform_8(%arg0: i32, %arg1: i32, %arg2: i32) -> (i32, i32, i32) {
    %c0_i32 = arith.constant 0 : i32
    %c0_i32_0 = arith.constant 0 : i32
    %c0_i32_1 = arith.constant 0 : i32
    return %arg0, %c0_i32, %c0_i32_0 : i32, i32, i32
  }
  func.func @transform_9(%arg0: i32, %arg1: i32, %arg2: i32) -> (i32, i32, i32) {
    %c0_i32 = arith.constant 0 : i32
    %c0_i32_0 = arith.constant 0 : i32
    %c0_i32_1 = arith.constant 0 : i32
    return %arg0, %c0_i32, %c0_i32_0 : i32, i32, i32
  }
  func.func @transform_10(%arg0: i32, %arg1: i32, %arg2: i32) -> (i32, i32, i32) {
    %c0_i32 = arith.constant 0 : i32
    %c0_i32_0 = arith.constant 0 : i32
    %c0_i32_1 = arith.constant 0 : i32
    return %arg0, %c0_i32, %c0_i32_0 : i32, i32, i32
  }
  func.func @transform_11(%arg0: i32, %arg1: i32, %arg2: i32) -> (i32, i32, i32) {
    %c0_i32 = arith.constant 0 : i32
    %c0_i32_0 = arith.constant 0 : i32
    %c0_i32_1 = arith.constant 0 : i32
    return %arg0, %c0_i32, %c0_i32_0 : i32, i32, i32
  }
  func.func @transform_12(%arg0: i32, %arg1: i32, %arg2: i32) -> (i32, i32, i32) {
    %c0_i32 = arith.constant 0 : i32
    %c0_i32_0 = arith.constant 0 : i32
    %c0_i32_1 = arith.constant 0 : i32
    return %arg0, %c0_i32, %c0_i32_0 : i32, i32, i32
  }
  func.func @transform_13(%arg0: i32, %arg1: i32, %arg2: i32) -> (i32, i32, i32) {
    %c0_i32 = arith.constant 0 : i32
    %c0_i32_0 = arith.constant 0 : i32
    %c0_i32_1 = arith.constant 0 : i32
    return %arg0, %c0_i32, %c0_i32_0 : i32, i32, i32
  }
  func.func @transform_14(%arg0: i32, %arg1: i32, %arg2: i32) -> (i32, i32, i32) {
    %c0_i32 = arith.constant 0 : i32
    %c0_i32_0 = arith.constant 0 : i32
    %c0_i32_1 = arith.constant 0 : i32
    return %arg0, %c0_i32, %c0_i32_0 : i32, i32, i32
  }
  func.func @transform_15(%arg0: i32, %arg1: i32, %arg2: i32) -> (i32, i32, i32, i32) {
    %c0_i32 = arith.constant 0 : i32
    %c0_i32_0 = arith.constant 0 : i32
    %c0_i32_1 = arith.constant 0 : i32
    return %arg0, %c0_i32, %arg1, %c0_i32_0 : i32, i32, i32, i32
  }
}

module attributes {stable_mosaic.version = 11 : i64} {
  func.func @_conv3x3_kernel(%arg0: i32, %arg1: i32, %arg2: memref<1x1x18x18x8xbf16, #tpu.memory_space<vmem>>, %arg3: memref<1x9x8x8xbf16, #tpu.memory_space<vmem>>, %arg4: memref<1x1x8xf32, #tpu.memory_space<vmem>>, %arg5: memref<1xf32, #tpu.memory_space<smem>>, %arg6: memref<1x1x16x16x8xbf16, #tpu.memory_space<vmem>>) attributes {dimension_semantics = [#tpu.dimension_semantics<parallel>, #tpu.dimension_semantics<parallel>], iteration_bounds = array<i64: 1, 2>, scalar_prefetch = 0 : i64, scratch_operands = 0 : i64, tpu.core_type = #tpu.core_type<tc>, window_params = [{transform_indices = @transform_0, window_bounds = array<i64: 1, 1, 18, 18, 8>}, {transform_indices = @transform_1, window_bounds = array<i64: 1, 9, 8, 8>}, {transform_indices = @transform_2, window_bounds = array<i64: 1, 1, 8>}, {transform_indices = @transform_3, window_bounds = array<i64: 1>}, {transform_indices = @transform_4, window_bounds = array<i64: 1, 1, 16, 16, 8>}]} {
    %c0 = arith.constant 0 : index
    %c0_0 = arith.constant 0 : index
    %c0_1 = arith.constant 0 : index
    %c0_2 = arith.constant 0 : index
    %c0_3 = arith.constant 0 : index
    %0 = vector.load %arg2[%c0, %c0_0, %c0_1, %c0_2, %c0_3] : memref<1x1x18x18x8xbf16, #tpu.memory_space<vmem>>, vector<1x1x18x18x8xbf16>
    %1 = vector.shape_cast %0 : vector<1x1x18x18x8xbf16> to vector<18x18x8xbf16>
    %cst = arith.constant 0.000000e+00 : f32
    %2 = vector.broadcast %cst : f32 to vector<256x8xf32>
    %3 = vector.extract_strided_slice %1 {offsets = [0, 0, 0], sizes = [16, 16, 8], strides = [1, 1, 1]} : vector<18x18x8xbf16> to vector<16x16x8xbf16>
    %4 = vector.shape_cast %3 : vector<16x16x8xbf16> to vector<256x8xbf16>
    %c0_4 = arith.constant 0 : index
    %c0_5 = arith.constant 0 : index
    %c0_6 = arith.constant 0 : index
    %c0_7 = arith.constant 0 : index
    %5 = vector.load %arg3[%c0_4, %c0_5, %c0_6, %c0_7] : memref<1x9x8x8xbf16, #tpu.memory_space<vmem>>, vector<1x1x8x8xbf16>
    %6 = vector.shape_cast %5 : vector<1x1x8x8xbf16> to vector<8x8xbf16>
    %cst_8 = arith.constant dense<0.000000e+00> : vector<256x8xf32>
    %7 = tpu.matmul %4, %6, %cst_8 {dimension_numbers = #tpu.dot_dimension_numbers<[1], [0], [0], [1], [0, 0, 1, 1], [], []>} : vector<256x8xbf16>, vector<8x8xbf16>, vector<256x8xf32> -> vector<256x8xf32>
    %8 = arith.addf %2, %7 : vector<256x8xf32>
    %9 = vector.extract_strided_slice %1 {offsets = [0, 1, 0], sizes = [16, 16, 8], strides = [1, 1, 1]} : vector<18x18x8xbf16> to vector<16x16x8xbf16>
    %10 = vector.shape_cast %9 : vector<16x16x8xbf16> to vector<256x8xbf16>
    %c0_9 = arith.constant 0 : index
    %c1 = arith.constant 1 : index
    %c0_10 = arith.constant 0 : index
    %c0_11 = arith.constant 0 : index
    %11 = vector.load %arg3[%c0_9, %c1, %c0_10, %c0_11] : memref<1x9x8x8xbf16, #tpu.memory_space<vmem>>, vector<1x1x8x8xbf16>
    %12 = vector.shape_cast %11 : vector<1x1x8x8xbf16> to vector<8x8xbf16>
    %cst_12 = arith.constant dense<0.000000e+00> : vector<256x8xf32>
    %13 = tpu.matmul %10, %12, %cst_12 {dimension_numbers = #tpu.dot_dimension_numbers<[1], [0], [0], [1], [0, 0, 1, 1], [], []>} : vector<256x8xbf16>, vector<8x8xbf16>, vector<256x8xf32> -> vector<256x8xf32>
    %14 = arith.addf %8, %13 : vector<256x8xf32>
    %15 = vector.extract_strided_slice %1 {offsets = [0, 2, 0], sizes = [16, 16, 8], strides = [1, 1, 1]} : vector<18x18x8xbf16> to vector<16x16x8xbf16>
    %16 = vector.shape_cast %15 : vector<16x16x8xbf16> to vector<256x8xbf16>
    %c0_13 = arith.constant 0 : index
    %c2 = arith.constant 2 : index
    %c0_14 = arith.constant 0 : index
    %c0_15 = arith.constant 0 : index
    %17 = vector.load %arg3[%c0_13, %c2, %c0_14, %c0_15] : memref<1x9x8x8xbf16, #tpu.memory_space<vmem>>, vector<1x1x8x8xbf16>
    %18 = vector.shape_cast %17 : vector<1x1x8x8xbf16> to vector<8x8xbf16>
    %cst_16 = arith.constant dense<0.000000e+00> : vector<256x8xf32>
    %19 = tpu.matmul %16, %18, %cst_16 {dimension_numbers = #tpu.dot_dimension_numbers<[1], [0], [0], [1], [0, 0, 1, 1], [], []>} : vector<256x8xbf16>, vector<8x8xbf16>, vector<256x8xf32> -> vector<256x8xf32>
    %20 = arith.addf %14, %19 : vector<256x8xf32>
    %21 = vector.extract_strided_slice %1 {offsets = [1, 0, 0], sizes = [16, 16, 8], strides = [1, 1, 1]} : vector<18x18x8xbf16> to vector<16x16x8xbf16>
    %22 = vector.shape_cast %21 : vector<16x16x8xbf16> to vector<256x8xbf16>
    %c0_17 = arith.constant 0 : index
    %c3 = arith.constant 3 : index
    %c0_18 = arith.constant 0 : index
    %c0_19 = arith.constant 0 : index
    %23 = vector.load %arg3[%c0_17, %c3, %c0_18, %c0_19] : memref<1x9x8x8xbf16, #tpu.memory_space<vmem>>, vector<1x1x8x8xbf16>
    %24 = vector.shape_cast %23 : vector<1x1x8x8xbf16> to vector<8x8xbf16>
    %cst_20 = arith.constant dense<0.000000e+00> : vector<256x8xf32>
    %25 = tpu.matmul %22, %24, %cst_20 {dimension_numbers = #tpu.dot_dimension_numbers<[1], [0], [0], [1], [0, 0, 1, 1], [], []>} : vector<256x8xbf16>, vector<8x8xbf16>, vector<256x8xf32> -> vector<256x8xf32>
    %26 = arith.addf %20, %25 : vector<256x8xf32>
    %27 = vector.extract_strided_slice %1 {offsets = [1, 1, 0], sizes = [16, 16, 8], strides = [1, 1, 1]} : vector<18x18x8xbf16> to vector<16x16x8xbf16>
    %28 = vector.shape_cast %27 : vector<16x16x8xbf16> to vector<256x8xbf16>
    %c0_21 = arith.constant 0 : index
    %c4 = arith.constant 4 : index
    %c0_22 = arith.constant 0 : index
    %c0_23 = arith.constant 0 : index
    %29 = vector.load %arg3[%c0_21, %c4, %c0_22, %c0_23] : memref<1x9x8x8xbf16, #tpu.memory_space<vmem>>, vector<1x1x8x8xbf16>
    %30 = vector.shape_cast %29 : vector<1x1x8x8xbf16> to vector<8x8xbf16>
    %cst_24 = arith.constant dense<0.000000e+00> : vector<256x8xf32>
    %31 = tpu.matmul %28, %30, %cst_24 {dimension_numbers = #tpu.dot_dimension_numbers<[1], [0], [0], [1], [0, 0, 1, 1], [], []>} : vector<256x8xbf16>, vector<8x8xbf16>, vector<256x8xf32> -> vector<256x8xf32>
    %32 = arith.addf %26, %31 : vector<256x8xf32>
    %33 = vector.extract_strided_slice %1 {offsets = [1, 2, 0], sizes = [16, 16, 8], strides = [1, 1, 1]} : vector<18x18x8xbf16> to vector<16x16x8xbf16>
    %34 = vector.shape_cast %33 : vector<16x16x8xbf16> to vector<256x8xbf16>
    %c0_25 = arith.constant 0 : index
    %c5 = arith.constant 5 : index
    %c0_26 = arith.constant 0 : index
    %c0_27 = arith.constant 0 : index
    %35 = vector.load %arg3[%c0_25, %c5, %c0_26, %c0_27] : memref<1x9x8x8xbf16, #tpu.memory_space<vmem>>, vector<1x1x8x8xbf16>
    %36 = vector.shape_cast %35 : vector<1x1x8x8xbf16> to vector<8x8xbf16>
    %cst_28 = arith.constant dense<0.000000e+00> : vector<256x8xf32>
    %37 = tpu.matmul %34, %36, %cst_28 {dimension_numbers = #tpu.dot_dimension_numbers<[1], [0], [0], [1], [0, 0, 1, 1], [], []>} : vector<256x8xbf16>, vector<8x8xbf16>, vector<256x8xf32> -> vector<256x8xf32>
    %38 = arith.addf %32, %37 : vector<256x8xf32>
    %39 = vector.extract_strided_slice %1 {offsets = [2, 0, 0], sizes = [16, 16, 8], strides = [1, 1, 1]} : vector<18x18x8xbf16> to vector<16x16x8xbf16>
    %40 = vector.shape_cast %39 : vector<16x16x8xbf16> to vector<256x8xbf16>
    %c0_29 = arith.constant 0 : index
    %c6 = arith.constant 6 : index
    %c0_30 = arith.constant 0 : index
    %c0_31 = arith.constant 0 : index
    %41 = vector.load %arg3[%c0_29, %c6, %c0_30, %c0_31] : memref<1x9x8x8xbf16, #tpu.memory_space<vmem>>, vector<1x1x8x8xbf16>
    %42 = vector.shape_cast %41 : vector<1x1x8x8xbf16> to vector<8x8xbf16>
    %cst_32 = arith.constant dense<0.000000e+00> : vector<256x8xf32>
    %43 = tpu.matmul %40, %42, %cst_32 {dimension_numbers = #tpu.dot_dimension_numbers<[1], [0], [0], [1], [0, 0, 1, 1], [], []>} : vector<256x8xbf16>, vector<8x8xbf16>, vector<256x8xf32> -> vector<256x8xf32>
    %44 = arith.addf %38, %43 : vector<256x8xf32>
    %45 = vector.extract_strided_slice %1 {offsets = [2, 1, 0], sizes = [16, 16, 8], strides = [1, 1, 1]} : vector<18x18x8xbf16> to vector<16x16x8xbf16>
    %46 = vector.shape_cast %45 : vector<16x16x8xbf16> to vector<256x8xbf16>
    %c0_33 = arith.constant 0 : index
    %c7 = arith.constant 7 : index
    %c0_34 = arith.constant 0 : index
    %c0_35 = arith.constant 0 : index
    %47 = vector.load %arg3[%c0_33, %c7, %c0_34, %c0_35] : memref<1x9x8x8xbf16, #tpu.memory_space<vmem>>, vector<1x1x8x8xbf16>
    %48 = vector.shape_cast %47 : vector<1x1x8x8xbf16> to vector<8x8xbf16>
    %cst_36 = arith.constant dense<0.000000e+00> : vector<256x8xf32>
    %49 = tpu.matmul %46, %48, %cst_36 {dimension_numbers = #tpu.dot_dimension_numbers<[1], [0], [0], [1], [0, 0, 1, 1], [], []>} : vector<256x8xbf16>, vector<8x8xbf16>, vector<256x8xf32> -> vector<256x8xf32>
    %50 = arith.addf %44, %49 : vector<256x8xf32>
    %51 = vector.extract_strided_slice %1 {offsets = [2, 2, 0], sizes = [16, 16, 8], strides = [1, 1, 1]} : vector<18x18x8xbf16> to vector<16x16x8xbf16>
    %52 = vector.shape_cast %51 : vector<16x16x8xbf16> to vector<256x8xbf16>
    %c0_37 = arith.constant 0 : index
    %c8 = arith.constant 8 : index
    %c0_38 = arith.constant 0 : index
    %c0_39 = arith.constant 0 : index
    %53 = vector.load %arg3[%c0_37, %c8, %c0_38, %c0_39] : memref<1x9x8x8xbf16, #tpu.memory_space<vmem>>, vector<1x1x8x8xbf16>
    %54 = vector.shape_cast %53 : vector<1x1x8x8xbf16> to vector<8x8xbf16>
    %cst_40 = arith.constant dense<0.000000e+00> : vector<256x8xf32>
    %55 = tpu.matmul %52, %54, %cst_40 {dimension_numbers = #tpu.dot_dimension_numbers<[1], [0], [0], [1], [0, 0, 1, 1], [], []>} : vector<256x8xbf16>, vector<8x8xbf16>, vector<256x8xf32> -> vector<256x8xf32>
    %56 = arith.addf %50, %55 : vector<256x8xf32>
    %c0_41 = arith.constant 0 : index
    %c0_42 = arith.constant 0 : index
    %c0_43 = arith.constant 0 : index
    %57 = vector.load %arg4[%c0_41, %c0_42, %c0_43] : memref<1x1x8xf32, #tpu.memory_space<vmem>>, vector<1x1x8xf32>
    %58 = vector.shape_cast %57 : vector<1x1x8xf32> to vector<1x8xf32>
    %59 = vector.broadcast %58 : vector<1x8xf32> to vector<256x8xf32>
    %60 = arith.addf %56, %59 : vector<256x8xf32>
    %61 = arith.index_cast %arg0 : i32 to index
    %62 = memref.load %arg5[%61] : memref<1xf32, #tpu.memory_space<smem>>
    %cst_44 = arith.constant 0.000000e+00 : f32
    %63 = vector.broadcast %cst_44 : f32 to vector<256x8xf32>
    %64 = arith.cmpf oge, %60, %63 : vector<256x8xf32>
    %65 = vector.broadcast %62 : f32 to vector<256x8xf32>
    %66 = arith.mulf %65, %60 : vector<256x8xf32>
    %67 = arith.select %64, %60, %66 : vector<256x8xi1>, vector<256x8xf32>
    %68 = vector.shape_cast %67 : vector<256x8xf32> to vector<16x16x8xf32>
    %69 = arith.truncf %68 : vector<16x16x8xf32> to vector<16x16x8xbf16>
    %c0_45 = arith.constant 0 : index
    %c0_46 = arith.constant 0 : index
    %c0_47 = arith.constant 0 : index
    %c0_48 = arith.constant 0 : index
    %c0_49 = arith.constant 0 : index
    %70 = vector.load %arg6[%c0_45, %c0_46, %c0_47, %c0_48, %c0_49] : memref<1x1x16x16x8xbf16, #tpu.memory_space<vmem>>, vector<1x1x16x16x8xbf16>
    %71 = vector.shape_cast %70 : vector<1x1x16x16x8xbf16> to vector<16x16x8xbf16>
    %72 = vector.shape_cast %69 : vector<16x16x8xbf16> to vector<1x1x16x16x8xbf16>
    tpu.vector_store %arg6[%c0_45, %c0_46, %c0_47, %c0_48, %c0_49], %72 {strides = array<i32>} : memref<1x1x16x16x8xbf16, #tpu.memory_space<vmem>>, vector<1x1x16x16x8xbf16>,
    return
  }
  func.func @transform_0(%arg0: i32, %arg1: i32) -> (i32, i32, i32, i32, i32) {
    %c0_i32 = arith.constant 0 : i32
    %c0_i32_0 = arith.constant 0 : i32
    %c0_i32_1 = arith.constant 0 : i32
    %c0_i32_2 = arith.constant 0 : i32
    return %arg0, %arg1, %c0_i32, %c0_i32_0, %c0_i32_1 : i32, i32, i32, i32, i32
  }
  func.func @transform_1(%arg0: i32, %arg1: i32) -> (i32, i32, i32, i32) {
    %c0_i32 = arith.constant 0 : i32
    %c0_i32_0 = arith.constant 0 : i32
    %c0_i32_1 = arith.constant 0 : i32
    %c0_i32_2 = arith.constant 0 : i32
    return %arg0, %c0_i32, %c0_i32_0, %c0_i32_1 : i32, i32, i32, i32
  }
  func.func @transform_2(%arg0: i32, %arg1: i32) -> (i32, i32, i32) {
    %c0_i32 = arith.constant 0 : i32
    %c0_i32_0 = arith.constant 0 : i32
    %c0_i32_1 = arith.constant 0 : i32
    return %arg0, %c0_i32, %c0_i32_0 : i32, i32, i32
  }
  func.func @transform_3(%arg0: i32, %arg1: i32) -> i32 {
    %c0_i32 = arith.constant 0 : i32
    %c0_i32_0 = arith.constant 0 : i32
    return %c0_i32 : i32
  }
  func.func @transform_4(%arg0: i32, %arg1: i32) -> (i32, i32, i32, i32, i32) {
    %c0_i32 = arith.constant 0 : i32
    %c0_i32_0 = arith.constant 0 : i32
    %c0_i32_1 = arith.constant 0 : i32
    %c0_i32_2 = arith.constant 0 : i32
    return %arg0, %arg1, %c0_i32, %c0_i32_0, %c0_i32_1 : i32, i32, i32, i32, i32
  }
}

module attributes {stable_mosaic.version = 11 : i64} {
  func.func @_conv3x3_kernel(%arg0: i32, %arg1: i32, %arg2: memref<1x1x18x18x8xbf16, #tpu.memory_space<vmem>>, %arg3: memref<1x9x8x16xbf16, #tpu.memory_space<vmem>>, %arg4: memref<1x1x16xf32, #tpu.memory_space<vmem>>, %arg5: memref<1xf32, #tpu.memory_space<smem>>, %arg6: memref<1x1x16x16x16xbf16, #tpu.memory_space<vmem>>) attributes {dimension_semantics = [#tpu.dimension_semantics<parallel>, #tpu.dimension_semantics<parallel>], iteration_bounds = array<i64: 1, 2>, scalar_prefetch = 0 : i64, scratch_operands = 0 : i64, tpu.core_type = #tpu.core_type<tc>, window_params = [{transform_indices = @transform_0, window_bounds = array<i64: 1, 1, 18, 18, 8>}, {transform_indices = @transform_1, window_bounds = array<i64: 1, 9, 8, 16>}, {transform_indices = @transform_2, window_bounds = array<i64: 1, 1, 16>}, {transform_indices = @transform_3, window_bounds = array<i64: 1>}, {transform_indices = @transform_4, window_bounds = array<i64: 1, 1, 16, 16, 16>}]} {
    %c0 = arith.constant 0 : index
    %c0_0 = arith.constant 0 : index
    %c0_1 = arith.constant 0 : index
    %c0_2 = arith.constant 0 : index
    %c0_3 = arith.constant 0 : index
    %0 = vector.load %arg2[%c0, %c0_0, %c0_1, %c0_2, %c0_3] : memref<1x1x18x18x8xbf16, #tpu.memory_space<vmem>>, vector<1x1x18x18x8xbf16>
    %1 = vector.shape_cast %0 : vector<1x1x18x18x8xbf16> to vector<18x18x8xbf16>
    %cst = arith.constant 0.000000e+00 : f32
    %2 = vector.broadcast %cst : f32 to vector<256x16xf32>
    %3 = vector.extract_strided_slice %1 {offsets = [0, 0, 0], sizes = [16, 16, 8], strides = [1, 1, 1]} : vector<18x18x8xbf16> to vector<16x16x8xbf16>
    %4 = vector.shape_cast %3 : vector<16x16x8xbf16> to vector<256x8xbf16>
    %c0_4 = arith.constant 0 : index
    %c0_5 = arith.constant 0 : index
    %c0_6 = arith.constant 0 : index
    %c0_7 = arith.constant 0 : index
    %5 = vector.load %arg3[%c0_4, %c0_5, %c0_6, %c0_7] : memref<1x9x8x16xbf16, #tpu.memory_space<vmem>>, vector<1x1x8x16xbf16>
    %6 = vector.shape_cast %5 : vector<1x1x8x16xbf16> to vector<8x16xbf16>
    %cst_8 = arith.constant dense<0.000000e+00> : vector<256x16xf32>
    %7 = tpu.matmul %4, %6, %cst_8 {dimension_numbers = #tpu.dot_dimension_numbers<[1], [0], [0], [1], [0, 0, 1, 1], [], []>} : vector<256x8xbf16>, vector<8x16xbf16>, vector<256x16xf32> -> vector<256x16xf32>
    %8 = arith.addf %2, %7 : vector<256x16xf32>
    %9 = vector.extract_strided_slice %1 {offsets = [0, 1, 0], sizes = [16, 16, 8], strides = [1, 1, 1]} : vector<18x18x8xbf16> to vector<16x16x8xbf16>
    %10 = vector.shape_cast %9 : vector<16x16x8xbf16> to vector<256x8xbf16>
    %c0_9 = arith.constant 0 : index
    %c1 = arith.constant 1 : index
    %c0_10 = arith.constant 0 : index
    %c0_11 = arith.constant 0 : index
    %11 = vector.load %arg3[%c0_9, %c1, %c0_10, %c0_11] : memref<1x9x8x16xbf16, #tpu.memory_space<vmem>>, vector<1x1x8x16xbf16>
    %12 = vector.shape_cast %11 : vector<1x1x8x16xbf16> to vector<8x16xbf16>
    %cst_12 = arith.constant dense<0.000000e+00> : vector<256x16xf32>
    %13 = tpu.matmul %10, %12, %cst_12 {dimension_numbers = #tpu.dot_dimension_numbers<[1], [0], [0], [1], [0, 0, 1, 1], [], []>} : vector<256x8xbf16>, vector<8x16xbf16>, vector<256x16xf32> -> vector<256x16xf32>
    %14 = arith.addf %8, %13 : vector<256x16xf32>
    %15 = vector.extract_strided_slice %1 {offsets = [0, 2, 0], sizes = [16, 16, 8], strides = [1, 1, 1]} : vector<18x18x8xbf16> to vector<16x16x8xbf16>
    %16 = vector.shape_cast %15 : vector<16x16x8xbf16> to vector<256x8xbf16>
    %c0_13 = arith.constant 0 : index
    %c2 = arith.constant 2 : index
    %c0_14 = arith.constant 0 : index
    %c0_15 = arith.constant 0 : index
    %17 = vector.load %arg3[%c0_13, %c2, %c0_14, %c0_15] : memref<1x9x8x16xbf16, #tpu.memory_space<vmem>>, vector<1x1x8x16xbf16>
    %18 = vector.shape_cast %17 : vector<1x1x8x16xbf16> to vector<8x16xbf16>
    %cst_16 = arith.constant dense<0.000000e+00> : vector<256x16xf32>
    %19 = tpu.matmul %16, %18, %cst_16 {dimension_numbers = #tpu.dot_dimension_numbers<[1], [0], [0], [1], [0, 0, 1, 1], [], []>} : vector<256x8xbf16>, vector<8x16xbf16>, vector<256x16xf32> -> vector<256x16xf32>
    %20 = arith.addf %14, %19 : vector<256x16xf32>
    %21 = vector.extract_strided_slice %1 {offsets = [1, 0, 0], sizes = [16, 16, 8], strides = [1, 1, 1]} : vector<18x18x8xbf16> to vector<16x16x8xbf16>
    %22 = vector.shape_cast %21 : vector<16x16x8xbf16> to vector<256x8xbf16>
    %c0_17 = arith.constant 0 : index
    %c3 = arith.constant 3 : index
    %c0_18 = arith.constant 0 : index
    %c0_19 = arith.constant 0 : index
    %23 = vector.load %arg3[%c0_17, %c3, %c0_18, %c0_19] : memref<1x9x8x16xbf16, #tpu.memory_space<vmem>>, vector<1x1x8x16xbf16>
    %24 = vector.shape_cast %23 : vector<1x1x8x16xbf16> to vector<8x16xbf16>
    %cst_20 = arith.constant dense<0.000000e+00> : vector<256x16xf32>
    %25 = tpu.matmul %22, %24, %cst_20 {dimension_numbers = #tpu.dot_dimension_numbers<[1], [0], [0], [1], [0, 0, 1, 1], [], []>} : vector<256x8xbf16>, vector<8x16xbf16>, vector<256x16xf32> -> vector<256x16xf32>
    %26 = arith.addf %20, %25 : vector<256x16xf32>
    %27 = vector.extract_strided_slice %1 {offsets = [1, 1, 0], sizes = [16, 16, 8], strides = [1, 1, 1]} : vector<18x18x8xbf16> to vector<16x16x8xbf16>
    %28 = vector.shape_cast %27 : vector<16x16x8xbf16> to vector<256x8xbf16>
    %c0_21 = arith.constant 0 : index
    %c4 = arith.constant 4 : index
    %c0_22 = arith.constant 0 : index
    %c0_23 = arith.constant 0 : index
    %29 = vector.load %arg3[%c0_21, %c4, %c0_22, %c0_23] : memref<1x9x8x16xbf16, #tpu.memory_space<vmem>>, vector<1x1x8x16xbf16>
    %30 = vector.shape_cast %29 : vector<1x1x8x16xbf16> to vector<8x16xbf16>
    %cst_24 = arith.constant dense<0.000000e+00> : vector<256x16xf32>
    %31 = tpu.matmul %28, %30, %cst_24 {dimension_numbers = #tpu.dot_dimension_numbers<[1], [0], [0], [1], [0, 0, 1, 1], [], []>} : vector<256x8xbf16>, vector<8x16xbf16>, vector<256x16xf32> -> vector<256x16xf32>
    %32 = arith.addf %26, %31 : vector<256x16xf32>
    %33 = vector.extract_strided_slice %1 {offsets = [1, 2, 0], sizes = [16, 16, 8], strides = [1, 1, 1]} : vector<18x18x8xbf16> to vector<16x16x8xbf16>
    %34 = vector.shape_cast %33 : vector<16x16x8xbf16> to vector<256x8xbf16>
    %c0_25 = arith.constant 0 : index
    %c5 = arith.constant 5 : index
    %c0_26 = arith.constant 0 : index
    %c0_27 = arith.constant 0 : index
    %35 = vector.load %arg3[%c0_25, %c5, %c0_26, %c0_27] : memref<1x9x8x16xbf16, #tpu.memory_space<vmem>>, vector<1x1x8x16xbf16>
    %36 = vector.shape_cast %35 : vector<1x1x8x16xbf16> to vector<8x16xbf16>
    %cst_28 = arith.constant dense<0.000000e+00> : vector<256x16xf32>
    %37 = tpu.matmul %34, %36, %cst_28 {dimension_numbers = #tpu.dot_dimension_numbers<[1], [0], [0], [1], [0, 0, 1, 1], [], []>} : vector<256x8xbf16>, vector<8x16xbf16>, vector<256x16xf32> -> vector<256x16xf32>
    %38 = arith.addf %32, %37 : vector<256x16xf32>
    %39 = vector.extract_strided_slice %1 {offsets = [2, 0, 0], sizes = [16, 16, 8], strides = [1, 1, 1]} : vector<18x18x8xbf16> to vector<16x16x8xbf16>
    %40 = vector.shape_cast %39 : vector<16x16x8xbf16> to vector<256x8xbf16>
    %c0_29 = arith.constant 0 : index
    %c6 = arith.constant 6 : index
    %c0_30 = arith.constant 0 : index
    %c0_31 = arith.constant 0 : index
    %41 = vector.load %arg3[%c0_29, %c6, %c0_30, %c0_31] : memref<1x9x8x16xbf16, #tpu.memory_space<vmem>>, vector<1x1x8x16xbf16>
    %42 = vector.shape_cast %41 : vector<1x1x8x16xbf16> to vector<8x16xbf16>
    %cst_32 = arith.constant dense<0.000000e+00> : vector<256x16xf32>
    %43 = tpu.matmul %40, %42, %cst_32 {dimension_numbers = #tpu.dot_dimension_numbers<[1], [0], [0], [1], [0, 0, 1, 1], [], []>} : vector<256x8xbf16>, vector<8x16xbf16>, vector<256x16xf32> -> vector<256x16xf32>
    %44 = arith.addf %38, %43 : vector<256x16xf32>
    %45 = vector.extract_strided_slice %1 {offsets = [2, 1, 0], sizes = [16, 16, 8], strides = [1, 1, 1]} : vector<18x18x8xbf16> to vector<16x16x8xbf16>
    %46 = vector.shape_cast %45 : vector<16x16x8xbf16> to vector<256x8xbf16>
    %c0_33 = arith.constant 0 : index
    %c7 = arith.constant 7 : index
    %c0_34 = arith.constant 0 : index
    %c0_35 = arith.constant 0 : index
    %47 = vector.load %arg3[%c0_33, %c7, %c0_34, %c0_35] : memref<1x9x8x16xbf16, #tpu.memory_space<vmem>>, vector<1x1x8x16xbf16>
    %48 = vector.shape_cast %47 : vector<1x1x8x16xbf16> to vector<8x16xbf16>
    %cst_36 = arith.constant dense<0.000000e+00> : vector<256x16xf32>
    %49 = tpu.matmul %46, %48, %cst_36 {dimension_numbers = #tpu.dot_dimension_numbers<[1], [0], [0], [1], [0, 0, 1, 1], [], []>} : vector<256x8xbf16>, vector<8x16xbf16>, vector<256x16xf32> -> vector<256x16xf32>
    %50 = arith.addf %44, %49 : vector<256x16xf32>
    %51 = vector.extract_strided_slice %1 {offsets = [2, 2, 0], sizes = [16, 16, 8], strides = [1, 1, 1]} : vector<18x18x8xbf16> to vector<16x16x8xbf16>
    %52 = vector.shape_cast %51 : vector<16x16x8xbf16> to vector<256x8xbf16>
    %c0_37 = arith.constant 0 : index
    %c8 = arith.constant 8 : index
    %c0_38 = arith.constant 0 : index
    %c0_39 = arith.constant 0 : index
    %53 = vector.load %arg3[%c0_37, %c8, %c0_38, %c0_39] : memref<1x9x8x16xbf16, #tpu.memory_space<vmem>>, vector<1x1x8x16xbf16>
    %54 = vector.shape_cast %53 : vector<1x1x8x16xbf16> to vector<8x16xbf16>
    %cst_40 = arith.constant dense<0.000000e+00> : vector<256x16xf32>
    %55 = tpu.matmul %52, %54, %cst_40 {dimension_numbers = #tpu.dot_dimension_numbers<[1], [0], [0], [1], [0, 0, 1, 1], [], []>} : vector<256x8xbf16>, vector<8x16xbf16>, vector<256x16xf32> -> vector<256x16xf32>
    %56 = arith.addf %50, %55 : vector<256x16xf32>
    %c0_41 = arith.constant 0 : index
    %c0_42 = arith.constant 0 : index
    %c0_43 = arith.constant 0 : index
    %57 = vector.load %arg4[%c0_41, %c0_42, %c0_43] : memref<1x1x16xf32, #tpu.memory_space<vmem>>, vector<1x1x16xf32>
    %58 = vector.shape_cast %57 : vector<1x1x16xf32> to vector<1x16xf32>
    %59 = vector.broadcast %58 : vector<1x16xf32> to vector<256x16xf32>
    %60 = arith.addf %56, %59 : vector<256x16xf32>
    %61 = arith.index_cast %arg0 : i32 to index
    %62 = memref.load %arg5[%61] : memref<1xf32, #tpu.memory_space<smem>>
    %cst_44 = arith.constant 0.000000e+00 : f32
    %63 = vector.broadcast %cst_44 : f32 to vector<256x16xf32>
    %64 = arith.cmpf oge, %60, %63 : vector<256x16xf32>
    %65 = vector.broadcast %62 : f32 to vector<256x16xf32>
    %66 = arith.mulf %65, %60 : vector<256x16xf32>
    %67 = arith.select %64, %60, %66 : vector<256x16xi1>, vector<256x16xf32>
    %68 = vector.shape_cast %67 : vector<256x16xf32> to vector<16x16x16xf32>
    %69 = arith.truncf %68 : vector<16x16x16xf32> to vector<16x16x16xbf16>
    %c0_45 = arith.constant 0 : index
    %c0_46 = arith.constant 0 : index
    %c0_47 = arith.constant 0 : index
    %c0_48 = arith.constant 0 : index
    %c0_49 = arith.constant 0 : index
    %70 = vector.load %arg6[%c0_45, %c0_46, %c0_47, %c0_48, %c0_49] : memref<1x1x16x16x16xbf16, #tpu.memory_space<vmem>>, vector<1x1x16x16x16xbf16>
    %71 = vector.shape_cast %70 : vector<1x1x16x16x16xbf16> to vector<16x16x16xbf16>
    %72 = vector.shape_cast %69 : vector<16x16x16xbf16> to vector<1x1x16x16x16xbf16>
    tpu.vector_store %arg6[%c0_45, %c0_46, %c0_47, %c0_48, %c0_49], %72 {strides = array<i32>} : memref<1x1x16x16x16xbf16, #tpu.memory_space<vmem>>, vector<1x1x16x16x16xbf16>,
    return
  }
  func.func @transform_0(%arg0: i32, %arg1: i32) -> (i32, i32, i32, i32, i32) {
    %c0_i32 = arith.constant 0 : i32
    %c0_i32_0 = arith.constant 0 : i32
    %c0_i32_1 = arith.constant 0 : i32
    %c0_i32_2 = arith.constant 0 : i32
    return %arg0, %arg1, %c0_i32, %c0_i32_0, %c0_i32_1 : i32, i32, i32, i32, i32
  }
  func.func @transform_1(%arg0: i32, %arg1: i32) -> (i32, i32, i32, i32) {
    %c0_i32 = arith.constant 0 : i32
    %c0_i32_0 = arith.constant 0 : i32
    %c0_i32_1 = arith.constant 0 : i32
    %c0_i32_2 = arith.constant 0 : i32
    return %arg0, %c0_i32, %c0_i32_0, %c0_i32_1 : i32, i32, i32, i32
  }
  func.func @transform_2(%arg0: i32, %arg1: i32) -> (i32, i32, i32) {
    %c0_i32 = arith.constant 0 : i32
    %c0_i32_0 = arith.constant 0 : i32
    %c0_i32_1 = arith.constant 0 : i32
    return %arg0, %c0_i32, %c0_i32_0 : i32, i32, i32
  }
  func.func @transform_3(%arg0: i32, %arg1: i32) -> i32 {
    %c0_i32 = arith.constant 0 : i32
    %c0_i32_0 = arith.constant 0 : i32
    return %c0_i32 : i32
  }
  func.func @transform_4(%arg0: i32, %arg1: i32) -> (i32, i32, i32, i32, i32) {
    %c0_i32 = arith.constant 0 : i32
    %c0_i32_0 = arith.constant 0 : i32
    %c0_i32_1 = arith.constant 0 : i32
    %c0_i32_2 = arith.constant 0 : i32
    return %arg0, %arg1, %c0_i32, %c0_i32_0, %c0_i32_1 : i32, i32, i32, i32, i32
  }
}

module attributes {stable_mosaic.version = 11 : i64} {
  func.func @_conv3x3_kernel(%arg0: i32, %arg1: i32, %arg2: memref<1x1x18x18x16xbf16, #tpu.memory_space<vmem>>, %arg3: memref<1x9x16x16xbf16, #tpu.memory_space<vmem>>, %arg4: memref<1x1x16xf32, #tpu.memory_space<vmem>>, %arg5: memref<1xf32, #tpu.memory_space<smem>>, %arg6: memref<1x1x16x16x16xbf16, #tpu.memory_space<vmem>>) attributes {dimension_semantics = [#tpu.dimension_semantics<parallel>, #tpu.dimension_semantics<parallel>], iteration_bounds = array<i64: 1, 2>, scalar_prefetch = 0 : i64, scratch_operands = 0 : i64, tpu.core_type = #tpu.core_type<tc>, window_params = [{transform_indices = @transform_0, window_bounds = array<i64: 1, 1, 18, 18, 16>}, {transform_indices = @transform_1, window_bounds = array<i64: 1, 9, 16, 16>}, {transform_indices = @transform_2, window_bounds = array<i64: 1, 1, 16>}, {transform_indices = @transform_3, window_bounds = array<i64: 1>}, {transform_indices = @transform_4, window_bounds = array<i64: 1, 1, 16, 16, 16>}]} {
    %c0 = arith.constant 0 : index
    %c0_0 = arith.constant 0 : index
    %c0_1 = arith.constant 0 : index
    %c0_2 = arith.constant 0 : index
    %c0_3 = arith.constant 0 : index
    %0 = vector.load %arg2[%c0, %c0_0, %c0_1, %c0_2, %c0_3] : memref<1x1x18x18x16xbf16, #tpu.memory_space<vmem>>, vector<1x1x18x18x16xbf16>
    %1 = vector.shape_cast %0 : vector<1x1x18x18x16xbf16> to vector<18x18x16xbf16>
    %cst = arith.constant 0.000000e+00 : f32
    %2 = vector.broadcast %cst : f32 to vector<256x16xf32>
    %3 = vector.extract_strided_slice %1 {offsets = [0, 0, 0], sizes = [16, 16, 16], strides = [1, 1, 1]} : vector<18x18x16xbf16> to vector<16x16x16xbf16>
    %4 = vector.shape_cast %3 : vector<16x16x16xbf16> to vector<256x16xbf16>
    %c0_4 = arith.constant 0 : index
    %c0_5 = arith.constant 0 : index
    %c0_6 = arith.constant 0 : index
    %c0_7 = arith.constant 0 : index
    %5 = vector.load %arg3[%c0_4, %c0_5, %c0_6, %c0_7] : memref<1x9x16x16xbf16, #tpu.memory_space<vmem>>, vector<1x1x16x16xbf16>
    %6 = vector.shape_cast %5 : vector<1x1x16x16xbf16> to vector<16x16xbf16>
    %cst_8 = arith.constant dense<0.000000e+00> : vector<256x16xf32>
    %7 = tpu.matmul %4, %6, %cst_8 {dimension_numbers = #tpu.dot_dimension_numbers<[1], [0], [0], [1], [0, 0, 1, 1], [], []>} : vector<256x16xbf16>, vector<16x16xbf16>, vector<256x16xf32> -> vector<256x16xf32>
    %8 = arith.addf %2, %7 : vector<256x16xf32>
    %9 = vector.extract_strided_slice %1 {offsets = [0, 1, 0], sizes = [16, 16, 16], strides = [1, 1, 1]} : vector<18x18x16xbf16> to vector<16x16x16xbf16>
    %10 = vector.shape_cast %9 : vector<16x16x16xbf16> to vector<256x16xbf16>
    %c0_9 = arith.constant 0 : index
    %c1 = arith.constant 1 : index
    %c0_10 = arith.constant 0 : index
    %c0_11 = arith.constant 0 : index
    %11 = vector.load %arg3[%c0_9, %c1, %c0_10, %c0_11] : memref<1x9x16x16xbf16, #tpu.memory_space<vmem>>, vector<1x1x16x16xbf16>
    %12 = vector.shape_cast %11 : vector<1x1x16x16xbf16> to vector<16x16xbf16>
    %cst_12 = arith.constant dense<0.000000e+00> : vector<256x16xf32>
    %13 = tpu.matmul %10, %12, %cst_12 {dimension_numbers = #tpu.dot_dimension_numbers<[1], [0], [0], [1], [0, 0, 1, 1], [], []>} : vector<256x16xbf16>, vector<16x16xbf16>, vector<256x16xf32> -> vector<256x16xf32>
    %14 = arith.addf %8, %13 : vector<256x16xf32>
    %15 = vector.extract_strided_slice %1 {offsets = [0, 2, 0], sizes = [16, 16, 16], strides = [1, 1, 1]} : vector<18x18x16xbf16> to vector<16x16x16xbf16>
    %16 = vector.shape_cast %15 : vector<16x16x16xbf16> to vector<256x16xbf16>
    %c0_13 = arith.constant 0 : index
    %c2 = arith.constant 2 : index
    %c0_14 = arith.constant 0 : index
    %c0_15 = arith.constant 0 : index
    %17 = vector.load %arg3[%c0_13, %c2, %c0_14, %c0_15] : memref<1x9x16x16xbf16, #tpu.memory_space<vmem>>, vector<1x1x16x16xbf16>
    %18 = vector.shape_cast %17 : vector<1x1x16x16xbf16> to vector<16x16xbf16>
    %cst_16 = arith.constant dense<0.000000e+00> : vector<256x16xf32>
    %19 = tpu.matmul %16, %18, %cst_16 {dimension_numbers = #tpu.dot_dimension_numbers<[1], [0], [0], [1], [0, 0, 1, 1], [], []>} : vector<256x16xbf16>, vector<16x16xbf16>, vector<256x16xf32> -> vector<256x16xf32>
    %20 = arith.addf %14, %19 : vector<256x16xf32>
    %21 = vector.extract_strided_slice %1 {offsets = [1, 0, 0], sizes = [16, 16, 16], strides = [1, 1, 1]} : vector<18x18x16xbf16> to vector<16x16x16xbf16>
    %22 = vector.shape_cast %21 : vector<16x16x16xbf16> to vector<256x16xbf16>
    %c0_17 = arith.constant 0 : index
    %c3 = arith.constant 3 : index
    %c0_18 = arith.constant 0 : index
    %c0_19 = arith.constant 0 : index
    %23 = vector.load %arg3[%c0_17, %c3, %c0_18, %c0_19] : memref<1x9x16x16xbf16, #tpu.memory_space<vmem>>, vector<1x1x16x16xbf16>
    %24 = vector.shape_cast %23 : vector<1x1x16x16xbf16> to vector<16x16xbf16>
    %cst_20 = arith.constant dense<0.000000e+00> : vector<256x16xf32>
    %25 = tpu.matmul %22, %24, %cst_20 {dimension_numbers = #tpu.dot_dimension_numbers<[1], [0], [0], [1], [0, 0, 1, 1], [], []>} : vector<256x16xbf16>, vector<16x16xbf16>, vector<256x16xf32> -> vector<256x16xf32>
    %26 = arith.addf %20, %25 : vector<256x16xf32>
    %27 = vector.extract_strided_slice %1 {offsets = [1, 1, 0], sizes = [16, 16, 16], strides = [1, 1, 1]} : vector<18x18x16xbf16> to vector<16x16x16xbf16>
    %28 = vector.shape_cast %27 : vector<16x16x16xbf16> to vector<256x16xbf16>
    %c0_21 = arith.constant 0 : index
    %c4 = arith.constant 4 : index
    %c0_22 = arith.constant 0 : index
    %c0_23 = arith.constant 0 : index
    %29 = vector.load %arg3[%c0_21, %c4, %c0_22, %c0_23] : memref<1x9x16x16xbf16, #tpu.memory_space<vmem>>, vector<1x1x16x16xbf16>
    %30 = vector.shape_cast %29 : vector<1x1x16x16xbf16> to vector<16x16xbf16>
    %cst_24 = arith.constant dense<0.000000e+00> : vector<256x16xf32>
    %31 = tpu.matmul %28, %30, %cst_24 {dimension_numbers = #tpu.dot_dimension_numbers<[1], [0], [0], [1], [0, 0, 1, 1], [], []>} : vector<256x16xbf16>, vector<16x16xbf16>, vector<256x16xf32> -> vector<256x16xf32>
    %32 = arith.addf %26, %31 : vector<256x16xf32>
    %33 = vector.extract_strided_slice %1 {offsets = [1, 2, 0], sizes = [16, 16, 16], strides = [1, 1, 1]} : vector<18x18x16xbf16> to vector<16x16x16xbf16>
    %34 = vector.shape_cast %33 : vector<16x16x16xbf16> to vector<256x16xbf16>
    %c0_25 = arith.constant 0 : index
    %c5 = arith.constant 5 : index
    %c0_26 = arith.constant 0 : index
    %c0_27 = arith.constant 0 : index
    %35 = vector.load %arg3[%c0_25, %c5, %c0_26, %c0_27] : memref<1x9x16x16xbf16, #tpu.memory_space<vmem>>, vector<1x1x16x16xbf16>
    %36 = vector.shape_cast %35 : vector<1x1x16x16xbf16> to vector<16x16xbf16>
    %cst_28 = arith.constant dense<0.000000e+00> : vector<256x16xf32>
    %37 = tpu.matmul %34, %36, %cst_28 {dimension_numbers = #tpu.dot_dimension_numbers<[1], [0], [0], [1], [0, 0, 1, 1], [], []>} : vector<256x16xbf16>, vector<16x16xbf16>, vector<256x16xf32> -> vector<256x16xf32>
    %38 = arith.addf %32, %37 : vector<256x16xf32>
    %39 = vector.extract_strided_slice %1 {offsets = [2, 0, 0], sizes = [16, 16, 16], strides = [1, 1, 1]} : vector<18x18x16xbf16> to vector<16x16x16xbf16>
    %40 = vector.shape_cast %39 : vector<16x16x16xbf16> to vector<256x16xbf16>
    %c0_29 = arith.constant 0 : index
    %c6 = arith.constant 6 : index
    %c0_30 = arith.constant 0 : index
    %c0_31 = arith.constant 0 : index
    %41 = vector.load %arg3[%c0_29, %c6, %c0_30, %c0_31] : memref<1x9x16x16xbf16, #tpu.memory_space<vmem>>, vector<1x1x16x16xbf16>
    %42 = vector.shape_cast %41 : vector<1x1x16x16xbf16> to vector<16x16xbf16>
    %cst_32 = arith.constant dense<0.000000e+00> : vector<256x16xf32>
    %43 = tpu.matmul %40, %42, %cst_32 {dimension_numbers = #tpu.dot_dimension_numbers<[1], [0], [0], [1], [0, 0, 1, 1], [], []>} : vector<256x16xbf16>, vector<16x16xbf16>, vector<256x16xf32> -> vector<256x16xf32>
    %44 = arith.addf %38, %43 : vector<256x16xf32>
    %45 = vector.extract_strided_slice %1 {offsets = [2, 1, 0], sizes = [16, 16, 16], strides = [1, 1, 1]} : vector<18x18x16xbf16> to vector<16x16x16xbf16>
    %46 = vector.shape_cast %45 : vector<16x16x16xbf16> to vector<256x16xbf16>
    %c0_33 = arith.constant 0 : index
    %c7 = arith.constant 7 : index
    %c0_34 = arith.constant 0 : index
    %c0_35 = arith.constant 0 : index
    %47 = vector.load %arg3[%c0_33, %c7, %c0_34, %c0_35] : memref<1x9x16x16xbf16, #tpu.memory_space<vmem>>, vector<1x1x16x16xbf16>
    %48 = vector.shape_cast %47 : vector<1x1x16x16xbf16> to vector<16x16xbf16>
    %cst_36 = arith.constant dense<0.000000e+00> : vector<256x16xf32>
    %49 = tpu.matmul %46, %48, %cst_36 {dimension_numbers = #tpu.dot_dimension_numbers<[1], [0], [0], [1], [0, 0, 1, 1], [], []>} : vector<256x16xbf16>, vector<16x16xbf16>, vector<256x16xf32> -> vector<256x16xf32>
    %50 = arith.addf %44, %49 : vector<256x16xf32>
    %51 = vector.extract_strided_slice %1 {offsets = [2, 2, 0], sizes = [16, 16, 16], strides = [1, 1, 1]} : vector<18x18x16xbf16> to vector<16x16x16xbf16>
    %52 = vector.shape_cast %51 : vector<16x16x16xbf16> to vector<256x16xbf16>
    %c0_37 = arith.constant 0 : index
    %c8 = arith.constant 8 : index
    %c0_38 = arith.constant 0 : index
    %c0_39 = arith.constant 0 : index
    %53 = vector.load %arg3[%c0_37, %c8, %c0_38, %c0_39] : memref<1x9x16x16xbf16, #tpu.memory_space<vmem>>, vector<1x1x16x16xbf16>
    %54 = vector.shape_cast %53 : vector<1x1x16x16xbf16> to vector<16x16xbf16>
    %cst_40 = arith.constant dense<0.000000e+00> : vector<256x16xf32>
    %55 = tpu.matmul %52, %54, %cst_40 {dimension_numbers = #tpu.dot_dimension_numbers<[1], [0], [0], [1], [0, 0, 1, 1], [], []>} : vector<256x16xbf16>, vector<16x16xbf16>, vector<256x16xf32> -> vector<256x16xf32>
    %56 = arith.addf %50, %55 : vector<256x16xf32>
    %c0_41 = arith.constant 0 : index
    %c0_42 = arith.constant 0 : index
    %c0_43 = arith.constant 0 : index
    %57 = vector.load %arg4[%c0_41, %c0_42, %c0_43] : memref<1x1x16xf32, #tpu.memory_space<vmem>>, vector<1x1x16xf32>
    %58 = vector.shape_cast %57 : vector<1x1x16xf32> to vector<1x16xf32>
    %59 = vector.broadcast %58 : vector<1x16xf32> to vector<256x16xf32>
    %60 = arith.addf %56, %59 : vector<256x16xf32>
    %61 = arith.index_cast %arg0 : i32 to index
    %62 = memref.load %arg5[%61] : memref<1xf32, #tpu.memory_space<smem>>
    %cst_44 = arith.constant 0.000000e+00 : f32
    %63 = vector.broadcast %cst_44 : f32 to vector<256x16xf32>
    %64 = arith.cmpf oge, %60, %63 : vector<256x16xf32>
    %65 = vector.broadcast %62 : f32 to vector<256x16xf32>
    %66 = arith.mulf %65, %60 : vector<256x16xf32>
    %67 = arith.select %64, %60, %66 : vector<256x16xi1>, vector<256x16xf32>
    %68 = vector.shape_cast %67 : vector<256x16xf32> to vector<16x16x16xf32>
    %69 = arith.truncf %68 : vector<16x16x16xf32> to vector<16x16x16xbf16>
    %c0_45 = arith.constant 0 : index
    %c0_46 = arith.constant 0 : index
    %c0_47 = arith.constant 0 : index
    %c0_48 = arith.constant 0 : index
    %c0_49 = arith.constant 0 : index
    %70 = vector.load %arg6[%c0_45, %c0_46, %c0_47, %c0_48, %c0_49] : memref<1x1x16x16x16xbf16, #tpu.memory_space<vmem>>, vector<1x1x16x16x16xbf16>
    %71 = vector.shape_cast %70 : vector<1x1x16x16x16xbf16> to vector<16x16x16xbf16>
    %72 = vector.shape_cast %69 : vector<16x16x16xbf16> to vector<1x1x16x16x16xbf16>
    tpu.vector_store %arg6[%c0_45, %c0_46, %c0_47, %c0_48, %c0_49], %72 {strides = array<i32>} : memref<1x1x16x16x16xbf16, #tpu.memory_space<vmem>>, vector<1x1x16x16x16xbf16>,
    return
  }
  func.func @transform_0(%arg0: i32, %arg1: i32) -> (i32, i32, i32, i32, i32) {
    %c0_i32 = arith.constant 0 : i32
    %c0_i32_0 = arith.constant 0 : i32
    %c0_i32_1 = arith.constant 0 : i32
    %c0_i32_2 = arith.constant 0 : i32
    return %arg0, %arg1, %c0_i32, %c0_i32_0, %c0_i32_1 : i32, i32, i32, i32, i32
  }
  func.func @transform_1(%arg0: i32, %arg1: i32) -> (i32, i32, i32, i32) {
    %c0_i32 = arith.constant 0 : i32
    %c0_i32_0 = arith.constant 0 : i32
    %c0_i32_1 = arith.constant 0 : i32
    %c0_i32_2 = arith.constant 0 : i32
    return %arg0, %c0_i32, %c0_i32_0, %c0_i32_1 : i32, i32, i32, i32
  }
  func.func @transform_2(%arg0: i32, %arg1: i32) -> (i32, i32, i32) {
    %c0_i32 = arith.constant 0 : i32
    %c0_i32_0 = arith.constant 0 : i32
    %c0_i32_1 = arith.constant 0 : i32
    return %arg0, %c0_i32, %c0_i32_0 : i32, i32, i32
  }
  func.func @transform_3(%arg0: i32, %arg1: i32) -> i32 {
    %c0_i32 = arith.constant 0 : i32
    %c0_i32_0 = arith.constant 0 : i32
    return %c0_i32 : i32
  }
  func.func @transform_4(%arg0: i32, %arg1: i32) -> (i32, i32, i32, i32, i32) {
    %c0_i32 = arith.constant 0 : i32
    %c0_i32_0 = arith.constant 0 : i32
    %c0_i32_1 = arith.constant 0 : i32
    %c0_i32_2 = arith.constant 0 : i32
    return %arg0, %arg1, %c0_i32, %c0_i32_0, %c0_i32_1 : i32, i32, i32, i32, i32
  }
}

module attributes {stable_mosaic.version = 11 : i64} {
  func.func @_conv3x3_kernel(%arg0: i32, %arg1: i32, %arg2: memref<1x1x18x18x16xbf16, #tpu.memory_space<vmem>>, %arg3: memref<1x9x16x8xbf16, #tpu.memory_space<vmem>>, %arg4: memref<1x1x8xf32, #tpu.memory_space<vmem>>, %arg5: memref<1xf32, #tpu.memory_space<smem>>, %arg6: memref<1x1x16x16x8xbf16, #tpu.memory_space<vmem>>) attributes {dimension_semantics = [#tpu.dimension_semantics<parallel>, #tpu.dimension_semantics<parallel>], iteration_bounds = array<i64: 1, 2>, scalar_prefetch = 0 : i64, scratch_operands = 0 : i64, tpu.core_type = #tpu.core_type<tc>, window_params = [{transform_indices = @transform_0, window_bounds = array<i64: 1, 1, 18, 18, 16>}, {transform_indices = @transform_1, window_bounds = array<i64: 1, 9, 16, 8>}, {transform_indices = @transform_2, window_bounds = array<i64: 1, 1, 8>}, {transform_indices = @transform_3, window_bounds = array<i64: 1>}, {transform_indices = @transform_4, window_bounds = array<i64: 1, 1, 16, 16, 8>}]} {
    %c0 = arith.constant 0 : index
    %c0_0 = arith.constant 0 : index
    %c0_1 = arith.constant 0 : index
    %c0_2 = arith.constant 0 : index
    %c0_3 = arith.constant 0 : index
    %0 = vector.load %arg2[%c0, %c0_0, %c0_1, %c0_2, %c0_3] : memref<1x1x18x18x16xbf16, #tpu.memory_space<vmem>>, vector<1x1x18x18x16xbf16>
    %1 = vector.shape_cast %0 : vector<1x1x18x18x16xbf16> to vector<18x18x16xbf16>
    %cst = arith.constant 0.000000e+00 : f32
    %2 = vector.broadcast %cst : f32 to vector<256x8xf32>
    %3 = vector.extract_strided_slice %1 {offsets = [0, 0, 0], sizes = [16, 16, 16], strides = [1, 1, 1]} : vector<18x18x16xbf16> to vector<16x16x16xbf16>
    %4 = vector.shape_cast %3 : vector<16x16x16xbf16> to vector<256x16xbf16>
    %c0_4 = arith.constant 0 : index
    %c0_5 = arith.constant 0 : index
    %c0_6 = arith.constant 0 : index
    %c0_7 = arith.constant 0 : index
    %5 = vector.load %arg3[%c0_4, %c0_5, %c0_6, %c0_7] : memref<1x9x16x8xbf16, #tpu.memory_space<vmem>>, vector<1x1x16x8xbf16>
    %6 = vector.shape_cast %5 : vector<1x1x16x8xbf16> to vector<16x8xbf16>
    %cst_8 = arith.constant dense<0.000000e+00> : vector<256x8xf32>
    %7 = tpu.matmul %4, %6, %cst_8 {dimension_numbers = #tpu.dot_dimension_numbers<[1], [0], [0], [1], [0, 0, 1, 1], [], []>} : vector<256x16xbf16>, vector<16x8xbf16>, vector<256x8xf32> -> vector<256x8xf32>
    %8 = arith.addf %2, %7 : vector<256x8xf32>
    %9 = vector.extract_strided_slice %1 {offsets = [0, 1, 0], sizes = [16, 16, 16], strides = [1, 1, 1]} : vector<18x18x16xbf16> to vector<16x16x16xbf16>
    %10 = vector.shape_cast %9 : vector<16x16x16xbf16> to vector<256x16xbf16>
    %c0_9 = arith.constant 0 : index
    %c1 = arith.constant 1 : index
    %c0_10 = arith.constant 0 : index
    %c0_11 = arith.constant 0 : index
    %11 = vector.load %arg3[%c0_9, %c1, %c0_10, %c0_11] : memref<1x9x16x8xbf16, #tpu.memory_space<vmem>>, vector<1x1x16x8xbf16>
    %12 = vector.shape_cast %11 : vector<1x1x16x8xbf16> to vector<16x8xbf16>
    %cst_12 = arith.constant dense<0.000000e+00> : vector<256x8xf32>
    %13 = tpu.matmul %10, %12, %cst_12 {dimension_numbers = #tpu.dot_dimension_numbers<[1], [0], [0], [1], [0, 0, 1, 1], [], []>} : vector<256x16xbf16>, vector<16x8xbf16>, vector<256x8xf32> -> vector<256x8xf32>
    %14 = arith.addf %8, %13 : vector<256x8xf32>
    %15 = vector.extract_strided_slice %1 {offsets = [0, 2, 0], sizes = [16, 16, 16], strides = [1, 1, 1]} : vector<18x18x16xbf16> to vector<16x16x16xbf16>
    %16 = vector.shape_cast %15 : vector<16x16x16xbf16> to vector<256x16xbf16>
    %c0_13 = arith.constant 0 : index
    %c2 = arith.constant 2 : index
    %c0_14 = arith.constant 0 : index
    %c0_15 = arith.constant 0 : index
    %17 = vector.load %arg3[%c0_13, %c2, %c0_14, %c0_15] : memref<1x9x16x8xbf16, #tpu.memory_space<vmem>>, vector<1x1x16x8xbf16>
    %18 = vector.shape_cast %17 : vector<1x1x16x8xbf16> to vector<16x8xbf16>
    %cst_16 = arith.constant dense<0.000000e+00> : vector<256x8xf32>
    %19 = tpu.matmul %16, %18, %cst_16 {dimension_numbers = #tpu.dot_dimension_numbers<[1], [0], [0], [1], [0, 0, 1, 1], [], []>} : vector<256x16xbf16>, vector<16x8xbf16>, vector<256x8xf32> -> vector<256x8xf32>
    %20 = arith.addf %14, %19 : vector<256x8xf32>
    %21 = vector.extract_strided_slice %1 {offsets = [1, 0, 0], sizes = [16, 16, 16], strides = [1, 1, 1]} : vector<18x18x16xbf16> to vector<16x16x16xbf16>
    %22 = vector.shape_cast %21 : vector<16x16x16xbf16> to vector<256x16xbf16>
    %c0_17 = arith.constant 0 : index
    %c3 = arith.constant 3 : index
    %c0_18 = arith.constant 0 : index
    %c0_19 = arith.constant 0 : index
    %23 = vector.load %arg3[%c0_17, %c3, %c0_18, %c0_19] : memref<1x9x16x8xbf16, #tpu.memory_space<vmem>>, vector<1x1x16x8xbf16>
    %24 = vector.shape_cast %23 : vector<1x1x16x8xbf16> to vector<16x8xbf16>
    %cst_20 = arith.constant dense<0.000000e+00> : vector<256x8xf32>
    %25 = tpu.matmul %22, %24, %cst_20 {dimension_numbers = #tpu.dot_dimension_numbers<[1], [0], [0], [1], [0, 0, 1, 1], [], []>} : vector<256x16xbf16>, vector<16x8xbf16>, vector<256x8xf32> -> vector<256x8xf32>
    %26 = arith.addf %20, %25 : vector<256x8xf32>
    %27 = vector.extract_strided_slice %1 {offsets = [1, 1, 0], sizes = [16, 16, 16], strides = [1, 1, 1]} : vector<18x18x16xbf16> to vector<16x16x16xbf16>
    %28 = vector.shape_cast %27 : vector<16x16x16xbf16> to vector<256x16xbf16>
    %c0_21 = arith.constant 0 : index
    %c4 = arith.constant 4 : index
    %c0_22 = arith.constant 0 : index
    %c0_23 = arith.constant 0 : index
    %29 = vector.load %arg3[%c0_21, %c4, %c0_22, %c0_23] : memref<1x9x16x8xbf16, #tpu.memory_space<vmem>>, vector<1x1x16x8xbf16>
    %30 = vector.shape_cast %29 : vector<1x1x16x8xbf16> to vector<16x8xbf16>
    %cst_24 = arith.constant dense<0.000000e+00> : vector<256x8xf32>
    %31 = tpu.matmul %28, %30, %cst_24 {dimension_numbers = #tpu.dot_dimension_numbers<[1], [0], [0], [1], [0, 0, 1, 1], [], []>} : vector<256x16xbf16>, vector<16x8xbf16>, vector<256x8xf32> -> vector<256x8xf32>
    %32 = arith.addf %26, %31 : vector<256x8xf32>
    %33 = vector.extract_strided_slice %1 {offsets = [1, 2, 0], sizes = [16, 16, 16], strides = [1, 1, 1]} : vector<18x18x16xbf16> to vector<16x16x16xbf16>
    %34 = vector.shape_cast %33 : vector<16x16x16xbf16> to vector<256x16xbf16>
    %c0_25 = arith.constant 0 : index
    %c5 = arith.constant 5 : index
    %c0_26 = arith.constant 0 : index
    %c0_27 = arith.constant 0 : index
    %35 = vector.load %arg3[%c0_25, %c5, %c0_26, %c0_27] : memref<1x9x16x8xbf16, #tpu.memory_space<vmem>>, vector<1x1x16x8xbf16>
    %36 = vector.shape_cast %35 : vector<1x1x16x8xbf16> to vector<16x8xbf16>
    %cst_28 = arith.constant dense<0.000000e+00> : vector<256x8xf32>
    %37 = tpu.matmul %34, %36, %cst_28 {dimension_numbers = #tpu.dot_dimension_numbers<[1], [0], [0], [1], [0, 0, 1, 1], [], []>} : vector<256x16xbf16>, vector<16x8xbf16>, vector<256x8xf32> -> vector<256x8xf32>
    %38 = arith.addf %32, %37 : vector<256x8xf32>
    %39 = vector.extract_strided_slice %1 {offsets = [2, 0, 0], sizes = [16, 16, 16], strides = [1, 1, 1]} : vector<18x18x16xbf16> to vector<16x16x16xbf16>
    %40 = vector.shape_cast %39 : vector<16x16x16xbf16> to vector<256x16xbf16>
    %c0_29 = arith.constant 0 : index
    %c6 = arith.constant 6 : index
    %c0_30 = arith.constant 0 : index
    %c0_31 = arith.constant 0 : index
    %41 = vector.load %arg3[%c0_29, %c6, %c0_30, %c0_31] : memref<1x9x16x8xbf16, #tpu.memory_space<vmem>>, vector<1x1x16x8xbf16>
    %42 = vector.shape_cast %41 : vector<1x1x16x8xbf16> to vector<16x8xbf16>
    %cst_32 = arith.constant dense<0.000000e+00> : vector<256x8xf32>
    %43 = tpu.matmul %40, %42, %cst_32 {dimension_numbers = #tpu.dot_dimension_numbers<[1], [0], [0], [1], [0, 0, 1, 1], [], []>} : vector<256x16xbf16>, vector<16x8xbf16>, vector<256x8xf32> -> vector<256x8xf32>
    %44 = arith.addf %38, %43 : vector<256x8xf32>
    %45 = vector.extract_strided_slice %1 {offsets = [2, 1, 0], sizes = [16, 16, 16], strides = [1, 1, 1]} : vector<18x18x16xbf16> to vector<16x16x16xbf16>
    %46 = vector.shape_cast %45 : vector<16x16x16xbf16> to vector<256x16xbf16>
    %c0_33 = arith.constant 0 : index
    %c7 = arith.constant 7 : index
    %c0_34 = arith.constant 0 : index
    %c0_35 = arith.constant 0 : index
    %47 = vector.load %arg3[%c0_33, %c7, %c0_34, %c0_35] : memref<1x9x16x8xbf16, #tpu.memory_space<vmem>>, vector<1x1x16x8xbf16>
    %48 = vector.shape_cast %47 : vector<1x1x16x8xbf16> to vector<16x8xbf16>
    %cst_36 = arith.constant dense<0.000000e+00> : vector<256x8xf32>
    %49 = tpu.matmul %46, %48, %cst_36 {dimension_numbers = #tpu.dot_dimension_numbers<[1], [0], [0], [1], [0, 0, 1, 1], [], []>} : vector<256x16xbf16>, vector<16x8xbf16>, vector<256x8xf32> -> vector<256x8xf32>
    %50 = arith.addf %44, %49 : vector<256x8xf32>
    %51 = vector.extract_strided_slice %1 {offsets = [2, 2, 0], sizes = [16, 16, 16], strides = [1, 1, 1]} : vector<18x18x16xbf16> to vector<16x16x16xbf16>
    %52 = vector.shape_cast %51 : vector<16x16x16xbf16> to vector<256x16xbf16>
    %c0_37 = arith.constant 0 : index
    %c8 = arith.constant 8 : index
    %c0_38 = arith.constant 0 : index
    %c0_39 = arith.constant 0 : index
    %53 = vector.load %arg3[%c0_37, %c8, %c0_38, %c0_39] : memref<1x9x16x8xbf16, #tpu.memory_space<vmem>>, vector<1x1x16x8xbf16>
    %54 = vector.shape_cast %53 : vector<1x1x16x8xbf16> to vector<16x8xbf16>
    %cst_40 = arith.constant dense<0.000000e+00> : vector<256x8xf32>
    %55 = tpu.matmul %52, %54, %cst_40 {dimension_numbers = #tpu.dot_dimension_numbers<[1], [0], [0], [1], [0, 0, 1, 1], [], []>} : vector<256x16xbf16>, vector<16x8xbf16>, vector<256x8xf32> -> vector<256x8xf32>
    %56 = arith.addf %50, %55 : vector<256x8xf32>
    %c0_41 = arith.constant 0 : index
    %c0_42 = arith.constant 0 : index
    %c0_43 = arith.constant 0 : index
    %57 = vector.load %arg4[%c0_41, %c0_42, %c0_43] : memref<1x1x8xf32, #tpu.memory_space<vmem>>, vector<1x1x8xf32>
    %58 = vector.shape_cast %57 : vector<1x1x8xf32> to vector<1x8xf32>
    %59 = vector.broadcast %58 : vector<1x8xf32> to vector<256x8xf32>
    %60 = arith.addf %56, %59 : vector<256x8xf32>
    %61 = arith.index_cast %arg0 : i32 to index
    %62 = memref.load %arg5[%61] : memref<1xf32, #tpu.memory_space<smem>>
    %cst_44 = arith.constant 0.000000e+00 : f32
    %63 = vector.broadcast %cst_44 : f32 to vector<256x8xf32>
    %64 = arith.cmpf oge, %60, %63 : vector<256x8xf32>
    %65 = vector.broadcast %62 : f32 to vector<256x8xf32>
    %66 = arith.mulf %65, %60 : vector<256x8xf32>
    %67 = arith.select %64, %60, %66 : vector<256x8xi1>, vector<256x8xf32>
    %68 = vector.shape_cast %67 : vector<256x8xf32> to vector<16x16x8xf32>
    %69 = arith.truncf %68 : vector<16x16x8xf32> to vector<16x16x8xbf16>
    %c0_45 = arith.constant 0 : index
    %c0_46 = arith.constant 0 : index
    %c0_47 = arith.constant 0 : index
    %c0_48 = arith.constant 0 : index
    %c0_49 = arith.constant 0 : index
    %70 = vector.load %arg6[%c0_45, %c0_46, %c0_47, %c0_48, %c0_49] : memref<1x1x16x16x8xbf16, #tpu.memory_space<vmem>>, vector<1x1x16x16x8xbf16>
    %71 = vector.shape_cast %70 : vector<1x1x16x16x8xbf16> to vector<16x16x8xbf16>
    %72 = vector.shape_cast %69 : vector<16x16x8xbf16> to vector<1x1x16x16x8xbf16>
    tpu.vector_store %arg6[%c0_45, %c0_46, %c0_47, %c0_48, %c0_49], %72 {strides = array<i32>} : memref<1x1x16x16x8xbf16, #tpu.memory_space<vmem>>, vector<1x1x16x16x8xbf16>,
    return
  }
  func.func @transform_0(%arg0: i32, %arg1: i32) -> (i32, i32, i32, i32, i32) {
    %c0_i32 = arith.constant 0 : i32
    %c0_i32_0 = arith.constant 0 : i32
    %c0_i32_1 = arith.constant 0 : i32
    %c0_i32_2 = arith.constant 0 : i32
    return %arg0, %arg1, %c0_i32, %c0_i32_0, %c0_i32_1 : i32, i32, i32, i32, i32
  }
  func.func @transform_1(%arg0: i32, %arg1: i32) -> (i32, i32, i32, i32) {
    %c0_i32 = arith.constant 0 : i32
    %c0_i32_0 = arith.constant 0 : i32
    %c0_i32_1 = arith.constant 0 : i32
    %c0_i32_2 = arith.constant 0 : i32
    return %arg0, %c0_i32, %c0_i32_0, %c0_i32_1 : i32, i32, i32, i32
  }
  func.func @transform_2(%arg0: i32, %arg1: i32) -> (i32, i32, i32) {
    %c0_i32 = arith.constant 0 : i32
    %c0_i32_0 = arith.constant 0 : i32
    %c0_i32_1 = arith.constant 0 : i32
    return %arg0, %c0_i32, %c0_i32_0 : i32, i32, i32
  }
  func.func @transform_3(%arg0: i32, %arg1: i32) -> i32 {
    %c0_i32 = arith.constant 0 : i32
    %c0_i32_0 = arith.constant 0 : i32
    return %c0_i32 : i32
  }
  func.func @transform_4(%arg0: i32, %arg1: i32) -> (i32, i32, i32, i32, i32) {
    %c0_i32 = arith.constant 0 : i32
    %c0_i32_0 = arith.constant 0 : i32
    %c0_i32_1 = arith.constant 0 : i32
    %c0_i32_2 = arith.constant 0 : i32
    return %arg0, %arg1, %c0_i32, %c0_i32_0, %c0_i32_1 : i32, i32, i32, i32, i32
  }
}

</mosaic_0001>

<llo_original>
// kernel: squeeze.3
$region0: #{squeeze.3}
  %s0 = inlined_call_operand.vmem [shape: bf16[1,2,16,64], index: 0, kind: input, shape index: {}]
  %s1 = inlined_call_operand.vmem [shape: bf16[2,4,4,4,4,4], index: 1, kind: output, shape index: {}]
  $region1: #{squeeze.3} parent=0
    #allocation0 [shape = 'u8[524288]{0}', space=vmem, size = 0x80000, scoped, tag = 'scoped mem for output reshape']
    #allocation1 [shape = 'u8[16384]{0}', space=vmem, size = 0x4000, scoped, tag = 'scoped mem for input reshape']
    %s3 = ssub.s32 256, 1
    %s4 = scalar_lea.vmem %s0, 12
    %s5 = sshrl.u32 %s3, 1
    %s6 = sor.u32 %s3, %s5
    %s7 = sand.u32 %s6, 85
    %s8 = sshrl.u32 %s7, 1
    %s9 = sor.u32 %s7, %s8
    %s10 = sand.u32 51, %s9
    %s11 = sshrl.u32 %s10, 2
    %s12 = sor.u32 %s10, %s11
    %s13 = sand.u32 15, %s12
    %v14 = vld [vmem:[%s4] sm:%s13]
    %v15 = vunpack.c.l.bf16 %v14
    %v16 = vunpack.c.h.bf16 %v14
    %s17 = scalar_lea.vmem [#allocation1], 24
    %18 = vst [vmem:[%s17] sm:%s3] %v15
    %s19 = scalar_lea.vmem %s0, 8
    %s20 = sshrl.u32 %s3, 1
    %s21 = sor.u32 %s3, %s20
    %s22 = sand.u32 %s21, 85
    %s23 = sshrl.u32 %s22, 1
    %s24 = sor.u32 %s22, %s23
    %s25 = sand.u32 51, %s24
    %s26 = sshrl.u32 %s25, 2
    %s27 = sor.u32 %s25, %s26
    %s28 = sand.u32 15, %s27
    %v29 = vld [vmem:[%s19] sm:%s28]
    %v30 = vunpack.c.l.bf16 %v29
    %v31 = vunpack.c.h.bf16 %v29
    %s32 = scalar_lea.vmem [#allocation1], 16
    %33 = vst [vmem:[%s32] sm:%s3] %v30
    %s34 = scalar_lea.vmem %s0, 4
    %s35 = sshrl.u32 %s3, 1
    %s36 = sor.u32 %s3, %s35
    %s37 = sand.u32 %s36, 85
    %s38 = sshrl.u32 %s37, 1
    %s39 = sor.u32 %s37, %s38
    %s40 = sand.u32 51, %s39
    %s41 = sshrl.u32 %s40, 2
    %s42 = sor.u32 %s40, %s41
    %s43 = sand.u32 15, %s42
    %v44 = vld [vmem:[%s34] sm:%s43]
    %v45 = vunpack.c.l.bf16 %v44
    %v46 = vunpack.c.h.bf16 %v44
    %s47 = scalar_lea.vmem [#allocation1], 8
    %48 = vst [vmem:[%s47] sm:%s3] %v45
    %s49 = sshrl.u32 %s3, 1
    %s50 = sor.u32 %s3, %s49
    %s51 = sand.u32 %s50, 85
    %s52 = sshrl.u32 %s51, 1
    %s53 = sor.u32 %s51, %s52
    %s54 = sand.u32 51, %s53
    %s55 = sshrl.u32 %s54, 2
    %s56 = sor.u32 %s54, %s55
    %s57 = sand.u32 15, %s56
    %v58 = vld [vmem:[%s0] sm:%s57]
    %v59 = vunpack.c.l.bf16 %v58
    %v60 = vunpack.c.h.bf16 %v58
    %61 = vst [vmem:[#allocation1] sm:%s3] %v59
    %v62 = vld [vmem:[#allocation1] sm:$0xff]
    %vm63 = vcmask 31744
    %64 = vst.msk [vmem:[#allocation0] sm:$0x1] %vm63, %v62
    %s65 = scalar_lea.vmem [#allocation0], 31
    %66 = vst.msk [vmem:[%s65] sm:$0x2] %vm63, %v62
    %s67 = scalar_lea.vmem [#allocation0], 62
    %68 = vst.msk [vmem:[%s67] sm:$0x4] %vm63, %v62
    %s69 = scalar_lea.vmem [#allocation0], 93
    %70 = vst.msk [vmem:[%s69] sm:$0x8] %vm63, %v62
    %s71 = scalar_lea.vmem [#allocation0], 124
    %72 = vst.msk [vmem:[%s71] sm:$0x10] %vm63, %v62
    %s73 = scalar_lea.vmem [#allocation0], 155
    %74 = vst.msk [vmem:[%s73] sm:$0x20] %vm63, %v62
    %s75 = scalar_lea.vmem [#allocation0], 186
    %76 = vst.msk [vmem:[%s75] sm:$0x40] %vm63, %v62
    %s77 = scalar_lea.vmem [#allocation0], 217
    %78 = vst.msk [vmem:[%s77] sm:$0x80] %vm63, %v62
    %s79 = scalar_lea.vmem [#allocation1], 8
    %v80 = vld [vmem:[%s79] sm:$0xff]
    %vm81 = vcmask 31744
    %s82 = scalar_lea.vmem [#allocation0], 256
    %83 = vst.msk [vmem:[%s82] sm:$0x1] %vm81, %v80
    %s84 = scalar_lea.vmem [#allocation0], 287
    %85 = vst.msk [vmem:[%s84] sm:$0x2] %vm81, %v80
    %s86 = scalar_lea.vmem [#allocation0], 318
    %87 = vst.msk [vmem:[%s86] sm:$0x4] %vm81, %v80
    %s88 = scalar_lea.vmem [#allocation0], 349
    %89 = vst.msk [vmem:[%s88] sm:$0x8] %vm81, %v80
    %s90 = scalar_lea.vmem [#allocation0], 380
    %91 = vst.msk [vmem:[%s90] sm:$0x10] %vm81, %v80
    %s92 = scalar_lea.vmem [#allocation0], 411
    %93 = vst.msk [vmem:[%s92] sm:$0x20] %vm81, %v80
    %s94 = scalar_lea.vmem [#allocation0], 442
    %95 = vst.msk [vmem:[%s94] sm:$0x40] %vm81, %v80
    %s96 = scalar_lea.vmem [#allocation0], 473
    %97 = vst.msk [vmem:[%s96] sm:$0x80] %vm81, %v80
    %s98 = scalar_lea.vmem [#allocation1], 16
    %v99 = vld [vmem:[%s98] sm:$0xff]
    %vm100 = vcmask 31744
    %s101 = scalar_lea.vmem [#allocation0], 512
    %102 = vst.msk [vmem:[%s101] sm:$0x1] %vm100, %v99
    %s103 = scalar_lea.vmem [#allocation0], 543
    %104 = vst.msk [vmem:[%s103] sm:$0x2] %vm100, %v99
    %s105 = scalar_lea.vmem [#allocation0], 574
    %106 = vst.msk [vmem:[%s105] sm:$0x4] %vm100, %v99
    %s107 = scalar_lea.vmem [#allocation0], 605
    %108 = vst.msk [vmem:[%s107] sm:$0x8] %vm100, %v99
    %s109 = scalar_lea.vmem [#allocation0], 636
    %110 = vst.msk [vmem:[%s109] sm:$0x10] %vm100, %v99
    %s111 = scalar_lea.vmem [#allocation0], 667
    %112 = vst.msk [vmem:[%s111] sm:$0x20] %vm100, %v99
    %s113 = scalar_lea.vmem [#allocation0], 698
    %114 = vst.msk [vmem:[%s113] sm:$0x40] %vm100, %v99
    %s115 = scalar_lea.vmem [#allocation0], 729
    %116 = vst.msk [vmem:[%s115] sm:$0x80] %vm100, %v99
    %s117 = scalar_lea.vmem [#allocation1], 24
    %v118 = vld [vmem:[%s117] sm:$0xff]
    %vm119 = vcmask 31744
    %s120 = scalar_lea.vmem [#allocation0], 768
    %121 = vst.msk [vmem:[%s120] sm:$0x1] %vm119, %v118
    %s122 = scalar_lea.vmem [#allocation0], 799
    %123 = vst.msk [vmem:[%s122] sm:$0x2] %vm119, %v118
    %s124 = scalar_lea.vmem [#allocation0], 830
    %125 = vst.msk [vmem:[%s124] sm:$0x4] %vm119, %v118
    %s126 = scalar_lea.vmem [#allocation0], 861
    %127 = vst.msk [vmem:[%s126] sm:$0x8] %vm119, %v118
    %s128 = scalar_lea.vmem [#allocation0], 892
    %129 = vst.msk [vmem:[%s128] sm:$0x10] %vm119, %v118
    %s130 = scalar_lea.vmem [#allocation0], 923
    %131 = vst.msk [vmem:[%s130] sm:$0x20] %vm119, %v118
    %s132 = scalar_lea.vmem [#allocation0], 954
    %133 = vst.msk [vmem:[%s132] sm:$0x40] %vm119, %v118
    %s134 = scalar_lea.vmem [#allocation0], 985
    %135 = vst.msk [vmem:[%s134] sm:$0x80] %vm119, %v118
    %v136 = vld [vmem:[#allocation1] sm:$0xff]
    %137 = vrot.lane.b32.xlu0 %v136, 124
    %v138 = vpop.permute.xlu0 %137
    %vm139 = vcmask 31744
    %s140 = scalar_lea.vmem [#allocation0], 1
    %141 = vst.msk [vmem:[%s140] sm:$0x1] %vm139, %v138
    %s142 = scalar_lea.vmem [#allocation0], 32
    %143 = vst.msk [vmem:[%s142] sm:$0x2] %vm139, %v138
    %s144 = scalar_lea.vmem [#allocation0], 63
    %145 = vst.msk [vmem:[%s144] sm:$0x4] %vm139, %v138
    %s146 = scalar_lea.vmem [#allocation0], 94
    %147 = vst.msk [vmem:[%s146] sm:$0x8] %vm139, %v138
    %s148 = scalar_lea.vmem [#allocation0], 125
    %149 = vst.msk [vmem:[%s148] sm:$0x10] %vm139, %v138
    %s150 = scalar_lea.vmem [#allocation0], 156
    %151 = vst.msk [vmem:[%s150] sm:$0x20] %vm139, %v138
    %s152 = scalar_lea.vmem [#allocation0], 187
    %153 = vst.msk [vmem:[%s152] sm:$0x40] %vm139, %v138
    %s154 = scalar_lea.vmem [#allocation0], 218
    %155 = vst.msk [vmem:[%s154] sm:$0x80] %vm139, %v138
    %s156 = scalar_lea.vmem [#allocation1], 8
    %v157 = vld [vmem:[%s156] sm:$0xff]
    %158 = vrot.lane.b32.xlu0 %v157, 124
    %v159 = vpop.permute.xlu0 %158
    %vm160 = vcmask 31744
    %s161 = scalar_lea.vmem [#allocation0], 257
    %162 = vst.msk [vmem:[%s161] sm:$0x1] %vm160, %v159
    %s163 = scalar_lea.vmem [#allocation0], 288
    %164 = vst.msk [vmem:[%s163] sm:$0x2] %vm160, %v159
    %s165 = scalar_lea.vmem [#allocation0], 319
    %166 = vst.msk [vmem:[%s165] sm:$0x4] %vm160, %v159
    %s167 = scalar_lea.vmem [#allocation0], 350
    %168 = vst.msk [vmem:[%s167] sm:$0x8] %vm160, %v159
    %s169 = scalar_lea.vmem [#allocation0], 381
    %170 = vst.msk [vmem:[%s169] sm:$0x10] %vm160, %v159
    %s171 = scalar_lea.vmem [#allocation0], 412
    %172 = vst.msk [vmem:[%s171] sm:$0x20] %vm160, %v159
    %s173 = scalar_lea.vmem [#allocation0], 443
    %174 = vst.msk [vmem:[%s173] sm:$0x40] %vm160, %v159
    %s175 = scalar_lea.vmem [#allocation0], 474
    %176 = vst.msk [vmem:[%s175] sm:$0x80] %vm160, %v159
    %s177 = scalar_lea.vmem [#allocation1], 16
    %v178 = vld [vmem:[%s177] sm:$0xff]
    %179 = vrot.lane.b32.xlu0 %v178, 124
    %v180 = vpop.permute.xlu0 %179
    %vm181 = vcmask 31744
    %s182 = scalar_lea.vmem [#allocation0], 513
    %183 = vst.msk [vmem:[%s182] sm:$0x1] %vm181, %v180
    %s184 = scalar_lea.vmem [#allocation0], 544
    %185 = vst.msk [vmem:[%s184] sm:$0x2] %vm181, %v180
    %s186 = scalar_lea.vmem [#allocation0], 575
    %187 = vst.msk [vmem:[%s186] sm:$0x4] %vm181, %v180
    %s188 = scalar_lea.vmem [#allocation0], 606
    %189 = vst.msk [vmem:[%s188] sm:$0x8] %vm181, %v180
    %s190 = scalar_lea.vmem [#allocation0], 637
    %191 = vst.msk [vmem:[%s190] sm:$0x10] %vm181, %v180
    %s192 = scalar_lea.vmem [#allocation0], 668
    %193 = vst.msk [vmem:[%s192] sm:$0x20] %vm181, %v180
    %s194 = scalar_lea.vmem [#allocation0], 699
    %195 = vst.msk [vmem:[%s194] sm:$0x40] %vm181, %v180
    %s196 = scalar_lea.vmem [#allocation0], 730
    %197 = vst.msk [vmem:[%s196] sm:$0x80] %vm181, %v180
    %s198 = scalar_lea.vmem [#allocation1], 24
    %v199 = vld [vmem:[%s198] sm:$0xff]
    %200 = vrot.lane.b32.xlu0 %v199, 124
    %v201 = vpop.permute.xlu0 %200
    %vm202 = vcmask 31744
    %s203 = scalar_lea.vmem [#allocation0], 769
    %204 = vst.msk [vmem:[%s203] sm:$0x1] %vm202, %v201
    %s205 = scalar_lea.vmem [#allocation0], 800
    %206 = vst.msk [vmem:[%s205] sm:$0x2] %vm202, %v201
    %s207 = scalar_lea.vmem [#allocation0], 831
    %208 = vst.msk [vmem:[%s207] sm:$0x4] %vm202, %v201
    %s209 = scalar_lea.vmem [#allocation0], 862
    %210 = vst.msk [vmem:[%s209] sm:$0x8] %vm202, %v201
    %s211 = scalar_lea.vmem [#allocation0], 893
    %212 = vst.msk [vmem:[%s211] sm:$0x10] %vm202, %v201
    %s213 = scalar_lea.vmem [#allocation0], 924
    %214 = vst.msk [vmem:[%s213] sm:$0x20] %vm202, %v201
    %s215 = scalar_lea.vmem [#allocation0], 955
    %216 = vst.msk [vmem:[%s215] sm:$0x40] %vm202, %v201
    %s217 = scalar_lea.vmem [#allocation0], 986
    %218 = vst.msk [vmem:[%s217] sm:$0x80] %vm202, %v201
    %v219 = vld [vmem:[#allocation1] sm:$0xff]
    %220 = vrot.lane.b32.xlu0 %v219, 120
    %v221 = vpop.permute.xlu0 %220
    %vm222 = vcmask 31744
    %s223 = scalar_lea.vmem [#allocation0], 2
    %224 = vst.msk [vmem:[%s223] sm:$0x1] %vm222, %v221
    %s225 = scalar_lea.vmem [#allocation0], 33
    %226 = vst.msk [vmem:[%s225] sm:$0x2] %vm222, %v221
    %s227 = scalar_lea.vmem [#allocation0], 64
    %228 = vst.msk [vmem:[%s227] sm:$0x4] %vm222, %v221
    %s229 = scalar_lea.vmem [#allocation0], 95
    %230 = vst.msk [vmem:[%s229] sm:$0x8] %vm222, %v221
    %s231 = scalar_lea.vmem [#allocation0], 126
    %232 = vst.msk [vmem:[%s231] sm:$0x10] %vm222, %v221
    %s233 = scalar_lea.vmem [#allocation0], 157
    %234 = vst.msk [vmem:[%s233] sm:$0x20] %vm222, %v221
    %s235 = scalar_lea.vmem [#allocation0], 188
    %236 = vst.msk [vmem:[%s235] sm:$0x40] %vm222, %v221
    %s237 = scalar_lea.vmem [#allocation0], 219
    %238 = vst.msk [vmem:[%s237] sm:$0x80] %vm222, %v221
    %s239 = scalar_lea.vmem [#allocation1], 8
    %v240 = vld [vmem:[%s239] sm:$0xff]
    %241 = vrot.lane.b32.xlu0 %v240, 120
    %v242 = vpop.permute.xlu0 %241
    %vm243 = vcmask 31744
    %s244 = scalar_lea.vmem [#allocation0], 258
    %245 = vst.msk [vmem:[%s244] sm:$0x1] %vm243, %v242
    %s246 = scalar_lea.vmem [#allocation0], 289
    %247 = vst.msk [vmem:[%s246] sm:$0x2] %vm243, %v242
    %s248 = scalar_lea.vmem [#allocation0], 320
    %249 = vst.msk [vmem:[%s248] sm:$0x4] %vm243, %v242
    %s250 = scalar_lea.vmem [#allocation0], 351
    %251 = vst.msk [vmem:[%s250] sm:$0x8] %vm243, %v242
    %s252 = scalar_lea.vmem [#allocation0], 382
    %253 = vst.msk [vmem:[%s252] sm:$0x10] %vm243, %v242
    %s254 = scalar_lea.vmem [#allocation0], 413
    %255 = vst.msk [vmem:[%s254] sm:$0x20] %vm243, %v242
    %s256 = scalar_lea.vmem [#allocation0], 444
    %257 = vst.msk [vmem:[%s256] sm:$0x40] %vm243, %v242
    %s258 = scalar_lea.vmem [#allocation0], 475
    %259 = vst.msk [vmem:[%s258] sm:$0x80] %vm243, %v242
    %s260 = scalar_lea.vmem [#allocation1], 16
    %v261 = vld [vmem:[%s260] sm:$0xff]
    %262 = vrot.lane.b32.xlu0 %v261, 120
    %v263 = vpop.permute.xlu0 %262
    %vm264 = vcmask 31744
    %s265 = scalar_lea.vmem [#allocation0], 514
    %266 = vst.msk [vmem:[%s265] sm:$0x1] %vm264, %v263
    %s267 = scalar_lea.vmem [#allocation0], 545
    %268 = vst.msk [vmem:[%s267] sm:$0x2] %vm264, %v263
    %s269 = scalar_lea.vmem [#allocation0], 576
    %270 = vst.msk [vmem:[%s269] sm:$0x4] %vm264, %v263
    %s271 = scalar_lea.vmem [#allocation0], 607
    %272 = vst.msk [vmem:[%s271] sm:$0x8] %vm264, %v263
    %s273 = scalar_lea.vmem [#allocation0], 638
    %274 = vst.msk [vmem:[%s273] sm:$0x10] %vm264, %v263
    %s275 = scalar_lea.vmem [#allocation0], 669
    %276 = vst.msk [vmem:[%s275] sm:$0x20] %vm264, %v263
    %s277 = scalar_lea.vmem [#allocation0], 700
    %278 = vst.msk [vmem:[%s277] sm:$0x40] %vm264, %v263
    %s279 = scalar_lea.vmem [#allocation0], 731
    %280 = vst.msk [vmem:[%s279] sm:$0x80] %vm264, %v263
    %s281 = scalar_lea.vmem [#allocation1], 24
    %v282 = vld [vmem:[%s281] sm:$0xff]
    %283 = vrot.lane.b32.xlu0 %v282, 120
    %v284 = vpop.permute.xlu0 %283
    %vm285 = vcmask 31744
    %s286 = scalar_lea.vmem [#allocation0], 770
    %287 = vst.msk [vmem:[%s286] sm:$0x1] %vm285, %v284
    %s288 = scalar_lea.vmem [#allocation0], 801
    %289 = vst.msk [vmem:[%s288] sm:$0x2] %vm285, %v284
    %s290 = scalar_lea.vmem [#allocation0], 832
    %291 = vst.msk [vmem:[%s290] sm:$0x4] %vm285, %v284
    %s292 = scalar_lea.vmem [#allocation0], 863
    %293 = vst.msk [vmem:[%s292] sm:$0x8] %vm285, %v284
    %s294 = scalar_lea.vmem [#allocation0], 894
    %295 = vst.msk [vmem:[%s294] sm:$0x10] %vm285, %v284
    %s296 = scalar_lea.vmem [#allocation0], 925
    %297 = vst.msk [vmem:[%s296] sm:$0x20] %vm285, %v284
    %s298 = scalar_lea.vmem [#allocation0], 956
    %299 = vst.msk [vmem:[%s298] sm:$0x40] %vm285, %v284
    %s300 = scalar_lea.vmem [#allocation0], 987
    %301 = vst.msk [vmem:[%s300] sm:$0x80] %vm285, %v284
    %v302 = vld [vmem:[#allocation1] sm:$0xff]
    %303 = vrot.lane.b32.xlu0 %v302, 116
    %v304 = vpop.permute.xlu0 %303
    %vm305 = vcmask 31744
    %s306 = scalar_lea.vmem [#allocation0], 3
    %307 = vst.msk [vmem:[%s306] sm:$0x1] %vm305, %v304
    %s308 = scalar_lea.vmem [#allocation0], 34
    %309 = vst.msk [vmem:[%s308] sm:$0x2] %vm305, %v304
    %s310 = scalar_lea.vmem [#allocation0], 65
    %311 = vst.msk [vmem:[%s310] sm:$0x4] %vm305, %v304
    %s312 = scalar_lea.vmem [#allocation0], 96
    %313 = vst.msk [vmem:[%s312] sm:$0x8] %vm305, %v304
    %s314 = scalar_lea.vmem [#allocation0], 127
    %315 = vst.msk [vmem:[%s314] sm:$0x10] %vm305, %v304
    %s316 = scalar_lea.vmem [#allocation0], 158
    %317 = vst.msk [vmem:[%s316] sm:$0x20] %vm305, %v304
    %s318 = scalar_lea.vmem [#allocation0], 189
    %319 = vst.msk [vmem:[%s318] sm:$0x40] %vm305, %v304
    %s320 = scalar_lea.vmem [#allocation0], 220
    %321 = vst.msk [vmem:[%s320] sm:$0x80] %vm305, %v304
    %s322 = scalar_lea.vmem [#allocation1], 8
    %v323 = vld [vmem:[%s322] sm:$0xff]
    %324 = vrot.lane.b32.xlu0 %v323, 116
    %v325 = vpop.permute.xlu0 %324
    %vm326 = vcmask 31744
    %s327 = scalar_lea.vmem [#allocation0], 259
    %328 = vst.msk [vmem:[%s327] sm:$0x1] %vm326, %v325
    %s329 = scalar_lea.vmem [#allocation0], 290
    %330 = vst.msk [vmem:[%s329] sm:$0x2] %vm326, %v325
    %s331 = scalar_lea.vmem [#allocation0], 321
    %332 = vst.msk [vmem:[%s331] sm:$0x4] %vm326, %v325
    %s333 = scalar_lea.vmem [#allocation0], 352
    %334 = vst.msk [vmem:[%s333] sm:$0x8] %vm326, %v325
    %s335 = scalar_lea.vmem [#allocation0], 383
    %336 = vst.msk [vmem:[%s335] sm:$0x10] %vm326, %v325
    %s337 = scalar_lea.vmem [#allocation0], 414
    %338 = vst.msk [vmem:[%s337] sm:$0x20] %vm326, %v325
    %s339 = scalar_lea.vmem [#allocation0], 445
    %340 = vst.msk [vmem:[%s339] sm:$0x40] %vm326, %v325
    %s341 = scalar_lea.vmem [#allocation0], 476
    %342 = vst.msk [vmem:[%s341] sm:$0x80] %vm326, %v325
    %s343 = scalar_lea.vmem [#allocation1], 16
    %v344 = vld [vmem:[%s343] sm:$0xff]
    %345 = vrot.lane.b32.xlu0 %v344, 116
    %v346 = vpop.permute.xlu0 %345
    %vm347 = vcmask 31744
    %s348 = scalar_lea.vmem [#allocation0], 515
    %349 = vst.msk [vmem:[%s348] sm:$0x1] %vm347, %v346
    %s350 = scalar_lea.vmem [#allocation0], 546
    %351 = vst.msk [vmem:[%s350] sm:$0x2] %vm347, %v346
    %s352 = scalar_lea.vmem [#allocation0], 577
    %353 = vst.msk [vmem:[%s352] sm:$0x4] %vm347, %v346
    %s354 = scalar_lea.vmem [#allocation0], 608
    %355 = vst.msk [vmem:[%s354] sm:$0x8] %vm347, %v346
    %s356 = scalar_lea.vmem [#allocation0], 639
    %357 = vst.msk [vmem:[%s356] sm:$0x10] %vm347, %v346
    %s358 = scalar_lea.vmem [#allocation0], 670
    %359 = vst.msk [vmem:[%s358] sm:$0x20] %vm347, %v346
    %s360 = scalar_lea.vmem [#allocation0], 701
    %361 = vst.msk [vmem:[%s360] sm:$0x40] %vm347, %v346
    %s362 = scalar_lea.vmem [#allocation0], 732
    %363 = vst.msk [vmem:[%s362] sm:$0x80] %vm347, %v346
    %s364 = scalar_lea.vmem [#allocation1], 24
    %v365 = vld [vmem:[%s364] sm:$0xff]
    %366 = vrot.lane.b32.xlu0 %v365, 116
    %v367 = vpop.permute.xlu0 %366
    %vm368 = vcmask 31744
    %s369 = scalar_lea.vmem [#allocation0], 771
    %370 = vst.msk [vmem:[%s369] sm:$0x1] %vm368, %v367
    %s371 = scalar_lea.vmem [#allocation0], 802
    %372 = vst.msk [vmem:[%s371] sm:$0x2] %vm368, %v367
    %s373 = scalar_lea.vmem [#allocation0], 833
    %374 = vst.msk [vmem:[%s373] sm:$0x4] %vm368, %v367
    %s375 = scalar_lea.vmem [#allocation0], 864
    %376 = vst.msk [vmem:[%s375] sm:$0x8] %vm368, %v367
    %s377 = scalar_lea.vmem [#allocation0], 895
    %378 = vst.msk [vmem:[%s377] sm:$0x10] %vm368, %v367
    %s379 = scalar_lea.vmem [#allocation0], 926
    %380 = vst.msk [vmem:[%s379] sm:$0x20] %vm368, %v367
    %s381 = scalar_lea.vmem [#allocation0], 957
    %382 = vst.msk [vmem:[%s381] sm:$0x40] %vm368, %v367
    %s383 = scalar_lea.vmem [#allocation0], 988
    %384 = vst.msk [vmem:[%s383] sm:$0x80] %vm368, %v367
    %v385 = vld [vmem:[#allocation1] sm:$0xff]
    %386 = vrot.lane.b32.xlu0 %v385, 112
    %v387 = vpop.permute.xlu0 %386
    %vm388 = vcmask 31744
    %s389 = scalar_lea.vmem [#allocation0], 8
    %390 = vst.msk [vmem:[%s389] sm:$0x1] %vm388, %v387
    %s391 = scalar_lea.vmem [#allocation0], 39
    %392 = vst.msk [vmem:[%s391] sm:$0x2] %vm388, %v387
    %s393 = scalar_lea.vmem [#allocation0], 70
    %394 = vst.msk [vmem:[%s393] sm:$0x4] %vm388, %v387
    %s395 = scalar_lea.vmem [#allocation0], 101
    %396 = vst.msk [vmem:[%s395] sm:$0x8] %vm388, %v387
    %s397 = scalar_lea.vmem [#allocation0], 132
    %398 = vst.msk [vmem:[%s397] sm:$0x10] %vm388, %v387
    %s399 = scalar_lea.vmem [#allocation0], 163
    %400 = vst.msk [vmem:[%s399] sm:$0x20] %vm388, %v387
    %s401 = scalar_lea.vmem [#allocation0], 194
    %402 = vst.msk [vmem:[%s401] sm:$0x40] %vm388, %v387
    %s403 = scalar_lea.vmem [#allocation0], 225
    %404 = vst.msk [vmem:[%s403] sm:$0x80] %vm388, %v387
    %s405 = scalar_lea.vmem [#allocation1], 8
    %v406 = vld [vmem:[%s405] sm:$0xff]
    %407 = vrot.lane.b32.xlu0 %v406, 112
    %v408 = vpop.permute.xlu0 %407
    %vm409 = vcmask 31744
    %s410 = scalar_lea.vmem [#allocation0], 264
    %411 = vst.msk [vmem:[%s410] sm:$0x1] %vm409, %v408
    %s412 = scalar_lea.vmem [#allocation0], 295
    %413 = vst.msk [vmem:[%s412] sm:$0x2] %vm409, %v408
    %s414 = scalar_lea.vmem [#allocation0], 326
    %415 = vst.msk [vmem:[%s414] sm:$0x4] %vm409, %v408
    %s416 = scalar_lea.vmem [#allocation0], 357
    %417 = vst.msk [vmem:[%s416] sm:$0x8] %vm409, %v408
    %s418 = scalar_lea.vmem [#allocation0], 388
    %419 = vst.msk [vmem:[%s418] sm:$0x10] %vm409, %v408
    %s420 = scalar_lea.vmem [#allocation0], 419
    %421 = vst.msk [vmem:[%s420] sm:$0x20] %vm409, %v408
    %s422 = scalar_lea.vmem [#allocation0], 450
    %423 = vst.msk [vmem:[%s422] sm:$0x40] %vm409, %v408
    %s424 = scalar_lea.vmem [#allocation0], 481
    %425 = vst.msk [vmem:[%s424] sm:$0x80] %vm409, %v408
    %s426 = scalar_lea.vmem [#allocation1], 16
    %v427 = vld [vmem:[%s426] sm:$0xff]
    %428 = vrot.lane.b32.xlu0 %v427, 112
    %v429 = vpop.permute.xlu0 %428
    %vm430 = vcmask 31744
    %s431 = scalar_lea.vmem [#allocation0], 520
    %432 = vst.msk [vmem:[%s431] sm:$0x1] %vm430, %v429
    %s433 = scalar_lea.vmem [#allocation0], 551
    %434 = vst.msk [vmem:[%s433] sm:$0x2] %vm430, %v429
    %s435 = scalar_lea.vmem [#allocation0], 582
    %436 = vst.msk [vmem:[%s435] sm:$0x4] %vm430, %v429
    %s437 = scalar_lea.vmem [#allocation0], 613
    %438 = vst.msk [vmem:[%s437] sm:$0x8] %vm430, %v429
    %s439 = scalar_lea.vmem [#allocation0], 644
    %440 = vst.msk [vmem:[%s439] sm:$0x10] %vm430, %v429
    %s441 = scalar_lea.vmem [#allocation0], 675
    %442 = vst.msk [vmem:[%s441] sm:$0x20] %vm430, %v429
    %s443 = scalar_lea.vmem [#allocation0], 706
    %444 = vst.msk [vmem:[%s443] sm:$0x40] %vm430, %v429
    %s445 = scalar_lea.vmem [#allocation0], 737
    %446 = vst.msk [vmem:[%s445] sm:$0x80] %vm430, %v429
    %s447 = scalar_lea.vmem [#allocation1], 24
    %v448 = vld [vmem:[%s447] sm:$0xff]
    %449 = vrot.lane.b32.xlu0 %v448, 112
    %v450 = vpop.permute.xlu0 %449
    %vm451 = vcmask 31744
    %s452 = scalar_lea.vmem [#allocation0], 776
    %453 = vst.msk [vmem:[%s452] sm:$0x1] %vm451, %v450
    %s454 = scalar_lea.vmem [#allocation0], 807
    %455 = vst.msk [vmem:[%s454] sm:$0x2] %vm451, %v450
    %s456 = scalar_lea.vmem [#allocation0], 838
    %457 = vst.msk [vmem:[%s456] sm:$0x4] %vm451, %v450
    %s458 = scalar_lea.vmem [#allocation0], 869
    %459 = vst.msk [vmem:[%s458] sm:$0x8] %vm451, %v450
    %s460 = scalar_lea.vmem [#allocation0], 900
    %461 = vst.msk [vmem:[%s460] sm:$0x10] %vm451, %v450
    %s462 = scalar_lea.vmem [#allocation0], 931
    %463 = vst.msk [vmem:[%s462] sm:$0x20] %vm451, %v450
    %s464 = scalar_lea.vmem [#allocation0], 962
    %465 = vst.msk [vmem:[%s464] sm:$0x40] %vm451, %v450
    %s466 = scalar_lea.vmem [#allocation0], 993
    %467 = vst.msk [vmem:[%s466] sm:$0x80] %vm451, %v450
    %v468 = vld [vmem:[#allocation1] sm:$0xff]
    %469 = vrot.lane.b32.xlu0 %v468, 108
    %v470 = vpop.permute.xlu0 %469
    %vm471 = vcmask 31744
    %s472 = scalar_lea.vmem [#allocation0], 9
    %473 = vst.msk [vmem:[%s472] sm:$0x1] %vm471, %v470
    %s474 = scalar_lea.vmem [#allocation0], 40
    %475 = vst.msk [vmem:[%s474] sm:$0x2] %vm471, %v470
    %s476 = scalar_lea.vmem [#allocation0], 71
    %477 = vst.msk [vmem:[%s476] sm:$0x4] %vm471, %v470
    %s478 = scalar_lea.vmem [#allocation0], 102
    %479 = vst.msk [vmem:[%s478] sm:$0x8] %vm471, %v470
    %s480 = scalar_lea.vmem [#allocation0], 133
    %481 = vst.msk [vmem:[%s480] sm:$0x10] %vm471, %v470
    %s482 = scalar_lea.vmem [#allocation0], 164
    %483 = vst.msk [vmem:[%s482] sm:$0x20] %vm471, %v470
    %s484 = scalar_lea.vmem [#allocation0], 195
    %485 = vst.msk [vmem:[%s484] sm:$0x40] %vm471, %v470
    %s486 = scalar_lea.vmem [#allocation0], 226
    %487 = vst.msk [vmem:[%s486] sm:$0x80] %vm471, %v470
    %s488 = scalar_lea.vmem [#allocation1], 8
    %v489 = vld [vmem:[%s488] sm:$0xff]
    %490 = vrot.lane.b32.xlu0 %v489, 108
    %v491 = vpop.permute.xlu0 %490
    %vm492 = vcmask 31744
    %s493 = scalar_lea.vmem [#allocation0], 265
    %494 = vst.msk [vmem:[%s493] sm:$0x1] %vm492, %v491
    %s495 = scalar_lea.vmem [#allocation0], 296
    %496 = vst.msk [vmem:[%s495] sm:$0x2] %vm492, %v491
    %s497 = scalar_lea.vmem [#allocation0], 327
    %498 = vst.msk [vmem:[%s497] sm:$0x4] %vm492, %v491
    %s499 = scalar_lea.vmem [#allocation0], 358
    %500 = vst.msk [vmem:[%s499] sm:$0x8] %vm492, %v491
    %s501 = scalar_lea.vmem [#allocation0], 389
    %502 = vst.msk [vmem:[%s501] sm:$0x10] %vm492, %v491
    %s503 = scalar_lea.vmem [#allocation0], 420
    %504 = vst.msk [vmem:[%s503] sm:$0x20] %vm492, %v491
    %s505 = scalar_lea.vmem [#allocation0], 451
    %506 = vst.msk [vmem:[%s505] sm:$0x40] %vm492, %v491
    %s507 = scalar_lea.vmem [#allocation0], 482
    %508 = vst.msk [vmem:[%s507] sm:$0x80] %vm492, %v491
    %s509 = scalar_lea.vmem [#allocation1], 16
    %v510 = vld [vmem:[%s509] sm:$0xff]
    %511 = vrot.lane.b32.xlu0 %v510, 108
    %v512 = vpop.permute.xlu0 %511
    %vm513 = vcmask 31744
    %s514 = scalar_lea.vmem [#allocation0], 521
    %515 = vst.msk [vmem:[%s514] sm:$0x1] %vm513, %v512
    %s516 = scalar_lea.vmem [#allocation0], 552
    %517 = vst.msk [vmem:[%s516] sm:$0x2] %vm513, %v512
    %s518 = scalar_lea.vmem [#allocation0], 583
    %519 = vst.msk [vmem:[%s518] sm:$0x4] %vm513, %v512
    %s520 = scalar_lea.vmem [#allocation0], 614
    %521 = vst.msk [vmem:[%s520] sm:$0x8] %vm513, %v512
    %s522 = scalar_lea.vmem [#allocation0], 645
    %523 = vst.msk [vmem:[%s522] sm:$0x10] %vm513, %v512
    %s524 = scalar_lea.vmem [#allocation0], 676
    %525 = vst.msk [vmem:[%s524] sm:$0x20] %vm513, %v512
    %s526 = scalar_lea.vmem [#allocation0], 707
    %527 = vst.msk [vmem:[%s526] sm:$0x40] %vm513, %v512
    %s528 = scalar_lea.vmem [#allocation0], 738
    %529 = vst.msk [vmem:[%s528] sm:$0x80] %vm513, %v512
    %s530 = scalar_lea.vmem [#allocation1], 24
    %v531 = vld [vmem:[%s530] sm:$0xff]
    %532 = vrot.lane.b32.xlu0 %v531, 108
    %v533 = vpop.permute.xlu0 %532
    %vm534 = vcmask 31744
    %s535 = scalar_lea.vmem [#allocation0], 777
    %536 = vst.msk [vmem:[%s535] sm:$0x1] %vm534, %v533
    %s537 = scalar_lea.vmem [#allocation0], 808
    %538 = vst.msk [vmem:[%s537] sm:$0x2] %vm534, %v533
    %s539 = scalar_lea.vmem [#allocation0], 839
    %540 = vst.msk [vmem:[%s539] sm:$0x4] %vm534, %v533
    %s541 = scalar_lea.vmem [#allocation0], 870
    %542 = vst.msk [vmem:[%s541] sm:$0x8] %vm534, %v533
    %s543 = scalar_lea.vmem [#allocation0], 901
    %544 = vst.msk [vmem:[%s543] sm:$0x10] %vm534, %v533
    %s545 = scalar_lea.vmem [#allocation0], 932
    %546 = vst.msk [vmem:[%s545] sm:$0x20] %vm534, %v533
    %s547 = scalar_lea.vmem [#allocation0], 963
    %548 = vst.msk [vmem:[%s547] sm:$0x40] %vm534, %v533
    %s549 = scalar_lea.vmem [#allocation0], 994
    %550 = vst.msk [vmem:[%s549] sm:$0x80] %vm534, %v533
    %v551 = vld [vmem:[#allocation1] sm:$0xff]
    %552 = vrot.lane.b32.xlu0 %v551, 104
    %v553 = vpop.permute.xlu0 %552
    %vm554 = vcmask 31744
    %s555 = scalar_lea.vmem [#allocation0], 10
    %556 = vst.msk [vmem:[%s555] sm:$0x1] %vm554, %v553
    %s557 = scalar_lea.vmem [#allocation0], 41
    %558 = vst.msk [vmem:[%s557] sm:$0x2] %vm554, %v553
    %s559 = scalar_lea.vmem [#allocation0], 72
    %560 = vst.msk [vmem:[%s559] sm:$0x4] %vm554, %v553
    %s561 = scalar_lea.vmem [#allocation0], 103
    %562 = vst.msk [vmem:[%s561] sm:$0x8] %vm554, %v553
    %s563 = scalar_lea.vmem [#allocation0], 134
    %564 = vst.msk [vmem:[%s563] sm:$0x10] %vm554, %v553
    %s565 = scalar_lea.vmem [#allocation0], 165
    %566 = vst.msk [vmem:[%s565] sm:$0x20] %vm554, %v553
    %s567 = scalar_lea.vmem [#allocation0], 196
    %568 = vst.msk [vmem:[%s567] sm:$0x40] %vm554, %v553
    %s569 = scalar_lea.vmem [#allocation0], 227
    %570 = vst.msk [vmem:[%s569] sm:$0x80] %vm554, %v553
    %s571 = scalar_lea.vmem [#allocation1], 8
    %v572 = vld [vmem:[%s571] sm:$0xff]
    %573 = vrot.lane.b32.xlu0 %v572, 104
    %v574 = vpop.permute.xlu0 %573
    %vm575 = vcmask 31744
    %s576 = scalar_lea.vmem [#allocation0], 266
    %577 = vst.msk [vmem:[%s576] sm:$0x1] %vm575, %v574
    %s578 = scalar_lea.vmem [#allocation0], 297
    %579 = vst.msk [vmem:[%s578] sm:$0x2] %vm575, %v574
    %s580 = scalar_lea.vmem [#allocation0], 328
    %581 = vst.msk [vmem:[%s580] sm:$0x4] %vm575, %v574
    %s582 = scalar_lea.vmem [#allocation0], 359
    %583 = vst.msk [vmem:[%s582] sm:$0x8] %vm575, %v574
    %s584 = scalar_lea.vmem [#allocation0], 390
    %585 = vst.msk [vmem:[%s584] sm:$0x10] %vm575, %v574
    %s586 = scalar_lea.vmem [#allocation0], 421
    %587 = vst.msk [vmem:[%s586] sm:$0x20] %vm575, %v574
    %s588 = scalar_lea.vmem [#allocation0], 452
    %589 = vst.msk [vmem:[%s588] sm:$0x40] %vm575, %v574
    %s590 = scalar_lea.vmem [#allocation0], 483
    %591 = vst.msk [vmem:[%s590] sm:$0x80] %vm575, %v574
    %s592 = scalar_lea.vmem [#allocation1], 16
    %v593 = vld [vmem:[%s592] sm:$0xff]
    %594 = vrot.lane.b32.xlu0 %v593, 104
    %v595 = vpop.permute.xlu0 %594
    %vm596 = vcmask 31744
    %s597 = scalar_lea.vmem [#allocation0], 522
    %598 = vst.msk [vmem:[%s597] sm:$0x1] %vm596, %v595
    %s599 = scalar_lea.vmem [#allocation0], 553
    %600 = vst.msk [vmem:[%s599] sm:$0x2] %vm596, %v595
    %s601 = scalar_lea.vmem [#allocation0], 584
    %602 = vst.msk [vmem:[%s601] sm:$0x4] %vm596, %v595
    %s603 = scalar_lea.vmem [#allocation0], 615
    %604 = vst.msk [vmem:[%s603] sm:$0x8] %vm596, %v595
    %s605 = scalar_lea.vmem [#allocation0], 646
    %606 = vst.msk [vmem:[%s605] sm:$0x10] %vm596, %v595
    %s607 = scalar_lea.vmem [#allocation0], 677
    %608 = vst.msk [vmem:[%s607] sm:$0x20] %vm596, %v595
    %s609 = scalar_lea.vmem [#allocation0], 708
    %610 = vst.msk [vmem:[%s609] sm:$0x40] %vm596, %v595
    %s611 = scalar_lea.vmem [#allocation0], 739
    %612 = vst.msk [vmem:[%s611] sm:$0x80] %vm596, %v595
    %s613 = scalar_lea.vmem [#allocation1], 24
    %v614 = vld [vmem:[%s613] sm:$0xff]
    %615 = vrot.lane.b32.xlu0 %v614, 104
    %v616 = vpop.permute.xlu0 %615
    %vm617 = vcmask 31744
    %s618 = scalar_lea.vmem [#allocation0], 778
    %619 = vst.msk [vmem:[%s618] sm:$0x1] %vm617, %v616
    %s620 = scalar_lea.vmem [#allocation0], 809
    %621 = vst.msk [vmem:[%s620] sm:$0x2] %vm617, %v616
    %s622 = scalar_lea.vmem [#allocation0], 840
    %623 = vst.msk [vmem:[%s622] sm:$0x4] %vm617, %v616
    %s624 = scalar_lea.vmem [#allocation0], 871
    %625 = vst.msk [vmem:[%s624] sm:$0x8] %vm617, %v616
    %s626 = scalar_lea.vmem [#allocation0], 902
    %627 = vst.msk [vmem:[%s626] sm:$0x10] %vm617, %v616
    %s628 = scalar_lea.vmem [#allocation0], 933
    %629 = vst.msk [vmem:[%s628] sm:$0x20] %vm617, %v616
    %s630 = scalar_lea.vmem [#allocation0], 964
    %631 = vst.msk [vmem:[%s630] sm:$0x40] %vm617, %v616
    %s632 = scalar_lea.vmem [#allocation0], 995
    %633 = vst.msk [vmem:[%s632] sm:$0x80] %vm617, %v616
    %v634 = vld [vmem:[#allocation1] sm:$0xff]
    %635 = vrot.lane.b32.xlu0 %v634, 100
    %v636 = vpop.permute.xlu0 %635
    %vm637 = vcmask 31744
    %s638 = scalar_lea.vmem [#allocation0], 11
    %639 = vst.msk [vmem:[%s638] sm:$0x1] %vm637, %v636
    %s640 = scalar_lea.vmem [#allocation0], 42
    %641 = vst.msk [vmem:[%s640] sm:$0x2] %vm637, %v636
    %s642 = scalar_lea.vmem [#allocation0], 73
    %643 = vst.msk [vmem:[%s642] sm:$0x4] %vm637, %v636
    %s644 = scalar_lea.vmem [#allocation0], 104
    %645 = vst.msk [vmem:[%s644] sm:$0x8] %vm637, %v636
    %s646 = scalar_lea.vmem [#allocation0], 135
    %647 = vst.msk [vmem:[%s646] sm:$0x10] %vm637, %v636
    %s648 = scalar_lea.vmem [#allocation0], 166
    %649 = vst.msk [vmem:[%s648] sm:$0x20] %vm637, %v636
    %s650 = scalar_lea.vmem [#allocation0], 197
    %651 = vst.msk [vmem:[%s650] sm:$0x40] %vm637, %v636
    %s652 = scalar_lea.vmem [#allocation0], 228
    %653 = vst.msk [vmem:[%s652] sm:$0x80] %vm637, %v636
    %s654 = scalar_lea.vmem [#allocation1], 8
    %v655 = vld [vmem:[%s654] sm:$0xff]
    %656 = vrot.lane.b32.xlu0 %v655, 100
    %v657 = vpop.permute.xlu0 %656
    %vm658 = vcmask 31744
    %s659 = scalar_lea.vmem [#allocation0], 267
    %660 = vst.msk [vmem:[%s659] sm:$0x1] %vm658, %v657
    %s661 = scalar_lea.vmem [#allocation0], 298
    %662 = vst.msk [vmem:[%s661] sm:$0x2] %vm658, %v657
    %s663 = scalar_lea.vmem [#allocation0], 329
    %664 = vst.msk [vmem:[%s663] sm:$0x4] %vm658, %v657
    %s665 = scalar_lea.vmem [#allocation0], 360
    %666 = vst.msk [vmem:[%s665] sm:$0x8] %vm658, %v657
    %s667 = scalar_lea.vmem [#allocation0], 391
    %668 = vst.msk [vmem:[%s667] sm:$0x10] %vm658, %v657
    %s669 = scalar_lea.vmem [#allocation0], 422
    %670 = vst.msk [vmem:[%s669] sm:$0x20] %vm658, %v657
    %s671 = scalar_lea.vmem [#allocation0], 453
    %672 = vst.msk [vmem:[%s671] sm:$0x40] %vm658, %v657
    %s673 = scalar_lea.vmem [#allocation0], 484
    %674 = vst.msk [vmem:[%s673] sm:$0x80] %vm658, %v657
    %s675 = scalar_lea.vmem [#allocation1], 16
    %v676 = vld [vmem:[%s675] sm:$0xff]
    %677 = vrot.lane.b32.xlu0 %v676, 100
    %v678 = vpop.permute.xlu0 %677
    %vm679 = vcmask 31744
    %s680 = scalar_lea.vmem [#allocation0], 523
    %681 = vst.msk [vmem:[%s680] sm:$0x1] %vm679, %v678
    %s682 = scalar_lea.vmem [#allocation0], 554
    %683 = vst.msk [vmem:[%s682] sm:$0x2] %vm679, %v678
    %s684 = scalar_lea.vmem [#allocation0], 585
    %685 = vst.msk [vmem:[%s684] sm:$0x4] %vm679, %v678
    %s686 = scalar_lea.vmem [#allocation0], 616
    %687 = vst.msk [vmem:[%s686] sm:$0x8] %vm679, %v678
    %s688 = scalar_lea.vmem [#allocation0], 647
    %689 = vst.msk [vmem:[%s688] sm:$0x10] %vm679, %v678
    %s690 = scalar_lea.vmem [#allocation0], 678
    %691 = vst.msk [vmem:[%s690] sm:$0x20] %vm679, %v678
    %s692 = scalar_lea.vmem [#allocation0], 709
    %693 = vst.msk [vmem:[%s692] sm:$0x40] %vm679, %v678
    %s694 = scalar_lea.vmem [#allocation0], 740
    %695 = vst.msk [vmem:[%s694] sm:$0x80] %vm679, %v678
    %s696 = scalar_lea.vmem [#allocation1], 24
    %v697 = vld [vmem:[%s696] sm:$0xff]
    %698 = vrot.lane.b32.xlu0 %v697, 100
    %v699 = vpop.permute.xlu0 %698
    %vm700 = vcmask 31744
    %s701 = scalar_lea.vmem [#allocation0], 779
    %702 = vst.msk [vmem:[%s701] sm:$0x1] %vm700, %v699
    %s703 = scalar_lea.vmem [#allocation0], 810
    %704 = vst.msk [vmem:[%s703] sm:$0x2] %vm700, %v699
    %s705 = scalar_lea.vmem [#allocation0], 841
    %706 = vst.msk [vmem:[%s705] sm:$0x4] %vm700, %v699
    %s707 = scalar_lea.vmem [#allocation0], 872
    %708 = vst.msk [vmem:[%s707] sm:$0x8] %vm700, %v699
    %s709 = scalar_lea.vmem [#allocation0], 903
    %710 = vst.msk [vmem:[%s709] sm:$0x10] %vm700, %v699
    %s711 = scalar_lea.vmem [#allocation0], 934
    %712 = vst.msk [vmem:[%s711] sm:$0x20] %vm700, %v699
    %s713 = scalar_lea.vmem [#allocation0], 965
    %714 = vst.msk [vmem:[%s713] sm:$0x40] %vm700, %v699
    %s715 = scalar_lea.vmem [#allocation0], 996
    %716 = vst.msk [vmem:[%s715] sm:$0x80] %vm700, %v699
    %v717 = vld [vmem:[#allocation1] sm:$0xff]
    %718 = vrot.lane.b32.xlu0 %v717, 96
    %v719 = vpop.permute.xlu0 %718
    %vm720 = vcmask 31744
    %s721 = scalar_lea.vmem [#allocation0], 16
    %722 = vst.msk [vmem:[%s721] sm:$0x1] %vm720, %v719
    %s723 = scalar_lea.vmem [#allocation0], 47
    %724 = vst.msk [vmem:[%s723] sm:$0x2] %vm720, %v719
    %s725 = scalar_lea.vmem [#allocation0], 78
    %726 = vst.msk [vmem:[%s725] sm:$0x4] %vm720, %v719
    %s727 = scalar_lea.vmem [#allocation0], 109
    %728 = vst.msk [vmem:[%s727] sm:$0x8] %vm720, %v719
    %s729 = scalar_lea.vmem [#allocation0], 140
    %730 = vst.msk [vmem:[%s729] sm:$0x10] %vm720, %v719
    %s731 = scalar_lea.vmem [#allocation0], 171
    %732 = vst.msk [vmem:[%s731] sm:$0x20] %vm720, %v719
    %s733 = scalar_lea.vmem [#allocation0], 202
    %734 = vst.msk [vmem:[%s733] sm:$0x40] %vm720, %v719
    %s735 = scalar_lea.vmem [#allocation0], 233
    %736 = vst.msk [vmem:[%s735] sm:$0x80] %vm720, %v719
    %s737 = scalar_lea.vmem [#allocation1], 8
    %v738 = vld [vmem:[%s737] sm:$0xff]
    %739 = vrot.lane.b32.xlu0 %v738, 96
    %v740 = vpop.permute.xlu0 %739
    %vm741 = vcmask 31744
    %s742 = scalar_lea.vmem [#allocation0], 272
    %743 = vst.msk [vmem:[%s742] sm:$0x1] %vm741, %v740
    %s744 = scalar_lea.vmem [#allocation0], 303
    %745 = vst.msk [vmem:[%s744] sm:$0x2] %vm741, %v740
    %s746 = scalar_lea.vmem [#allocation0], 334
    %747 = vst.msk [vmem:[%s746] sm:$0x4] %vm741, %v740
    %s748 = scalar_lea.vmem [#allocation0], 365
    %749 = vst.msk [vmem:[%s748] sm:$0x8] %vm741, %v740
    %s750 = scalar_lea.vmem [#allocation0], 396
    %751 = vst.msk [vmem:[%s750] sm:$0x10] %vm741, %v740
    %s752 = scalar_lea.vmem [#allocation0], 427
    %753 = vst.msk [vmem:[%s752] sm:$0x20] %vm741, %v740
    %s754 = scalar_lea.vmem [#allocation0], 458
    %755 = vst.msk [vmem:[%s754] sm:$0x40] %vm741, %v740
    %s756 = scalar_lea.vmem [#allocation0], 489
    %757 = vst.msk [vmem:[%s756] sm:$0x80] %vm741, %v740
    %s758 = scalar_lea.vmem [#allocation1], 16
    %v759 = vld [vmem:[%s758] sm:$0xff]
    %760 = vrot.lane.b32.xlu0 %v759, 96
    %v761 = vpop.permute.xlu0 %760
    %vm762 = vcmask 31744
    %s763 = scalar_lea.vmem [#allocation0], 528
    %764 = vst.msk [vmem:[%s763] sm:$0x1] %vm762, %v761
    %s765 = scalar_lea.vmem [#allocation0], 559
    %766 = vst.msk [vmem:[%s765] sm:$0x2] %vm762, %v761
    %s767 = scalar_lea.vmem [#allocation0], 590
    %768 = vst.msk [vmem:[%s767] sm:$0x4] %vm762, %v761
    %s769 = scalar_lea.vmem [#allocation0], 621
    %770 = vst.msk [vmem:[%s769] sm:$0x8] %vm762, %v761
    %s771 = scalar_lea.vmem [#allocation0], 652
    %772 = vst.msk [vmem:[%s771] sm:$0x10] %vm762, %v761
    %s773 = scalar_lea.vmem [#allocation0], 683
    %774 = vst.msk [vmem:[%s773] sm:$0x20] %vm762, %v761
    %s775 = scalar_lea.vmem [#allocation0], 714
    %776 = vst.msk [vmem:[%s775] sm:$0x40] %vm762, %v761
    %s777 = scalar_lea.vmem [#allocation0], 745
    %778 = vst.msk [vmem:[%s777] sm:$0x80] %vm762, %v761
    %s779 = scalar_lea.vmem [#allocation1], 24
    %v780 = vld [vmem:[%s779] sm:$0xff]
    %781 = vrot.lane.b32.xlu0 %v780, 96
    %v782 = vpop.permute.xlu0 %781
    %vm783 = vcmask 31744
    %s784 = scalar_lea.vmem [#allocation0], 784
    %785 = vst.msk [vmem:[%s784] sm:$0x1] %vm783, %v782
    %s786 = scalar_lea.vmem [#allocation0], 815
    %787 = vst.msk [vmem:[%s786] sm:$0x2] %vm783, %v782
    %s788 = scalar_lea.vmem [#allocation0], 846
    %789 = vst.msk [vmem:[%s788] sm:$0x4] %vm783, %v782
    %s790 = scalar_lea.vmem [#allocation0], 877
    %791 = vst.msk [vmem:[%s790] sm:$0x8] %vm783, %v782
    %s792 = scalar_lea.vmem [#allocation0], 908
    %793 = vst.msk [vmem:[%s792] sm:$0x10] %vm783, %v782
    %s794 = scalar_lea.vmem [#allocation0], 939
    %795 = vst.msk [vmem:[%s794] sm:$0x20] %vm783, %v782
    %s796 = scalar_lea.vmem [#allocation0], 970
    %797 = vst.msk [vmem:[%s796] sm:$0x40] %vm783, %v782
    %s798 = scalar_lea.vmem [#allocation0], 1001
    %799 = vst.msk [vmem:[%s798] sm:$0x80] %vm783, %v782
    %v800 = vld [vmem:[#allocation1] sm:$0xff]
    %801 = vrot.lane.b32.xlu0 %v800, 92
    %v802 = vpop.permute.xlu0 %801
    %vm803 = vcmask 31744
    %s804 = scalar_lea.vmem [#allocation0], 17
    %805 = vst.msk [vmem:[%s804] sm:$0x1] %vm803, %v802
    %s806 = scalar_lea.vmem [#allocation0], 48
    %807 = vst.msk [vmem:[%s806] sm:$0x2] %vm803, %v802
    %s808 = scalar_lea.vmem [#allocation0], 79
    %809 = vst.msk [vmem:[%s808] sm:$0x4] %vm803, %v802
    %s810 = scalar_lea.vmem [#allocation0], 110
    %811 = vst.msk [vmem:[%s810] sm:$0x8] %vm803, %v802
    %s812 = scalar_lea.vmem [#allocation0], 141
    %813 = vst.msk [vmem:[%s812] sm:$0x10] %vm803, %v802
    %s814 = scalar_lea.vmem [#allocation0], 172
    %815 = vst.msk [vmem:[%s814] sm:$0x20] %vm803, %v802
    %s816 = scalar_lea.vmem [#allocation0], 203
    %817 = vst.msk [vmem:[%s816] sm:$0x40] %vm803, %v802
    %s818 = scalar_lea.vmem [#allocation0], 234
    %819 = vst.msk [vmem:[%s818] sm:$0x80] %vm803, %v802
    %s820 = scalar_lea.vmem [#allocation1], 8
    %v821 = vld [vmem:[%s820] sm:$0xff]
    %822 = vrot.lane.b32.xlu0 %v821, 92
    %v823 = vpop.permute.xlu0 %822
    %vm824 = vcmask 31744
    %s825 = scalar_lea.vmem [#allocation0], 273
    %826 = vst.msk [vmem:[%s825] sm:$0x1] %vm824, %v823
    %s827 = scalar_lea.vmem [#allocation0], 304
    %828 = vst.msk [vmem:[%s827] sm:$0x2] %vm824, %v823
    %s829 = scalar_lea.vmem [#allocation0], 335
    %830 = vst.msk [vmem:[%s829] sm:$0x4] %vm824, %v823
    %s831 = scalar_lea.vmem [#allocation0], 366
    %832 = vst.msk [vmem:[%s831] sm:$0x8] %vm824, %v823
    %s833 = scalar_lea.vmem [#allocation0], 397
    %834 = vst.msk [vmem:[%s833] sm:$0x10] %vm824, %v823
    %s835 = scalar_lea.vmem [#allocation0], 428
    %836 = vst.msk [vmem:[%s835] sm:$0x20] %vm824, %v823
    %s837 = scalar_lea.vmem [#allocation0], 459
    %838 = vst.msk [vmem:[%s837] sm:$0x40] %vm824, %v823
    %s839 = scalar_lea.vmem [#allocation0], 490
    %840 = vst.msk [vmem:[%s839] sm:$0x80] %vm824, %v823
    %s841 = scalar_lea.vmem [#allocation1], 16
    %v842 = vld [vmem:[%s841] sm:$0xff]
    %843 = vrot.lane.b32.xlu0 %v842, 92
    %v844 = vpop.permute.xlu0 %843
    %vm845 = vcmask 31744
    %s846 = scalar_lea.vmem [#allocation0], 529
    %847 = vst.msk [vmem:[%s846] sm:$0x1] %vm845, %v844
    %s848 = scalar_lea.vmem [#allocation0], 560
    %849 = vst.msk [vmem:[%s848] sm:$0x2] %vm845, %v844
    %s850 = scalar_lea.vmem [#allocation0], 591
    %851 = vst.msk [vmem:[%s850] sm:$0x4] %vm845, %v844
    %s852 = scalar_lea.vmem [#allocation0], 622
    %853 = vst.msk [vmem:[%s852] sm:$0x8] %vm845, %v844
    %s854 = scalar_lea.vmem [#allocation0], 653
    %855 = vst.msk [vmem:[%s854] sm:$0x10] %vm845, %v844
    %s856 = scalar_lea.vmem [#allocation0], 684
    %857 = vst.msk [vmem:[%s856] sm:$0x20] %vm845, %v844
    %s858 = scalar_lea.vmem [#allocation0], 715
    %859 = vst.msk [vmem:[%s858] sm:$0x40] %vm845, %v844
    %s860 = scalar_lea.vmem [#allocation0], 746
    %861 = vst.msk [vmem:[%s860] sm:$0x80] %vm845, %v844
    %s862 = scalar_lea.vmem [#allocation1], 24
    %v863 = vld [vmem:[%s862] sm:$0xff]
    %864 = vrot.lane.b32.xlu0 %v863, 92
    %v865 = vpop.permute.xlu0 %864
    %vm866 = vcmask 31744
    %s867 = scalar_lea.vmem [#allocation0], 785
    %868 = vst.msk [vmem:[%s867] sm:$0x1] %vm866, %v865
    %s869 = scalar_lea.vmem [#allocation0], 816
    %870 = vst.msk [vmem:[%s869] sm:$0x2] %vm866, %v865
    %s871 = scalar_lea.vmem [#allocation0], 847
    %872 = vst.msk [vmem:[%s871] sm:$0x4] %vm866, %v865
    %s873 = scalar_lea.vmem [#allocation0], 878
    %874 = vst.msk [vmem:[%s873] sm:$0x8] %vm866, %v865
    %s875 = scalar_lea.vmem [#allocation0], 909
    %876 = vst.msk [vmem:[%s875] sm:$0x10] %vm866, %v865
    %s877 = scalar_lea.vmem [#allocation0], 940
    %878 = vst.msk [vmem:[%s877] sm:$0x20] %vm866, %v865
    %s879 = scalar_lea.vmem [#allocation0], 971
    %880 = vst.msk [vmem:[%s879] sm:$0x40] %vm866, %v865
    %s881 = scalar_lea.vmem [#allocation0], 1002
    %882 = vst.msk [vmem:[%s881] sm:$0x80] %vm866, %v865
    %v883 = vld [vmem:[#allocation1] sm:$0xff]
    %884 = vrot.lane.b32.xlu0 %v883, 88
    %v885 = vpop.permute.xlu0 %884
    %vm886 = vcmask 31744
    %s887 = scalar_lea.vmem [#allocation0], 18
    %888 = vst.msk [vmem:[%s887] sm:$0x1] %vm886, %v885
    %s889 = scalar_lea.vmem [#allocation0], 49
    %890 = vst.msk [vmem:[%s889] sm:$0x2] %vm886, %v885
    %s891 = scalar_lea.vmem [#allocation0], 80
    %892 = vst.msk [vmem:[%s891] sm:$0x4] %vm886, %v885
    %s893 = scalar_lea.vmem [#allocation0], 111
    %894 = vst.msk [vmem:[%s893] sm:$0x8] %vm886, %v885
    %s895 = scalar_lea.vmem [#allocation0], 142
    %896 = vst.msk [vmem:[%s895] sm:$0x10] %vm886, %v885
    %s897 = scalar_lea.vmem [#allocation0], 173
    %898 = vst.msk [vmem:[%s897] sm:$0x20] %vm886, %v885
    %s899 = scalar_lea.vmem [#allocation0], 204
    %900 = vst.msk [vmem:[%s899] sm:$0x40] %vm886, %v885
    %s901 = scalar_lea.vmem [#allocation0], 235
    %902 = vst.msk [vmem:[%s901] sm:$0x80] %vm886, %v885
    %s903 = scalar_lea.vmem [#allocation1], 8
    %v904 = vld [vmem:[%s903] sm:$0xff]
    %905 = vrot.lane.b32.xlu0 %v904, 88
    %v906 = vpop.permute.xlu0 %905
    %vm907 = vcmask 31744
    %s908 = scalar_lea.vmem [#allocation0], 274
    %909 = vst.msk [vmem:[%s908] sm:$0x1] %vm907, %v906
    %s910 = scalar_lea.vmem [#allocation0], 305
    %911 = vst.msk [vmem:[%s910] sm:$0x2] %vm907, %v906
    %s912 = scalar_lea.vmem [#allocation0], 336
    %913 = vst.msk [vmem:[%s912] sm:$0x4] %vm907, %v906
    %s914 = scalar_lea.vmem [#allocation0], 367
    %915 = vst.msk [vmem:[%s914] sm:$0x8] %vm907, %v906
    %s916 = scalar_lea.vmem [#allocation0], 398
    %917 = vst.msk [vmem:[%s916] sm:$0x10] %vm907, %v906
    %s918 = scalar_lea.vmem [#allocation0], 429
    %919 = vst.msk [vmem:[%s918] sm:$0x20] %vm907, %v906
    %s920 = scalar_lea.vmem [#allocation0], 460
    %921 = vst.msk [vmem:[%s920] sm:$0x40] %vm907, %v906
    %s922 = scalar_lea.vmem [#allocation0], 491
    %923 = vst.msk [vmem:[%s922] sm:$0x80] %vm907, %v906
    %s924 = scalar_lea.vmem [#allocation1], 16
    %v925 = vld [vmem:[%s924] sm:$0xff]
    %926 = vrot.lane.b32.xlu0 %v925, 88
    %v927 = vpop.permute.xlu0 %926
    %vm928 = vcmask 31744
    %s929 = scalar_lea.vmem [#allocation0], 530
    %930 = vst.msk [vmem:[%s929] sm:$0x1] %vm928, %v927
    %s931 = scalar_lea.vmem [#allocation0], 561
    %932 = vst.msk [vmem:[%s931] sm:$0x2] %vm928, %v927
    %s933 = scalar_lea.vmem [#allocation0], 592
    %934 = vst.msk [vmem:[%s933] sm:$0x4] %vm928, %v927
    %s935 = scalar_lea.vmem [#allocation0], 623
    %936 = vst.msk [vmem:[%s935] sm:$0x8] %vm928, %v927
    %s937 = scalar_lea.vmem [#allocation0], 654
    %938 = vst.msk [vmem:[%s937] sm:$0x10] %vm928, %v927
    %s939 = scalar_lea.vmem [#allocation0], 685
    %940 = vst.msk [vmem:[%s939] sm:$0x20] %vm928, %v927
    %s941 = scalar_lea.vmem [#allocation0], 716
    %942 = vst.msk [vmem:[%s941] sm:$0x40] %vm928, %v927
    %s943 = scalar_lea.vmem [#allocation0], 747
    %944 = vst.msk [vmem:[%s943] sm:$0x80] %vm928, %v927
    %s945 = scalar_lea.vmem [#allocation1], 24
    %v946 = vld [vmem:[%s945] sm:$0xff]
    %947 = vrot.lane.b32.xlu0 %v946, 88
    %v948 = vpop.permute.xlu0 %947
    %vm949 = vcmask 31744
    %s950 = scalar_lea.vmem [#allocation0], 786
    %951 = vst.msk [vmem:[%s950] sm:$0x1] %vm949, %v948
    %s952 = scalar_lea.vmem [#allocation0], 817
    %953 = vst.msk [vmem:[%s952] sm:$0x2] %vm949, %v948
    %s954 = scalar_lea.vmem [#allocation0], 848
    %955 = vst.msk [vmem:[%s954] sm:$0x4] %vm949, %v948
    %s956 = scalar_lea.vmem [#allocation0], 879
    %957 = vst.msk [vmem:[%s956] sm:$0x8] %vm949, %v948
    %s958 = scalar_lea.vmem [#allocation0], 910
    %959 = vst.msk [vmem:[%s958] sm:$0x10] %vm949, %v948
    %s960 = scalar_lea.vmem [#allocation0], 941
    %961 = vst.msk [vmem:[%s960] sm:$0x20] %vm949, %v948
    %s962 = scalar_lea.vmem [#allocation0], 972
    %963 = vst.msk [vmem:[%s962] sm:$0x40] %vm949, %v948
    %s964 = scalar_lea.vmem [#allocation0], 1003
    %965 = vst.msk [vmem:[%s964] sm:$0x80] %vm949, %v948
    %v966 = vld [vmem:[#allocation1] sm:$0xff]
    %967 = vrot.lane.b32.xlu0 %v966, 84
    %v968 = vpop.permute.xlu0 %967
    %vm969 = vcmask 31744
    %s970 = scalar_lea.vmem [#allocation0], 19
    %971 = vst.msk [vmem:[%s970] sm:$0x1] %vm969, %v968
    %s972 = scalar_lea.vmem [#allocation0], 50
    %973 = vst.msk [vmem:[%s972] sm:$0x2] %vm969, %v968
    %s974 = scalar_lea.vmem [#allocation0], 81
    %975 = vst.msk [vmem:[%s974] sm:$0x4] %vm969, %v968
    %s976 = scalar_lea.vmem [#allocation0], 112
    %977 = vst.msk [vmem:[%s976] sm:$0x8] %vm969, %v968
    %s978 = scalar_lea.vmem [#allocation0], 143
    %979 = vst.msk [vmem:[%s978] sm:$0x10] %vm969, %v968
    %s980 = scalar_lea.vmem [#allocation0], 174
    %981 = vst.msk [vmem:[%s980] sm:$0x20] %vm969, %v968
    %s982 = scalar_lea.vmem [#allocation0], 205
    %983 = vst.msk [vmem:[%s982] sm:$0x40] %vm969, %v968
    %s984 = scalar_lea.vmem [#allocation0], 236
    %985 = vst.msk [vmem:[%s984] sm:$0x80] %vm969, %v968
    %s986 = scalar_lea.vmem [#allocation1], 8
    %v987 = vld [vmem:[%s986] sm:$0xff]
    %988 = vrot.lane.b32.xlu0 %v987, 84
    %v989 = vpop.permute.xlu0 %988
    %vm990 = vcmask 31744
    %s991 = scalar_lea.vmem [#allocation0], 275
    %992 = vst.msk [vmem:[%s991] sm:$0x1] %vm990, %v989
    %s993 = scalar_lea.vmem [#allocation0], 306
    %994 = vst.msk [vmem:[%s993] sm:$0x2] %vm990, %v989
    %s995 = scalar_lea.vmem [#allocation0], 337
    %996 = vst.msk [vmem:[%s995] sm:$0x4] %vm990, %v989
    %s997 = scalar_lea.vmem [#allocation0], 368
    %998 = vst.msk [vmem:[%s997] sm:$0x8] %vm990, %v989
    %s999 = scalar_lea.vmem [#allocation0], 399
    %1000 = vst.msk [vmem:[%s999] sm:$0x10] %vm990, %v989
    %s1001 = scalar_lea.vmem [#allocation0], 430
    %1002 = vst.msk [vmem:[%s1001] sm:$0x20] %vm990, %v989
    %s1003 = scalar_lea.vmem [#allocation0], 461
    %1004 = vst.msk [vmem:[%s1003] sm:$0x40] %vm990, %v989
    %s1005 = scalar_lea.vmem [#allocation0], 492
    %1006 = vst.msk [vmem:[%s1005] sm:$0x80] %vm990, %v989
    %s1007 = scalar_lea.vmem [#allocation1], 16
    %v1008 = vld [vmem:[%s1007] sm:$0xff]
    %1009 = vrot.lane.b32.xlu0 %v1008, 84
    %v1010 = vpop.permute.xlu0 %1009
    %vm1011 = vcmask 31744
    %s1012 = scalar_lea.vmem [#allocation0], 531
    %1013 = vst.msk [vmem:[%s1012] sm:$0x1] %vm1011, %v1010
    %s1014 = scalar_lea.vmem [#allocation0], 562
    %1015 = vst.msk [vmem:[%s1014] sm:$0x2] %vm1011, %v1010
    %s1016 = scalar_lea.vmem [#allocation0], 593
    %1017 = vst.msk [vmem:[%s1016] sm:$0x4] %vm1011, %v1010
    %s1018 = scalar_lea.vmem [#allocation0], 624
    %1019 = vst.msk [vmem:[%s1018] sm:$0x8] %vm1011, %v1010
    %s1020 = scalar_lea.vmem [#allocation0], 655
    %1021 = vst.msk [vmem:[%s1020] sm:$0x10] %vm1011, %v1010
    %s1022 = scalar_lea.vmem [#allocation0], 686
    %1023 = vst.msk [vmem:[%s1022] sm:$0x20] %vm1011, %v1010
    %s1024 = scalar_lea.vmem [#allocation0], 717
    %1025 = vst.msk [vmem:[%s1024] sm:$0x40] %vm1011, %v1010
    %s1026 = scalar_lea.vmem [#allocation0], 748
    %1027 = vst.msk [vmem:[%s1026] sm:$0x80] %vm1011, %v1010
    %s1028 = scalar_lea.vmem [#allocation1], 24
    %v1029 = vld [vmem:[%s1028] sm:$0xff]
    %1030 = vrot.lane.b32.xlu0 %v1029, 84
    %v1031 = vpop.permute.xlu0 %1030
    %vm1032 = vcmask 31744
    %s1033 = scalar_lea.vmem [#allocation0], 787
    %1034 = vst.msk [vmem:[%s1033] sm:$0x1] %vm1032, %v1031
    %s1035 = scalar_lea.vmem [#allocation0], 818
    %1036 = vst.msk [vmem:[%s1035] sm:$0x2] %vm1032, %v1031
    %s1037 = scalar_lea.vmem [#allocation0], 849
    %1038 = vst.msk [vmem:[%s1037] sm:$0x4] %vm1032, %v1031
    %s1039 = scalar_lea.vmem [#allocation0], 880
    %1040 = vst.msk [vmem:[%s1039] sm:$0x8] %vm1032, %v1031
    %s1041 = scalar_lea.vmem [#allocation0], 911
    %1042 = vst.msk [vmem:[%s1041] sm:$0x10] %vm1032, %v1031
    %s1043 = scalar_lea.vmem [#allocation0], 942
    %1044 = vst.msk [vmem:[%s1043] sm:$0x20] %vm1032, %v1031
    %s1045 = scalar_lea.vmem [#allocation0], 973
    %1046 = vst.msk [vmem:[%s1045] sm:$0x40] %vm1032, %v1031
    %s1047 = scalar_lea.vmem [#allocation0], 1004
    %1048 = vst.msk [vmem:[%s1047] sm:$0x80] %vm1032, %v1031
    %v1049 = vld [vmem:[#allocation1] sm:$0xff]
    %1050 = vrot.lane.b32.xlu0 %v1049, 80
    %v1051 = vpop.permute.xlu0 %1050
    %vm1052 = vcmask 31744
    %s1053 = scalar_lea.vmem [#allocation0], 24
    %1054 = vst.msk [vmem:[%s1053] sm:$0x1] %vm1052, %v1051
    %s1055 = scalar_lea.vmem [#allocation0], 55
    %1056 = vst.msk [vmem:[%s1055] sm:$0x2] %vm1052, %v1051
    %s1057 = scalar_lea.vmem [#allocation0], 86
    %1058 = vst.msk [vmem:[%s1057] sm:$0x4] %vm1052, %v1051
    %s1059 = scalar_lea.vmem [#allocation0], 117
    %1060 = vst.msk [vmem:[%s1059] sm:$0x8] %vm1052, %v1051
    %s1061 = scalar_lea.vmem [#allocation0], 148
    %1062 = vst.msk [vmem:[%s1061] sm:$0x10] %vm1052, %v1051
    %s1063 = scalar_lea.vmem [#allocation0], 179
    %1064 = vst.msk [vmem:[%s1063] sm:$0x20] %vm1052, %v1051
    %s1065 = scalar_lea.vmem [#allocation0], 210
    %1066 = vst.msk [vmem:[%s1065] sm:$0x40] %vm1052, %v1051
    %s1067 = scalar_lea.vmem [#allocation0], 241
    %1068 = vst.msk [vmem:[%s1067] sm:$0x80] %vm1052, %v1051
    %s1069 = scalar_lea.vmem [#allocation1], 8
    %v1070 = vld [vmem:[%s1069] sm:$0xff]
    %1071 = vrot.lane.b32.xlu0 %v1070, 80
    %v1072 = vpop.permute.xlu0 %1071
    %vm1073 = vcmask 31744
    %s1074 = scalar_lea.vmem [#allocation0], 280
    %1075 = vst.msk [vmem:[%s1074] sm:$0x1] %vm1073, %v1072
    %s1076 = scalar_lea.vmem [#allocation0], 311
    %1077 = vst.msk [vmem:[%s1076] sm:$0x2] %vm1073, %v1072
    %s1078 = scalar_lea.vmem [#allocation0], 342
    %1079 = vst.msk [vmem:[%s1078] sm:$0x4] %vm1073, %v1072
    %s1080 = scalar_lea.vmem [#allocation0], 373
    %1081 = vst.msk [vmem:[%s1080] sm:$0x8] %vm1073, %v1072
    %s1082 = scalar_lea.vmem [#allocation0], 404
    %1083 = vst.msk [vmem:[%s1082] sm:$0x10] %vm1073, %v1072
    %s1084 = scalar_lea.vmem [#allocation0], 435
    %1085 = vst.msk [vmem:[%s1084] sm:$0x20] %vm1073, %v1072
    %s1086 = scalar_lea.vmem [#allocation0], 466
    %1087 = vst.msk [vmem:[%s1086] sm:$0x40] %vm1073, %v1072
    %s1088 = scalar_lea.vmem [#allocation0], 497
    %1089 = vst.msk [vmem:[%s1088] sm:$0x80] %vm1073, %v1072
    %s1090 = scalar_lea.vmem [#allocation1], 16
    %v1091 = vld [vmem:[%s1090] sm:$0xff]
    %1092 = vrot.lane.b32.xlu0 %v1091, 80
    %v1093 = vpop.permute.xlu0 %1092
    %vm1094 = vcmask 31744
    %s1095 = scalar_lea.vmem [#allocation0], 536
    %1096 = vst.msk [vmem:[%s1095] sm:$0x1] %vm1094, %v1093
    %s1097 = scalar_lea.vmem [#allocation0], 567
    %1098 = vst.msk [vmem:[%s1097] sm:$0x2] %vm1094, %v1093
    %s1099 = scalar_lea.vmem [#allocation0], 598
    %1100 = vst.msk [vmem:[%s1099] sm:$0x4] %vm1094, %v1093
    %s1101 = scalar_lea.vmem [#allocation0], 629
    %1102 = vst.msk [vmem:[%s1101] sm:$0x8] %vm1094, %v1093
    %s1103 = scalar_lea.vmem [#allocation0], 660
    %1104 = vst.msk [vmem:[%s1103] sm:$0x10] %vm1094, %v1093
    %s1105 = scalar_lea.vmem [#allocation0], 691
    %1106 = vst.msk [vmem:[%s1105] sm:$0x20] %vm1094, %v1093
    %s1107 = scalar_lea.vmem [#allocation0], 722
    %1108 = vst.msk [vmem:[%s1107] sm:$0x40] %vm1094, %v1093
    %s1109 = scalar_lea.vmem [#allocation0], 753
    %1110 = vst.msk [vmem:[%s1109] sm:$0x80] %vm1094, %v1093
    %s1111 = scalar_lea.vmem [#allocation1], 24
    %v1112 = vld [vmem:[%s1111] sm:$0xff]
    %1113 = vrot.lane.b32.xlu0 %v1112, 80
    %v1114 = vpop.permute.xlu0 %1113
    %vm1115 = vcmask 31744
    %s1116 = scalar_lea.vmem [#allocation0], 792
    %1117 = vst.msk [vmem:[%s1116] sm:$0x1] %vm1115, %v1114
    %s1118 = scalar_lea.vmem [#allocation0], 823
    %1119 = vst.msk [vmem:[%s1118] sm:$0x2] %vm1115, %v1114
    %s1120 = scalar_lea.vmem [#allocation0], 854
    %1121 = vst.msk [vmem:[%s1120] sm:$0x4] %vm1115, %v1114
    %s1122 = scalar_lea.vmem [#allocation0], 885
    %1123 = vst.msk [vmem:[%s1122] sm:$0x8] %vm1115, %v1114
    %s1124 = scalar_lea.vmem [#allocation0], 916
    %1125 = vst.msk [vmem:[%s1124] sm:$0x10] %vm1115, %v1114
    %s1126 = scalar_lea.vmem [#allocation0], 947
    %1127 = vst.msk [vmem:[%s1126] sm:$0x20] %vm1115, %v1114
    %s1128 = scalar_lea.vmem [#allocation0], 978
    %1129 = vst.msk [vmem:[%s1128] sm:$0x40] %vm1115, %v1114
    %s1130 = scalar_lea.vmem [#allocation0], 1009
    %1131 = vst.msk [vmem:[%s1130] sm:$0x80] %vm1115, %v1114
    %v1132 = vld [vmem:[#allocation1] sm:$0xff]
    %1133 = vrot.lane.b32.xlu0 %v1132, 76
    %v1134 = vpop.permute.xlu0 %1133
    %vm1135 = vcmask 31744
    %s1136 = scalar_lea.vmem [#allocation0], 25
    %1137 = vst.msk [vmem:[%s1136] sm:$0x1] %vm1135, %v1134
    %s1138 = scalar_lea.vmem [#allocation0], 56
    %1139 = vst.msk [vmem:[%s1138] sm:$0x2] %vm1135, %v1134
    %s1140 = scalar_lea.vmem [#allocation0], 87
    %1141 = vst.msk [vmem:[%s1140] sm:$0x4] %vm1135, %v1134
    %s1142 = scalar_lea.vmem [#allocation0], 118
    %1143 = vst.msk [vmem:[%s1142] sm:$0x8] %vm1135, %v1134
    %s1144 = scalar_lea.vmem [#allocation0], 149
    %1145 = vst.msk [vmem:[%s1144] sm:$0x10] %vm1135, %v1134
    %s1146 = scalar_lea.vmem [#allocation0], 180
    %1147 = vst.msk [vmem:[%s1146] sm:$0x20] %vm1135, %v1134
    %s1148 = scalar_lea.vmem [#allocation0], 211
    %1149 = vst.msk [vmem:[%s1148] sm:$0x40] %vm1135, %v1134
    %s1150 = scalar_lea.vmem [#allocation0], 242
    %1151 = vst.msk [vmem:[%s1150] sm:$0x80] %vm1135, %v1134
    %s1152 = scalar_lea.vmem [#allocation1], 8
    %v1153 = vld [vmem:[%s1152] sm:$0xff]
    %1154 = vrot.lane.b32.xlu0 %v1153, 76
    %v1155 = vpop.permute.xlu0 %1154
    %vm1156 = vcmask 31744
    %s1157 = scalar_lea.vmem [#allocation0], 281
    %1158 = vst.msk [vmem:[%s1157] sm:$0x1] %vm1156, %v1155
    %s1159 = scalar_lea.vmem [#allocation0], 312
    %1160 = vst.msk [vmem:[%s1159] sm:$0x2] %vm1156, %v1155
    %s1161 = scalar_lea.vmem [#allocation0], 343
    %1162 = vst.msk [vmem:[%s1161] sm:$0x4] %vm1156, %v1155
    %s1163 = scalar_lea.vmem [#allocation0], 374
    %1164 = vst.msk [vmem:[%s1163] sm:$0x8] %vm1156, %v1155
    %s1165 = scalar_lea.vmem [#allocation0], 405
    %1166 = vst.msk [vmem:[%s1165] sm:$0x10] %vm1156, %v1155
    %s1167 = scalar_lea.vmem [#allocation0], 436
    %1168 = vst.msk [vmem:[%s1167] sm:$0x20] %vm1156, %v1155
    %s1169 = scalar_lea.vmem [#allocation0], 467
    %1170 = vst.msk [vmem:[%s1169] sm:$0x40] %vm1156, %v1155
    %s1171 = scalar_lea.vmem [#allocation0], 498
    %1172 = vst.msk [vmem:[%s1171] sm:$0x80] %vm1156, %v1155
    %s1173 = scalar_lea.vmem [#allocation1], 16
    %v1174 = vld [vmem:[%s1173] sm:$0xff]
    %1175 = vrot.lane.b32.xlu0 %v1174, 76
    %v1176 = vpop.permute.xlu0 %1175
    %vm1177 = vcmask 31744
    %s1178 = scalar_lea.vmem [#allocation0], 537
    %1179 = vst.msk [vmem:[%s1178] sm:$0x1] %vm1177, %v1176
    %s1180 = scalar_lea.vmem [#allocation0], 568
    %1181 = vst.msk [vmem:[%s1180] sm:$0x2] %vm1177, %v1176
    %s1182 = scalar_lea.vmem [#allocation0], 599
    %1183 = vst.msk [vmem:[%s1182] sm:$0x4] %vm1177, %v1176
    %s1184 = scalar_lea.vmem [#allocation0], 630
    %1185 = vst.msk [vmem:[%s1184] sm:$0x8] %vm1177, %v1176
    %s1186 = scalar_lea.vmem [#allocation0], 661
    %1187 = vst.msk [vmem:[%s1186] sm:$0x10] %vm1177, %v1176
    %s1188 = scalar_lea.vmem [#allocation0], 692
    %1189 = vst.msk [vmem:[%s1188] sm:$0x20] %vm1177, %v1176
    %s1190 = scalar_lea.vmem [#allocation0], 723
    %1191 = vst.msk [vmem:[%s1190] sm:$0x40] %vm1177, %v1176
    %s1192 = scalar_lea.vmem [#allocation0], 754
    %1193 = vst.msk [vmem:[%s1192] sm:$0x80] %vm1177, %v1176
    %s1194 = scalar_lea.vmem [#allocation1], 24
    %v1195 = vld [vmem:[%s1194] sm:$0xff]
    %1196 = vrot.lane.b32.xlu0 %v1195, 76
    %v1197 = vpop.permute.xlu0 %1196
    %vm1198 = vcmask 31744
    %s1199 = scalar_lea.vmem [#allocation0], 793
    %1200 = vst.msk [vmem:[%s1199] sm:$0x1] %vm1198, %v1197
    %s1201 = scalar_lea.vmem [#allocation0], 824
    %1202 = vst.msk [vmem:[%s1201] sm:$0x2] %vm1198, %v1197
    %s1203 = scalar_lea.vmem [#allocation0], 855
    %1204 = vst.msk [vmem:[%s1203] sm:$0x4] %vm1198, %v1197
    %s1205 = scalar_lea.vmem [#allocation0], 886
    %1206 = vst.msk [vmem:[%s1205] sm:$0x8] %vm1198, %v1197
    %s1207 = scalar_lea.vmem [#allocation0], 917
    %1208 = vst.msk [vmem:[%s1207] sm:$0x10] %vm1198, %v1197
    %s1209 = scalar_lea.vmem [#allocation0], 948
    %1210 = vst.msk [vmem:[%s1209] sm:$0x20] %vm1198, %v1197
    %s1211 = scalar_lea.vmem [#allocation0], 979
    %1212 = vst.msk [vmem:[%s1211] sm:$0x40] %vm1198, %v1197
    %s1213 = scalar_lea.vmem [#allocation0], 1010
    %1214 = vst.msk [vmem:[%s1213] sm:$0x80] %vm1198, %v1197
    %v1215 = vld [vmem:[#allocation1] sm:$0xff]
    %1216 = vrot.lane.b32.xlu0 %v1215, 72
    %v1217 = vpop.permute.xlu0 %1216
    %vm1218 = vcmask 31744
    %s1219 = scalar_lea.vmem [#allocation0], 26
    %1220 = vst.msk [vmem:[%s1219] sm:$0x1] %vm1218, %v1217
    %s1221 = scalar_lea.vmem [#allocation0], 57
    %1222 = vst.msk [vmem:[%s1221] sm:$0x2] %vm1218, %v1217
    %s1223 = scalar_lea.vmem [#allocation0], 88
    %1224 = vst.msk [vmem:[%s1223] sm:$0x4] %vm1218, %v1217
    %s1225 = scalar_lea.vmem [#allocation0], 119
    %1226 = vst.msk [vmem:[%s1225] sm:$0x8] %vm1218, %v1217
    %s1227 = scalar_lea.vmem [#allocation0], 150
    %1228 = vst.msk [vmem:[%s1227] sm:$0x10] %vm1218, %v1217
    %s1229 = scalar_lea.vmem [#allocation0], 181
    %1230 = vst.msk [vmem:[%s1229] sm:$0x20] %vm1218, %v1217
    %s1231 = scalar_lea.vmem [#allocation0], 212
    %1232 = vst.msk [vmem:[%s1231] sm:$0x40] %vm1218, %v1217
    %s1233 = scalar_lea.vmem [#allocation0], 243
    %1234 = vst.msk [vmem:[%s1233] sm:$0x80] %vm1218, %v1217
    %s1235 = scalar_lea.vmem [#allocation1], 8
    %v1236 = vld [vmem:[%s1235] sm:$0xff]
    %1237 = vrot.lane.b32.xlu0 %v1236, 72
    %v1238 = vpop.permute.xlu0 %1237
    %vm1239 = vcmask 31744
    %s1240 = scalar_lea.vmem [#allocation0], 282
    %1241 = vst.msk [vmem:[%s1240] sm:$0x1] %vm1239, %v1238
    %s1242 = scalar_lea.vmem [#allocation0], 313
    %1243 = vst.msk [vmem:[%s1242] sm:$0x2] %vm1239, %v1238
    %s1244 = scalar_lea.vmem [#allocation0], 344
    %1245 = vst.msk [vmem:[%s1244] sm:$0x4] %vm1239, %v1238
    %s1246 = scalar_lea.vmem [#allocation0], 375
    %1247 = vst.msk [vmem:[%s1246] sm:$0x8] %vm1239, %v1238
    %s1248 = scalar_lea.vmem [#allocation0], 406
    %1249 = vst.msk [vmem:[%s1248] sm:$0x10] %vm1239, %v1238
    %s1250 = scalar_lea.vmem [#allocation0], 437
    %1251 = vst.msk [vmem:[%s1250] sm:$0x20] %vm1239, %v1238
    %s1252 = scalar_lea.vmem [#allocation0], 468
    %1253 = vst.msk [vmem:[%s1252] sm:$0x40] %vm1239, %v1238
    %s1254 = scalar_lea.vmem [#allocation0], 499
    %1255 = vst.msk [vmem:[%s1254] sm:$0x80] %vm1239, %v1238
    %s1256 = scalar_lea.vmem [#allocation1], 16
    %v1257 = vld [vmem:[%s1256] sm:$0xff]
    %1258 = vrot.lane.b32.xlu0 %v1257, 72
    %v1259 = vpop.permute.xlu0 %1258
    %vm1260 = vcmask 31744
    %s1261 = scalar_lea.vmem [#allocation0], 538
    %1262 = vst.msk [vmem:[%s1261] sm:$0x1] %vm1260, %v1259
    %s1263 = scalar_lea.vmem [#allocation0], 569
    %1264 = vst.msk [vmem:[%s1263] sm:$0x2] %vm1260, %v1259
    %s1265 = scalar_lea.vmem [#allocation0], 600
    %1266 = vst.msk [vmem:[%s1265] sm:$0x4] %vm1260, %v1259
    %s1267 = scalar_lea.vmem [#allocation0], 631
    %1268 = vst.msk [vmem:[%s1267] sm:$0x8] %vm1260, %v1259
    %s1269 = scalar_lea.vmem [#allocation0], 662
    %1270 = vst.msk [vmem:[%s1269] sm:$0x10] %vm1260, %v1259
    %s1271 = scalar_lea.vmem [#allocation0], 693
    %1272 = vst.msk [vmem:[%s1271] sm:$0x20] %vm1260, %v1259
    %s1273 = scalar_lea.vmem [#allocation0], 724
    %1274 = vst.msk [vmem:[%s1273] sm:$0x40] %vm1260, %v1259
    %s1275 = scalar_lea.vmem [#allocation0], 755
    %1276 = vst.msk [vmem:[%s1275] sm:$0x80] %vm1260, %v1259
    %s1277 = scalar_lea.vmem [#allocation1], 24
    %v1278 = vld [vmem:[%s1277] sm:$0xff]
    %1279 = vrot.lane.b32.xlu0 %v1278, 72
    %v1280 = vpop.permute.xlu0 %1279
    %vm1281 = vcmask 31744
    %s1282 = scalar_lea.vmem [#allocation0], 794
    %1283 = vst.msk [vmem:[%s1282] sm:$0x1] %vm1281, %v1280
    %s1284 = scalar_lea.vmem [#allocation0], 825
    %1285 = vst.msk [vmem:[%s1284] sm:$0x2] %vm1281, %v1280
    %s1286 = scalar_lea.vmem [#allocation0], 856
    %1287 = vst.msk [vmem:[%s1286] sm:$0x4] %vm1281, %v1280
    %s1288 = scalar_lea.vmem [#allocation0], 887
    %1289 = vst.msk [vmem:[%s1288] sm:$0x8] %vm1281, %v1280
    %s1290 = scalar_lea.vmem [#allocation0], 918
    %1291 = vst.msk [vmem:[%s1290] sm:$0x10] %vm1281, %v1280
    %s1292 = scalar_lea.vmem [#allocation0], 949
    %1293 = vst.msk [vmem:[%s1292] sm:$0x20] %vm1281, %v1280
    %s1294 = scalar_lea.vmem [#allocation0], 980
    %1295 = vst.msk [vmem:[%s1294] sm:$0x40] %vm1281, %v1280
    %s1296 = scalar_lea.vmem [#allocation0], 1011
    %1297 = vst.msk [vmem:[%s1296] sm:$0x80] %vm1281, %v1280
    %v1298 = vld [vmem:[#allocation1] sm:$0xff]
    %1299 = vrot.lane.b32.xlu0 %v1298, 68
    %v1300 = vpop.permute.xlu0 %1299
    %vm1301 = vcmask 31744
    %s1302 = scalar_lea.vmem [#allocation0], 27
    %1303 = vst.msk [vmem:[%s1302] sm:$0x1] %vm1301, %v1300
    %s1304 = scalar_lea.vmem [#allocation0], 58
    %1305 = vst.msk [vmem:[%s1304] sm:$0x2] %vm1301, %v1300
    %s1306 = scalar_lea.vmem [#allocation0], 89
    %1307 = vst.msk [vmem:[%s1306] sm:$0x4] %vm1301, %v1300
    %s1308 = scalar_lea.vmem [#allocation0], 120
    %1309 = vst.msk [vmem:[%s1308] sm:$0x8] %vm1301, %v1300
    %s1310 = scalar_lea.vmem [#allocation0], 151
    %1311 = vst.msk [vmem:[%s1310] sm:$0x10] %vm1301, %v1300
    %s1312 = scalar_lea.vmem [#allocation0], 182
    %1313 = vst.msk [vmem:[%s1312] sm:$0x20] %vm1301, %v1300
    %s1314 = scalar_lea.vmem [#allocation0], 213
    %1315 = vst.msk [vmem:[%s1314] sm:$0x40] %vm1301, %v1300
    %s1316 = scalar_lea.vmem [#allocation0], 244
    %1317 = vst.msk [vmem:[%s1316] sm:$0x80] %vm1301, %v1300
    %s1318 = scalar_lea.vmem [#allocation1], 8
    %v1319 = vld [vmem:[%s1318] sm:$0xff]
    %1320 = vrot.lane.b32.xlu0 %v1319, 68
    %v1321 = vpop.permute.xlu0 %1320
    %vm1322 = vcmask 31744
    %s1323 = scalar_lea.vmem [#allocation0], 283
    %1324 = vst.msk [vmem:[%s1323] sm:$0x1] %vm1322, %v1321
    %s1325 = scalar_lea.vmem [#allocation0], 314
    %1326 = vst.msk [vmem:[%s1325] sm:$0x2] %vm1322, %v1321
    %s1327 = scalar_lea.vmem [#allocation0], 345
    %1328 = vst.msk [vmem:[%s1327] sm:$0x4] %vm1322, %v1321
    %s1329 = scalar_lea.vmem [#allocation0], 376
    %1330 = vst.msk [vmem:[%s1329] sm:$0x8] %vm1322, %v1321
    %s1331 = scalar_lea.vmem [#allocation0], 407
    %1332 = vst.msk [vmem:[%s1331] sm:$0x10] %vm1322, %v1321
    %s1333 = scalar_lea.vmem [#allocation0], 438
    %1334 = vst.msk [vmem:[%s1333] sm:$0x20] %vm1322, %v1321
    %s1335 = scalar_lea.vmem [#allocation0], 469
    %1336 = vst.msk [vmem:[%s1335] sm:$0x40] %vm1322, %v1321
    %s1337 = scalar_lea.vmem [#allocation0], 500
    %1338 = vst.msk [vmem:[%s1337] sm:$0x80] %vm1322, %v1321
    %s1339 = scalar_lea.vmem [#allocation1], 16
    %v1340 = vld [vmem:[%s1339] sm:$0xff]
    %1341 = vrot.lane.b32.xlu0 %v1340, 68
    %v1342 = vpop.permute.xlu0 %1341
    %vm1343 = vcmask 31744
    %s1344 = scalar_lea.vmem [#allocation0], 539
    %1345 = vst.msk [vmem:[%s1344] sm:$0x1] %vm1343, %v1342
    %s1346 = scalar_lea.vmem [#allocation0], 570
    %1347 = vst.msk [vmem:[%s1346] sm:$0x2] %vm1343, %v1342
    %s1348 = scalar_lea.vmem [#allocation0], 601
    %1349 = vst.msk [vmem:[%s1348] sm:$0x4] %vm1343, %v1342
    %s1350 = scalar_lea.vmem [#allocation0], 632
    %1351 = vst.msk [vmem:[%s1350] sm:$0x8] %vm1343, %v1342
    %s1352 = scalar_lea.vmem [#allocation0], 663
    %1353 = vst.msk [vmem:[%s1352] sm:$0x10] %vm1343, %v1342
    %s1354 = scalar_lea.vmem [#allocation0], 694
    %1355 = vst.msk [vmem:[%s1354] sm:$0x20] %vm1343, %v1342
    %s1356 = scalar_lea.vmem [#allocation0], 725
    %1357 = vst.msk [vmem:[%s1356] sm:$0x40] %vm1343, %v1342
    %s1358 = scalar_lea.vmem [#allocation0], 756
    %1359 = vst.msk [vmem:[%s1358] sm:$0x80] %vm1343, %v1342
    %s1360 = scalar_lea.vmem [#allocation1], 24
    %v1361 = vld [vmem:[%s1360] sm:$0xff]
    %1362 = vrot.lane.b32.xlu0 %v1361, 68
    %v1363 = vpop.permute.xlu0 %1362
    %vm1364 = vcmask 31744
    %s1365 = scalar_lea.vmem [#allocation0], 795
    %1366 = vst.msk [vmem:[%s1365] sm:$0x1] %vm1364, %v1363
    %s1367 = scalar_lea.vmem [#allocation0], 826
    %1368 = vst.msk [vmem:[%s1367] sm:$0x2] %vm1364, %v1363
    %s1369 = scalar_lea.vmem [#allocation0], 857
    %1370 = vst.msk [vmem:[%s1369] sm:$0x4] %vm1364, %v1363
    %s1371 = scalar_lea.vmem [#allocation0], 888
    %1372 = vst.msk [vmem:[%s1371] sm:$0x8] %vm1364, %v1363
    %s1373 = scalar_lea.vmem [#allocation0], 919
    %1374 = vst.msk [vmem:[%s1373] sm:$0x10] %vm1364, %v1363
    %s1375 = scalar_lea.vmem [#allocation0], 950
    %1376 = vst.msk [vmem:[%s1375] sm:$0x20] %vm1364, %v1363
    %s1377 = scalar_lea.vmem [#allocation0], 981
    %1378 = vst.msk [vmem:[%s1377] sm:$0x40] %vm1364, %v1363
    %s1379 = scalar_lea.vmem [#allocation0], 1012
    %1380 = vst.msk [vmem:[%s1379] sm:$0x80] %vm1364, %v1363
    %s1382 = ssub.s32 16, 1
    %v1383 = vld [vmem:[#allocation0] sm:%s1382]
    %v1384 = vpack.c.bf16 0.0, %v1383
    %s1386 = ssub.s32 4, 1
    %1387 = vst [vmem:[%s1] sm:%s1386] %v1384
    %s1388 = scalar_lea.vmem [#allocation0], 8
    %v1389 = vld [vmem:[%s1388] sm:%s1382]
    %v1390 = vpack.c.bf16 0.0, %v1389
    %s1392 = ssub.s32 4, 1
    %s1393 = scalar_lea.vmem %s1, 2
    %1394 = vst [vmem:[%s1393] sm:%s1392] %v1390
    %s1395 = scalar_lea.vmem [#allocation0], 16
    %v1396 = vld [vmem:[%s1395] sm:%s1382]
    %v1397 = vpack.c.bf16 0.0, %v1396
    %s1399 = ssub.s32 4, 1
    %s1400 = scalar_lea.vmem %s1, 4
    %1401 = vst [vmem:[%s1400] sm:%s1399] %v1397
    %s1402 = scalar_lea.vmem [#allocation0], 24
    %v1403 = vld [vmem:[%s1402] sm:%s1382]
    %v1404 = vpack.c.bf16 0.0, %v1403
    %s1406 = ssub.s32 4, 1
    %s1407 = scalar_lea.vmem %s1, 6
    %1408 = vst [vmem:[%s1407] sm:%s1406] %v1404
    %s1409 = scalar_lea.vmem [#allocation0], 32
    %v1410 = vld [vmem:[%s1409] sm:%s1382]
    %v1411 = vpack.c.bf16 0.0, %v1410
    %s1413 = ssub.s32 4, 1
    %s1414 = scalar_lea.vmem %s1, 8
    %1415 = vst [vmem:[%s1414] sm:%s1413] %v1411
    %s1416 = scalar_lea.vmem [#allocation0], 40
    %v1417 = vld [vmem:[%s1416] sm:%s1382]
    %v1418 = vpack.c.bf16 0.0, %v1417
    %s1420 = ssub.s32 4, 1
    %s1421 = scalar_lea.vmem %s1, 10
    %1422 = vst [vmem:[%s1421] sm:%s1420] %v1418
    %s1423 = scalar_lea.vmem [#allocation0], 48
    %v1424 = vld [vmem:[%s1423] sm:%s1382]
    %v1425 = vpack.c.bf16 0.0, %v1424
    %s1427 = ssub.s32 4, 1
    %s1428 = scalar_lea.vmem %s1, 12
    %1429 = vst [vmem:[%s1428] sm:%s1427] %v1425
    %s1430 = scalar_lea.vmem [#allocation0], 56
    %v1431 = vld [vmem:[%s1430] sm:%s1382]
    %v1432 = vpack.c.bf16 0.0, %v1431
    %s1434 = ssub.s32 4, 1
    %s1435 = scalar_lea.vmem %s1, 14
    %1436 = vst [vmem:[%s1435] sm:%s1434] %v1432
    %s1437 = scalar_lea.vmem [#allocation0], 64
    %v1438 = vld [vmem:[%s1437] sm:%s1382]
    %v1439 = vpack.c.bf16 0.0, %v1438
    %s1441 = ssub.s32 4, 1
    %s1442 = scalar_lea.vmem %s1, 16
    %1443 = vst [vmem:[%s1442] sm:%s1441] %v1439
    %s1444 = scalar_lea.vmem [#allocation0], 72
    %v1445 = vld [vmem:[%s1444] sm:%s1382]
    %v1446 = vpack.c.bf16 0.0, %v1445
    %s1448 = ssub.s32 4, 1
    %s1449 = scalar_lea.vmem %s1, 18
    %1450 = vst [vmem:[%s1449] sm:%s1448] %v1446
    %s1451 = scalar_lea.vmem [#allocation0], 80
    %v1452 = vld [vmem:[%s1451] sm:%s1382]
    %v1453 = vpack.c.bf16 0.0, %v1452
    %s1455 = ssub.s32 4, 1
    %s1456 = scalar_lea.vmem %s1, 20
    %1457 = vst [vmem:[%s1456] sm:%s1455] %v1453
    %s1458 = scalar_lea.vmem [#allocation0], 88
    %v1459 = vld [vmem:[%s1458] sm:%s1382]
    %v1460 = vpack.c.bf16 0.0, %v1459
    %s1462 = ssub.s32 4, 1
    %s1463 = scalar_lea.vmem %s1, 22
    %1464 = vst [vmem:[%s1463] sm:%s1462] %v1460
    %s1465 = scalar_lea.vmem [#allocation0], 96
    %v1466 = vld [vmem:[%s1465] sm:%s1382]
    %v1467 = vpack.c.bf16 0.0, %v1466
    %s1469 = ssub.s32 4, 1
    %s1470 = scalar_lea.vmem %s1, 24
    %1471 = vst [vmem:[%s1470] sm:%s1469] %v1467
    %s1472 = scalar_lea.vmem [#allocation0], 104
    %v1473 = vld [vmem:[%s1472] sm:%s1382]
    %v1474 = vpack.c.bf16 0.0, %v1473
    %s1476 = ssub.s32 4, 1
    %s1477 = scalar_lea.vmem %s1, 26
    %1478 = vst [vmem:[%s1477] sm:%s1476] %v1474
    %s1479 = scalar_lea.vmem [#allocation0], 112
    %v1480 = vld [vmem:[%s1479] sm:%s1382]
    %v1481 = vpack.c.bf16 0.0, %v1480
    %s1483 = ssub.s32 4, 1
    %s1484 = scalar_lea.vmem %s1, 28
    %1485 = vst [vmem:[%s1484] sm:%s1483] %v1481
    %s1486 = scalar_lea.vmem [#allocation0], 120
    %v1487 = vld [vmem:[%s1486] sm:%s1382]
    %v1488 = vpack.c.bf16 0.0, %v1487
    %s1490 = ssub.s32 4, 1
    %s1491 = scalar_lea.vmem %s1, 30
    %1492 = vst [vmem:[%s1491] sm:%s1490] %v1488
    %s1493 = scalar_lea.vmem [#allocation0], 128
    %v1494 = vld [vmem:[%s1493] sm:%s1382]
    %v1495 = vpack.c.bf16 0.0, %v1494
    %s1497 = ssub.s32 4, 1
    %s1498 = scalar_lea.vmem %s1, 32
    %1499 = vst [vmem:[%s1498] sm:%s1497] %v1495
    %s1500 = scalar_lea.vmem [#allocation0], 136
    %v1501 = vld [vmem:[%s1500] sm:%s1382]
    %v1502 = vpack.c.bf16 0.0, %v1501
    %s1504 = ssub.s32 4, 1
    %s1505 = scalar_lea.vmem %s1, 34
    %1506 = vst [vmem:[%s1505] sm:%s1504] %v1502
    %s1507 = scalar_lea.vmem [#allocation0], 144
    %v1508 = vld [vmem:[%s1507] sm:%s1382]
    %v1509 = vpack.c.bf16 0.0, %v1508
    %s1511 = ssub.s32 4, 1
    %s1512 = scalar_lea.vmem %s1, 36
    %1513 = vst [vmem:[%s1512] sm:%s1511] %v1509
    %s1514 = scalar_lea.vmem [#allocation0], 152
    %v1515 = vld [vmem:[%s1514] sm:%s1382]
    %v1516 = vpack.c.bf16 0.0, %v1515
    %s1518 = ssub.s32 4, 1
    %s1519 = scalar_lea.vmem %s1, 38
    %1520 = vst [vmem:[%s1519] sm:%s1518] %v1516
    %s1521 = scalar_lea.vmem [#allocation0], 160
    %v1522 = vld [vmem:[%s1521] sm:%s1382]
    %v1523 = vpack.c.bf16 0.0, %v1522
    %s1525 = ssub.s32 4, 1
    %s1526 = scalar_lea.vmem %s1, 40
    %1527 = vst [vmem:[%s1526] sm:%s1525] %v1523
    %s1528 = scalar_lea.vmem [#allocation0], 168
    %v1529 = vld [vmem:[%s1528] sm:%s1382]
    %v1530 = vpack.c.bf16 0.0, %v1529
    %s1532 = ssub.s32 4, 1
    %s1533 = scalar_lea.vmem %s1, 42
    %1534 = vst [vmem:[%s1533] sm:%s1532] %v1530
    %s1535 = scalar_lea.vmem [#allocation0], 176
    %v1536 = vld [vmem:[%s1535] sm:%s1382]
    %v1537 = vpack.c.bf16 0.0, %v1536
    %s1539 = ssub.s32 4, 1
    %s1540 = scalar_lea.vmem %s1, 44
    %1541 = vst [vmem:[%s1540] sm:%s1539] %v1537
    %s1542 = scalar_lea.vmem [#allocation0], 184
    %v1543 = vld [vmem:[%s1542] sm:%s1382]
    %v1544 = vpack.c.bf16 0.0, %v1543
    %s1546 = ssub.s32 4, 1
    %s1547 = scalar_lea.vmem %s1, 46
    %1548 = vst [vmem:[%s1547] sm:%s1546] %v1544
    %s1549 = scalar_lea.vmem [#allocation0], 192
    %v1550 = vld [vmem:[%s1549] sm:%s1382]
    %v1551 = vpack.c.bf16 0.0, %v1550
    %s1553 = ssub.s32 4, 1
    %s1554 = scalar_lea.vmem %s1, 48
    %1555 = vst [vmem:[%s1554] sm:%s1553] %v1551
    %s1556 = scalar_lea.vmem [#allocation0], 200
    %v1557 = vld [vmem:[%s1556] sm:%s1382]
    %v1558 = vpack.c.bf16 0.0, %v1557
    %s1560 = ssub.s32 4, 1
    %s1561 = scalar_lea.vmem %s1, 50
    %1562 = vst [vmem:[%s1561] sm:%s1560] %v1558
    %s1563 = scalar_lea.vmem [#allocation0], 208
    %v1564 = vld [vmem:[%s1563] sm:%s1382]
    %v1565 = vpack.c.bf16 0.0, %v1564
    %s1567 = ssub.s32 4, 1
    %s1568 = scalar_lea.vmem %s1, 52
    %1569 = vst [vmem:[%s1568] sm:%s1567] %v1565
    %s1570 = scalar_lea.vmem [#allocation0], 216
    %v1571 = vld [vmem:[%s1570] sm:%s1382]
    %v1572 = vpack.c.bf16 0.0, %v1571
    %s1574 = ssub.s32 4, 1
    %s1575 = scalar_lea.vmem %s1, 54
    %1576 = vst [vmem:[%s1575] sm:%s1574] %v1572
    %s1577 = scalar_lea.vmem [#allocation0], 224
    %v1578 = vld [vmem:[%s1577] sm:%s1382]
    %v1579 = vpack.c.bf16 0.0, %v1578
    %s1581 = ssub.s32 4, 1
    %s1582 = scalar_lea.vmem %s1, 56
    %1583 = vst [vmem:[%s1582] sm:%s1581] %v1579
    %s1584 = scalar_lea.vmem [#allocation0], 232
    %v1585 = vld [vmem:[%s1584] sm:%s1382]
    %v1586 = vpack.c.bf16 0.0, %v1585
    %s1588 = ssub.s32 4, 1
    %s1589 = scalar_lea.vmem %s1, 58
    %1590 = vst [vmem:[%s1589] sm:%s1588] %v1586
    %s1591 = scalar_lea.vmem [#allocation0], 240
    %v1592 = vld [vmem:[%s1591] sm:%s1382]
    %v1593 = vpack.c.bf16 0.0, %v1592
    %s1595 = ssub.s32 4, 1
    %s1596 = scalar_lea.vmem %s1, 60
    %1597 = vst [vmem:[%s1596] sm:%s1595] %v1593
    %s1598 = scalar_lea.vmem [#allocation0], 248
    %v1599 = vld [vmem:[%s1598] sm:%s1382]
    %v1600 = vpack.c.bf16 0.0, %v1599
    %s1602 = ssub.s32 4, 1
    %s1603 = scalar_lea.vmem %s1, 62
    %1604 = vst [vmem:[%s1603] sm:%s1602] %v1600
    %s1605 = scalar_lea.vmem [#allocation0], 256
    %v1606 = vld [vmem:[%s1605] sm:%s1382]
    %v1607 = vpack.c.bf16 0.0, %v1606
    %s1609 = ssub.s32 4, 1
    %s1610 = scalar_lea.vmem %s1, 64
    %1611 = vst [vmem:[%s1610] sm:%s1609] %v1607
    %s1612 = scalar_lea.vmem [#allocation0], 264
    %v1613 = vld [vmem:[%s1612] sm:%s1382]
    %v1614 = vpack.c.bf16 0.0, %v1613
    %s1616 = ssub.s32 4, 1
    %s1617 = scalar_lea.vmem %s1, 66
    %1618 = vst [vmem:[%s1617] sm:%s1616] %v1614
    %s1619 = scalar_lea.vmem [#allocation0], 272
    %v1620 = vld [vmem:[%s1619] sm:%s1382]
    %v1621 = vpack.c.bf16 0.0, %v1620
    %s1623 = ssub.s32 4, 1
    %s1624 = scalar_lea.vmem %s1, 68
    %1625 = vst [vmem:[%s1624] sm:%s1623] %v1621
    %s1626 = scalar_lea.vmem [#allocation0], 280
    %v1627 = vld [vmem:[%s1626] sm:%s1382]
    %v1628 = vpack.c.bf16 0.0, %v1627
    %s1630 = ssub.s32 4, 1
    %s1631 = scalar_lea.vmem %s1, 70
    %1632 = vst [vmem:[%s1631] sm:%s1630] %v1628
    %s1633 = scalar_lea.vmem [#allocation0], 288
    %v1634 = vld [vmem:[%s1633] sm:%s1382]
    %v1635 = vpack.c.bf16 0.0, %v1634
    %s1637 = ssub.s32 4, 1
    %s1638 = scalar_lea.vmem %s1, 72
    %1639 = vst [vmem:[%s1638] sm:%s1637] %v1635
    %s1640 = scalar_lea.vmem [#allocation0], 296
    %v1641 = vld [vmem:[%s1640] sm:%s1382]
    %v1642 = vpack.c.bf16 0.0, %v1641
    %s1644 = ssub.s32 4, 1
    %s1645 = scalar_lea.vmem %s1, 74
    %1646 = vst [vmem:[%s1645] sm:%s1644] %v1642
    %s1647 = scalar_lea.vmem [#allocation0], 304
    %v1648 = vld [vmem:[%s1647] sm:%s1382]
    %v1649 = vpack.c.bf16 0.0, %v1648
    %s1651 = ssub.s32 4, 1
    %s1652 = scalar_lea.vmem %s1, 76
    %1653 = vst [vmem:[%s1652] sm:%s1651] %v1649
    %s1654 = scalar_lea.vmem [#allocation0], 312
    %v1655 = vld [vmem:[%s1654] sm:%s1382]
    %v1656 = vpack.c.bf16 0.0, %v1655
    %s1658 = ssub.s32 4, 1
    %s1659 = scalar_lea.vmem %s1, 78
    %1660 = vst [vmem:[%s1659] sm:%s1658] %v1656
    %s1661 = scalar_lea.vmem [#allocation0], 320
    %v1662 = vld [vmem:[%s1661] sm:%s1382]
    %v1663 = vpack.c.bf16 0.0, %v1662
    %s1665 = ssub.s32 4, 1
    %s1666 = scalar_lea.vmem %s1, 80
    %1667 = vst [vmem:[%s1666] sm:%s1665] %v1663
    %s1668 = scalar_lea.vmem [#allocation0], 328
    %v1669 = vld [vmem:[%s1668] sm:%s1382]
    %v1670 = vpack.c.bf16 0.0, %v1669
    %s1672 = ssub.s32 4, 1
    %s1673 = scalar_lea.vmem %s1, 82
    %1674 = vst [vmem:[%s1673] sm:%s1672] %v1670
    %s1675 = scalar_lea.vmem [#allocation0], 336
    %v1676 = vld [vmem:[%s1675] sm:%s1382]
    %v1677 = vpack.c.bf16 0.0, %v1676
    %s1679 = ssub.s32 4, 1
    %s1680 = scalar_lea.vmem %s1, 84
    %1681 = vst [vmem:[%s1680] sm:%s1679] %v1677
    %s1682 = scalar_lea.vmem [#allocation0], 344
    %v1683 = vld [vmem:[%s1682] sm:%s1382]
    %v1684 = vpack.c.bf16 0.0, %v1683
    %s1686 = ssub.s32 4, 1
    %s1687 = scalar_lea.vmem %s1, 86
    %1688 = vst [vmem:[%s1687] sm:%s1686] %v1684
    %s1689 = scalar_lea.vmem [#allocation0], 352
    %v1690 = vld [vmem:[%s1689] sm:%s1382]
    %v1691 = vpack.c.bf16 0.0, %v1690
    %s1693 = ssub.s32 4, 1
    %s1694 = scalar_lea.vmem %s1, 88
    %1695 = vst [vmem:[%s1694] sm:%s1693] %v1691
    %s1696 = scalar_lea.vmem [#allocation0], 360
    %v1697 = vld [vmem:[%s1696] sm:%s1382]
    %v1698 = vpack.c.bf16 0.0, %v1697
    %s1700 = ssub.s32 4, 1
    %s1701 = scalar_lea.vmem %s1, 90
    %1702 = vst [vmem:[%s1701] sm:%s1700] %v1698
    %s1703 = scalar_lea.vmem [#allocation0], 368
    %v1704 = vld [vmem:[%s1703] sm:%s1382]
    %v1705 = vpack.c.bf16 0.0, %v1704
    %s1707 = ssub.s32 4, 1
    %s1708 = scalar_lea.vmem %s1, 92
    %1709 = vst [vmem:[%s1708] sm:%s1707] %v1705
    %s1710 = scalar_lea.vmem [#allocation0], 376
    %v1711 = vld [vmem:[%s1710] sm:%s1382]
    %v1712 = vpack.c.bf16 0.0, %v1711
    %s1714 = ssub.s32 4, 1
    %s1715 = scalar_lea.vmem %s1, 94
    %1716 = vst [vmem:[%s1715] sm:%s1714] %v1712
    %s1717 = scalar_lea.vmem [#allocation0], 384
    %v1718 = vld [vmem:[%s1717] sm:%s1382]
    %v1719 = vpack.c.bf16 0.0, %v1718
    %s1721 = ssub.s32 4, 1
    %s1722 = scalar_lea.vmem %s1, 96
    %1723 = vst [vmem:[%s1722] sm:%s1721] %v1719
    %s1724 = scalar_lea.vmem [#allocation0], 392
    %v1725 = vld [vmem:[%s1724] sm:%s1382]
    %v1726 = vpack.c.bf16 0.0, %v1725
    %s1728 = ssub.s32 4, 1
    %s1729 = scalar_lea.vmem %s1, 98
    %1730 = vst [vmem:[%s1729] sm:%s1728] %v1726
    %s1731 = scalar_lea.vmem [#allocation0], 400
    %v1732 = vld [vmem:[%s1731] sm:%s1382]
    %v1733 = vpack.c.bf16 0.0, %v1732
    %s1735 = ssub.s32 4, 1
    %s1736 = scalar_lea.vmem %s1, 100
    %1737 = vst [vmem:[%s1736] sm:%s1735] %v1733
    %s1738 = scalar_lea.vmem [#allocation0], 408
    %v1739 = vld [vmem:[%s1738] sm:%s1382]
    %v1740 = vpack.c.bf16 0.0, %v1739
    %s1742 = ssub.s32 4, 1
    %s1743 = scalar_lea.vmem %s1, 102
    %1744 = vst [vmem:[%s1743] sm:%s1742] %v1740
    %s1745 = scalar_lea.vmem [#allocation0], 416
    %v1746 = vld [vmem:[%s1745] sm:%s1382]
    %v1747 = vpack.c.bf16 0.0, %v1746
    %s1749 = ssub.s32 4, 1
    %s1750 = scalar_lea.vmem %s1, 104
    %1751 = vst [vmem:[%s1750] sm:%s1749] %v1747
    %s1752 = scalar_lea.vmem [#allocation0], 424
    %v1753 = vld [vmem:[%s1752] sm:%s1382]
    %v1754 = vpack.c.bf16 0.0, %v1753
    %s1756 = ssub.s32 4, 1
    %s1757 = scalar_lea.vmem %s1, 106
    %1758 = vst [vmem:[%s1757] sm:%s1756] %v1754
    %s1759 = scalar_lea.vmem [#allocation0], 432
    %v1760 = vld [vmem:[%s1759] sm:%s1382]
    %v1761 = vpack.c.bf16 0.0, %v1760
    %s1763 = ssub.s32 4, 1
    %s1764 = scalar_lea.vmem %s1, 108
    %1765 = vst [vmem:[%s1764] sm:%s1763] %v1761
    %s1766 = scalar_lea.vmem [#allocation0], 440
    %v1767 = vld [vmem:[%s1766] sm:%s1382]
    %v1768 = vpack.c.bf16 0.0, %v1767
    %s1770 = ssub.s32 4, 1
    %s1771 = scalar_lea.vmem %s1, 110
    %1772 = vst [vmem:[%s1771] sm:%s1770] %v1768
    %s1773 = scalar_lea.vmem [#allocation0], 448
    %v1774 = vld [vmem:[%s1773] sm:%s1382]
    %v1775 = vpack.c.bf16 0.0, %v1774
    %s1777 = ssub.s32 4, 1
    %s1778 = scalar_lea.vmem %s1, 112
    %1779 = vst [vmem:[%s1778] sm:%s1777] %v1775
    %s1780 = scalar_lea.vmem [#allocation0], 456
    %v1781 = vld [vmem:[%s1780] sm:%s1382]
    %v1782 = vpack.c.bf16 0.0, %v1781
    %s1784 = ssub.s32 4, 1
    %s1785 = scalar_lea.vmem %s1, 114
    %1786 = vst [vmem:[%s1785] sm:%s1784] %v1782
    %s1787 = scalar_lea.vmem [#allocation0], 464
    %v1788 = vld [vmem:[%s1787] sm:%s1382]
    %v1789 = vpack.c.bf16 0.0, %v1788
    %s1791 = ssub.s32 4, 1
    %s1792 = scalar_lea.vmem %s1, 116
    %1793 = vst [vmem:[%s1792] sm:%s1791] %v1789
    %s1794 = scalar_lea.vmem [#allocation0], 472
    %v1795 = vld [vmem:[%s1794] sm:%s1382]
    %v1796 = vpack.c.bf16 0.0, %v1795
    %s1798 = ssub.s32 4, 1
    %s1799 = scalar_lea.vmem %s1, 118
    %1800 = vst [vmem:[%s1799] sm:%s1798] %v1796
    %s1801 = scalar_lea.vmem [#allocation0], 480
    %v1802 = vld [vmem:[%s1801] sm:%s1382]
    %v1803 = vpack.c.bf16 0.0, %v1802
    %s1805 = ssub.s32 4, 1
    %s1806 = scalar_lea.vmem %s1, 120
    %1807 = vst [vmem:[%s1806] sm:%s1805] %v1803
    %s1808 = scalar_lea.vmem [#allocation0], 488
    %v1809 = vld [vmem:[%s1808] sm:%s1382]
    %v1810 = vpack.c.bf16 0.0, %v1809
    %s1812 = ssub.s32 4, 1
    %s1813 = scalar_lea.vmem %s1, 122
    %1814 = vst [vmem:[%s1813] sm:%s1812] %v1810
    %s1815 = scalar_lea.vmem [#allocation0], 496
    %v1816 = vld [vmem:[%s1815] sm:%s1382]
    %v1817 = vpack.c.bf16 0.0, %v1816
    %s1819 = ssub.s32 4, 1
    %s1820 = scalar_lea.vmem %s1, 124
    %1821 = vst [vmem:[%s1820] sm:%s1819] %v1817
    %s1822 = scalar_lea.vmem [#allocation0], 504
    %v1823 = vld [vmem:[%s1822] sm:%s1382]
    %v1824 = vpack.c.bf16 0.0, %v1823
    %s1826 = ssub.s32 4, 1
    %s1827 = scalar_lea.vmem %s1, 126
    %1828 = vst [vmem:[%s1827] sm:%s1826] %v1824
    %s1829 = scalar_lea.vmem [#allocation0], 512
    %v1830 = vld [vmem:[%s1829] sm:%s1382]
    %v1831 = vpack.c.bf16 0.0, %v1830
    %s1833 = ssub.s32 4, 1
    %s1834 = scalar_lea.vmem %s1, 128
    %1835 = vst [vmem:[%s1834] sm:%s1833] %v1831
    %s1836 = scalar_lea.vmem [#allocation0], 520
    %v1837 = vld [vmem:[%s1836] sm:%s1382]
    %v1838 = vpack.c.bf16 0.0, %v1837
    %s1840 = ssub.s32 4, 1
    %s1841 = scalar_lea.vmem %s1, 130
    %1842 = vst [vmem:[%s1841] sm:%s1840] %v1838
    %s1843 = scalar_lea.vmem [#allocation0], 528
    %v1844 = vld [vmem:[%s1843] sm:%s1382]
    %v1845 = vpack.c.bf16 0.0, %v1844
    %s1847 = ssub.s32 4, 1
    %s1848 = scalar_lea.vmem %s1, 132
    %1849 = vst [vmem:[%s1848] sm:%s1847] %v1845
    %s1850 = scalar_lea.vmem [#allocation0], 536
    %v1851 = vld [vmem:[%s1850] sm:%s1382]
    %v1852 = vpack.c.bf16 0.0, %v1851
    %s1854 = ssub.s32 4, 1
    %s1855 = scalar_lea.vmem %s1, 134
    %1856 = vst [vmem:[%s1855] sm:%s1854] %v1852
    %s1857 = scalar_lea.vmem [#allocation0], 544
    %v1858 = vld [vmem:[%s1857] sm:%s1382]
    %v1859 = vpack.c.bf16 0.0, %v1858
    %s1861 = ssub.s32 4, 1
    %s1862 = scalar_lea.vmem %s1, 136
    %1863 = vst [vmem:[%s1862] sm:%s1861] %v1859
    %s1864 = scalar_lea.vmem [#allocation0], 552
    %v1865 = vld [vmem:[%s1864] sm:%s1382]
    %v1866 = vpack.c.bf16 0.0, %v1865
    %s1868 = ssub.s32 4, 1
    %s1869 = scalar_lea.vmem %s1, 138
    %1870 = vst [vmem:[%s1869] sm:%s1868] %v1866
    %s1871 = scalar_lea.vmem [#allocation0], 560
    %v1872 = vld [vmem:[%s1871] sm:%s1382]
    %v1873 = vpack.c.bf16 0.0, %v1872
    %s1875 = ssub.s32 4, 1
    %s1876 = scalar_lea.vmem %s1, 140
    %1877 = vst [vmem:[%s1876] sm:%s1875] %v1873
    %s1878 = scalar_lea.vmem [#allocation0], 568
    %v1879 = vld [vmem:[%s1878] sm:%s1382]
    %v1880 = vpack.c.bf16 0.0, %v1879
    %s1882 = ssub.s32 4, 1
    %s1883 = scalar_lea.vmem %s1, 142
    %1884 = vst [vmem:[%s1883] sm:%s1882] %v1880
    %s1885 = scalar_lea.vmem [#allocation0], 576
    %v1886 = vld [vmem:[%s1885] sm:%s1382]
    %v1887 = vpack.c.bf16 0.0, %v1886
    %s1889 = ssub.s32 4, 1
    %s1890 = scalar_lea.vmem %s1, 144
    %1891 = vst [vmem:[%s1890] sm:%s1889] %v1887
    %s1892 = scalar_lea.vmem [#allocation0], 584
    %v1893 = vld [vmem:[%s1892] sm:%s1382]
    %v1894 = vpack.c.bf16 0.0, %v1893
    %s1896 = ssub.s32 4, 1
    %s1897 = scalar_lea.vmem %s1, 146
    %1898 = vst [vmem:[%s1897] sm:%s1896] %v1894
    %s1899 = scalar_lea.vmem [#allocation0], 592
    %v1900 = vld [vmem:[%s1899] sm:%s1382]
    %v1901 = vpack.c.bf16 0.0, %v1900
    %s1903 = ssub.s32 4, 1
    %s1904 = scalar_lea.vmem %s1, 148
    %1905 = vst [vmem:[%s1904] sm:%s1903] %v1901
    %s1906 = scalar_lea.vmem [#allocation0], 600
    %v1907 = vld [vmem:[%s1906] sm:%s1382]
    %v1908 = vpack.c.bf16 0.0, %v1907
    %s1910 = ssub.s32 4, 1
    %s1911 = scalar_lea.vmem %s1, 150
    %1912 = vst [vmem:[%s1911] sm:%s1910] %v1908
    %s1913 = scalar_lea.vmem [#allocation0], 608
    %v1914 = vld [vmem:[%s1913] sm:%s1382]
    %v1915 = vpack.c.bf16 0.0, %v1914
    %s1917 = ssub.s32 4, 1
    %s1918 = scalar_lea.vmem %s1, 152
    %1919 = vst [vmem:[%s1918] sm:%s1917] %v1915
    %s1920 = scalar_lea.vmem [#allocation0], 616
    %v1921 = vld [vmem:[%s1920] sm:%s1382]
    %v1922 = vpack.c.bf16 0.0, %v1921
    %s1924 = ssub.s32 4, 1
    %s1925 = scalar_lea.vmem %s1, 154
    %1926 = vst [vmem:[%s1925] sm:%s1924] %v1922
    %s1927 = scalar_lea.vmem [#allocation0], 624
    %v1928 = vld [vmem:[%s1927] sm:%s1382]
    %v1929 = vpack.c.bf16 0.0, %v1928
    %s1931 = ssub.s32 4, 1
    %s1932 = scalar_lea.vmem %s1, 156
    %1933 = vst [vmem:[%s1932] sm:%s1931] %v1929
    %s1934 = scalar_lea.vmem [#allocation0], 632
    %v1935 = vld [vmem:[%s1934] sm:%s1382]
    %v1936 = vpack.c.bf16 0.0, %v1935
    %s1938 = ssub.s32 4, 1
    %s1939 = scalar_lea.vmem %s1, 158
    %1940 = vst [vmem:[%s1939] sm:%s1938] %v1936
    %s1941 = scalar_lea.vmem [#allocation0], 640
    %v1942 = vld [vmem:[%s1941] sm:%s1382]
    %v1943 = vpack.c.bf16 0.0, %v1942
    %s1945 = ssub.s32 4, 1
    %s1946 = scalar_lea.vmem %s1, 160
    %1947 = vst [vmem:[%s1946] sm:%s1945] %v1943
    %s1948 = scalar_lea.vmem [#allocation0], 648
    %v1949 = vld [vmem:[%s1948] sm:%s1382]
    %v1950 = vpack.c.bf16 0.0, %v1949
    %s1952 = ssub.s32 4, 1
    %s1953 = scalar_lea.vmem %s1, 162
    %1954 = vst [vmem:[%s1953] sm:%s1952] %v1950
    %s1955 = scalar_lea.vmem [#allocation0], 656
    %v1956 = vld [vmem:[%s1955] sm:%s1382]
    %v1957 = vpack.c.bf16 0.0, %v1956
    %s1959 = ssub.s32 4, 1
    %s1960 = scalar_lea.vmem %s1, 164
    %1961 = vst [vmem:[%s1960] sm:%s1959] %v1957
    %s1962 = scalar_lea.vmem [#allocation0], 664
    %v1963 = vld [vmem:[%s1962] sm:%s1382]
    %v1964 = vpack.c.bf16 0.0, %v1963
    %s1966 = ssub.s32 4, 1
    %s1967 = scalar_lea.vmem %s1, 166
    %1968 = vst [vmem:[%s1967] sm:%s1966] %v1964
    %s1969 = scalar_lea.vmem [#allocation0], 672
    %v1970 = vld [vmem:[%s1969] sm:%s1382]
    %v1971 = vpack.c.bf16 0.0, %v1970
    %s1973 = ssub.s32 4, 1
    %s1974 = scalar_lea.vmem %s1, 168
    %1975 = vst [vmem:[%s1974] sm:%s1973] %v1971
    %s1976 = scalar_lea.vmem [#allocation0], 680
    %v1977 = vld [vmem:[%s1976] sm:%s1382]
    %v1978 = vpack.c.bf16 0.0, %v1977
    %s1980 = ssub.s32 4, 1
    %s1981 = scalar_lea.vmem %s1, 170
    %1982 = vst [vmem:[%s1981] sm:%s1980] %v1978
    %s1983 = scalar_lea.vmem [#allocation0], 688
    %v1984 = vld [vmem:[%s1983] sm:%s1382]
    %v1985 = vpack.c.bf16 0.0, %v1984
    %s1987 = ssub.s32 4, 1
    %s1988 = scalar_lea.vmem %s1, 172
    %1989 = vst [vmem:[%s1988] sm:%s1987] %v1985
    %s1990 = scalar_lea.vmem [#allocation0], 696
    %v1991 = vld [vmem:[%s1990] sm:%s1382]
    %v1992 = vpack.c.bf16 0.0, %v1991
    %s1994 = ssub.s32 4, 1
    %s1995 = scalar_lea.vmem %s1, 174
    %1996 = vst [vmem:[%s1995] sm:%s1994] %v1992
    %s1997 = scalar_lea.vmem [#allocation0], 704
    %v1998 = vld [vmem:[%s1997] sm:%s1382]
    %v1999 = vpack.c.bf16 0.0, %v1998
    %s2001 = ssub.s32 4, 1
    %s2002 = scalar_lea.vmem %s1, 176
    %2003 = vst [vmem:[%s2002] sm:%s2001] %v1999
    %s2004 = scalar_lea.vmem [#allocation0], 712
    %v2005 = vld [vmem:[%s2004] sm:%s1382]
    %v2006 = vpack.c.bf16 0.0, %v2005
    %s2008 = ssub.s32 4, 1
    %s2009 = scalar_lea.vmem %s1, 178
    %2010 = vst [vmem:[%s2009] sm:%s2008] %v2006
    %s2011 = scalar_lea.vmem [#allocation0], 720
    %v2012 = vld [vmem:[%s2011] sm:%s1382]
    %v2013 = vpack.c.bf16 0.0, %v2012
    %s2015 = ssub.s32 4, 1
    %s2016 = scalar_lea.vmem %s1, 180
    %2017 = vst [vmem:[%s2016] sm:%s2015] %v2013
    %s2018 = scalar_lea.vmem [#allocation0], 728
    %v2019 = vld [vmem:[%s2018] sm:%s1382]
    %v2020 = vpack.c.bf16 0.0, %v2019
    %s2022 = ssub.s32 4, 1
    %s2023 = scalar_lea.vmem %s1, 182
    %2024 = vst [vmem:[%s2023] sm:%s2022] %v2020
    %s2025 = scalar_lea.vmem [#allocation0], 736
    %v2026 = vld [vmem:[%s2025] sm:%s1382]
    %v2027 = vpack.c.bf16 0.0, %v2026
    %s2029 = ssub.s32 4, 1
    %s2030 = scalar_lea.vmem %s1, 184
    %2031 = vst [vmem:[%s2030] sm:%s2029] %v2027
    %s2032 = scalar_lea.vmem [#allocation0], 744
    %v2033 = vld [vmem:[%s2032] sm:%s1382]
    %v2034 = vpack.c.bf16 0.0, %v2033
    %s2036 = ssub.s32 4, 1
    %s2037 = scalar_lea.vmem %s1, 186
    %2038 = vst [vmem:[%s2037] sm:%s2036] %v2034
    %s2039 = scalar_lea.vmem [#allocation0], 752
    %v2040 = vld [vmem:[%s2039] sm:%s1382]
    %v2041 = vpack.c.bf16 0.0, %v2040
    %s2043 = ssub.s32 4, 1
    %s2044 = scalar_lea.vmem %s1, 188
    %2045 = vst [vmem:[%s2044] sm:%s2043] %v2041
    %s2046 = scalar_lea.vmem [#allocation0], 760
    %v2047 = vld [vmem:[%s2046] sm:%s1382]
    %v2048 = vpack.c.bf16 0.0, %v2047
    %s2050 = ssub.s32 4, 1
    %s2051 = scalar_lea.vmem %s1, 190
    %2052 = vst [vmem:[%s2051] sm:%s2050] %v2048
    %s2053 = scalar_lea.vmem [#allocation0], 768
    %v2054 = vld [vmem:[%s2053] sm:%s1382]
    %v2055 = vpack.c.bf16 0.0, %v2054
    %s2057 = ssub.s32 4, 1
    %s2058 = scalar_lea.vmem %s1, 192
    %2059 = vst [vmem:[%s2058] sm:%s2057] %v2055
    %s2060 = scalar_lea.vmem [#allocation0], 776
    %v2061 = vld [vmem:[%s2060] sm:%s1382]
    %v2062 = vpack.c.bf16 0.0, %v2061
    %s2064 = ssub.s32 4, 1
    %s2065 = scalar_lea.vmem %s1, 194
    %2066 = vst [vmem:[%s2065] sm:%s2064] %v2062
    %s2067 = scalar_lea.vmem [#allocation0], 784
    %v2068 = vld [vmem:[%s2067] sm:%s1382]
    %v2069 = vpack.c.bf16 0.0, %v2068
    %s2071 = ssub.s32 4, 1
    %s2072 = scalar_lea.vmem %s1, 196
    %2073 = vst [vmem:[%s2072] sm:%s2071] %v2069
    %s2074 = scalar_lea.vmem [#allocation0], 792
    %v2075 = vld [vmem:[%s2074] sm:%s1382]
    %v2076 = vpack.c.bf16 0.0, %v2075
    %s2078 = ssub.s32 4, 1
    %s2079 = scalar_lea.vmem %s1, 198
    %2080 = vst [vmem:[%s2079] sm:%s2078] %v2076
    %s2081 = scalar_lea.vmem [#allocation0], 800
    %v2082 = vld [vmem:[%s2081] sm:%s1382]
    %v2083 = vpack.c.bf16 0.0, %v2082
    %s2085 = ssub.s32 4, 1
    %s2086 = scalar_lea.vmem %s1, 200
    %2087 = vst [vmem:[%s2086] sm:%s2085] %v2083
    %s2088 = scalar_lea.vmem [#allocation0], 808
    %v2089 = vld [vmem:[%s2088] sm:%s1382]
    %v2090 = vpack.c.bf16 0.0, %v2089
    %s2092 = ssub.s32 4, 1
    %s2093 = scalar_lea.vmem %s1, 202
    %2094 = vst [vmem:[%s2093] sm:%s2092] %v2090
    %s2095 = scalar_lea.vmem [#allocation0], 816
    %v2096 = vld [vmem:[%s2095] sm:%s1382]
    %v2097 = vpack.c.bf16 0.0, %v2096
    %s2099 = ssub.s32 4, 1
    %s2100 = scalar_lea.vmem %s1, 204
    %2101 = vst [vmem:[%s2100] sm:%s2099] %v2097
    %s2102 = scalar_lea.vmem [#allocation0], 824
    %v2103 = vld [vmem:[%s2102] sm:%s1382]
    %v2104 = vpack.c.bf16 0.0, %v2103
    %s2106 = ssub.s32 4, 1
    %s2107 = scalar_lea.vmem %s1, 206
    %2108 = vst [vmem:[%s2107] sm:%s2106] %v2104
    %s2109 = scalar_lea.vmem [#allocation0], 832
    %v2110 = vld [vmem:[%s2109] sm:%s1382]
    %v2111 = vpack.c.bf16 0.0, %v2110
    %s2113 = ssub.s32 4, 1
    %s2114 = scalar_lea.vmem %s1, 208
    %2115 = vst [vmem:[%s2114] sm:%s2113] %v2111
    %s2116 = scalar_lea.vmem [#allocation0], 840
    %v2117 = vld [vmem:[%s2116] sm:%s1382]
    %v2118 = vpack.c.bf16 0.0, %v2117
    %s2120 = ssub.s32 4, 1
    %s2121 = scalar_lea.vmem %s1, 210
    %2122 = vst [vmem:[%s2121] sm:%s2120] %v2118
    %s2123 = scalar_lea.vmem [#allocation0], 848
    %v2124 = vld [vmem:[%s2123] sm:%s1382]
    %v2125 = vpack.c.bf16 0.0, %v2124
    %s2127 = ssub.s32 4, 1
    %s2128 = scalar_lea.vmem %s1, 212
    %2129 = vst [vmem:[%s2128] sm:%s2127] %v2125
    %s2130 = scalar_lea.vmem [#allocation0], 856
    %v2131 = vld [vmem:[%s2130] sm:%s1382]
    %v2132 = vpack.c.bf16 0.0, %v2131
    %s2134 = ssub.s32 4, 1
    %s2135 = scalar_lea.vmem %s1, 214
    %2136 = vst [vmem:[%s2135] sm:%s2134] %v2132
    %s2137 = scalar_lea.vmem [#allocation0], 864
    %v2138 = vld [vmem:[%s2137] sm:%s1382]
    %v2139 = vpack.c.bf16 0.0, %v2138
    %s2141 = ssub.s32 4, 1
    %s2142 = scalar_lea.vmem %s1, 216
    %2143 = vst [vmem:[%s2142] sm:%s2141] %v2139
    %s2144 = scalar_lea.vmem [#allocation0], 872
    %v2145 = vld [vmem:[%s2144] sm:%s1382]
    %v2146 = vpack.c.bf16 0.0, %v2145
    %s2148 = ssub.s32 4, 1
    %s2149 = scalar_lea.vmem %s1, 218
    %2150 = vst [vmem:[%s2149] sm:%s2148] %v2146
    %s2151 = scalar_lea.vmem [#allocation0], 880
    %v2152 = vld [vmem:[%s2151] sm:%s1382]
    %v2153 = vpack.c.bf16 0.0, %v2152
    %s2155 = ssub.s32 4, 1
    %s2156 = scalar_lea.vmem %s1, 220
    %2157 = vst [vmem:[%s2156] sm:%s2155] %v2153
    %s2158 = scalar_lea.vmem [#allocation0], 888
    %v2159 = vld [vmem:[%s2158] sm:%s1382]
    %v2160 = vpack.c.bf16 0.0, %v2159
    %s2162 = ssub.s32 4, 1
    %s2163 = scalar_lea.vmem %s1, 222
    %2164 = vst [vmem:[%s2163] sm:%s2162] %v2160
    %s2165 = scalar_lea.vmem [#allocation0], 896
    %v2166 = vld [vmem:[%s2165] sm:%s1382]
    %v2167 = vpack.c.bf16 0.0, %v2166
    %s2169 = ssub.s32 4, 1
    %s2170 = scalar_lea.vmem %s1, 224
    %2171 = vst [vmem:[%s2170] sm:%s2169] %v2167
    %s2172 = scalar_lea.vmem [#allocation0], 904
    %v2173 = vld [vmem:[%s2172] sm:%s1382]
    %v2174 = vpack.c.bf16 0.0, %v2173
    %s2176 = ssub.s32 4, 1
    %s2177 = scalar_lea.vmem %s1, 226
    %2178 = vst [vmem:[%s2177] sm:%s2176] %v2174
    %s2179 = scalar_lea.vmem [#allocation0], 912
    %v2180 = vld [vmem:[%s2179] sm:%s1382]
    %v2181 = vpack.c.bf16 0.0, %v2180
    %s2183 = ssub.s32 4, 1
    %s2184 = scalar_lea.vmem %s1, 228
    %2185 = vst [vmem:[%s2184] sm:%s2183] %v2181
    %s2186 = scalar_lea.vmem [#allocation0], 920
    %v2187 = vld [vmem:[%s2186] sm:%s1382]
    %v2188 = vpack.c.bf16 0.0, %v2187
    %s2190 = ssub.s32 4, 1
    %s2191 = scalar_lea.vmem %s1, 230
    %2192 = vst [vmem:[%s2191] sm:%s2190] %v2188
    %s2193 = scalar_lea.vmem [#allocation0], 928
    %v2194 = vld [vmem:[%s2193] sm:%s1382]
    %v2195 = vpack.c.bf16 0.0, %v2194
    %s2197 = ssub.s32 4, 1
    %s2198 = scalar_lea.vmem %s1, 232
    %2199 = vst [vmem:[%s2198] sm:%s2197] %v2195
    %s2200 = scalar_lea.vmem [#allocation0], 936
    %v2201 = vld [vmem:[%s2200] sm:%s1382]
    %v2202 = vpack.c.bf16 0.0, %v2201
    %s2204 = ssub.s32 4, 1
    %s2205 = scalar_lea.vmem %s1, 234
    %2206 = vst [vmem:[%s2205] sm:%s2204] %v2202
    %s2207 = scalar_lea.vmem [#allocation0], 944
    %v2208 = vld [vmem:[%s2207] sm:%s1382]
    %v2209 = vpack.c.bf16 0.0, %v2208
    %s2211 = ssub.s32 4, 1
    %s2212 = scalar_lea.vmem %s1, 236
    %2213 = vst [vmem:[%s2212] sm:%s2211] %v2209
    %s2214 = scalar_lea.vmem [#allocation0], 952
    %v2215 = vld [vmem:[%s2214] sm:%s1382]
    %v2216 = vpack.c.bf16 0.0, %v2215
    %s2218 = ssub.s32 4, 1
    %s2219 = scalar_lea.vmem %s1, 238
    %2220 = vst [vmem:[%s2219] sm:%s2218] %v2216
    %s2221 = scalar_lea.vmem [#allocation0], 960
    %v2222 = vld [vmem:[%s2221] sm:%s1382]
    %v2223 = vpack.c.bf16 0.0, %v2222
    %s2225 = ssub.s32 4, 1
    %s2226 = scalar_lea.vmem %s1, 240
    %2227 = vst [vmem:[%s2226] sm:%s2225] %v2223
    %s2228 = scalar_lea.vmem [#allocation0], 968
    %v2229 = vld [vmem:[%s2228] sm:%s1382]
    %v2230 = vpack.c.bf16 0.0, %v2229
    %s2232 = ssub.s32 4, 1
    %s2233 = scalar_lea.vmem %s1, 242
    %2234 = vst [vmem:[%s2233] sm:%s2232] %v2230
    %s2235 = scalar_lea.vmem [#allocation0], 976
    %v2236 = vld [vmem:[%s2235] sm:%s1382]
    %v2237 = vpack.c.bf16 0.0, %v2236
    %s2239 = ssub.s32 4, 1
    %s2240 = scalar_lea.vmem %s1, 244
    %2241 = vst [vmem:[%s2240] sm:%s2239] %v2237
    %s2242 = scalar_lea.vmem [#allocation0], 984
    %v2243 = vld [vmem:[%s2242] sm:%s1382]
    %v2244 = vpack.c.bf16 0.0, %v2243
    %s2246 = ssub.s32 4, 1
    %s2247 = scalar_lea.vmem %s1, 246
    %2248 = vst [vmem:[%s2247] sm:%s2246] %v2244
    %s2249 = scalar_lea.vmem [#allocation0], 992
    %v2250 = vld [vmem:[%s2249] sm:%s1382]
    %v2251 = vpack.c.bf16 0.0, %v2250
    %s2253 = ssub.s32 4, 1
    %s2254 = scalar_lea.vmem %s1, 248
    %2255 = vst [vmem:[%s2254] sm:%s2253] %v2251
    %s2256 = scalar_lea.vmem [#allocation0], 1000
    %v2257 = vld [vmem:[%s2256] sm:%s1382]
    %v2258 = vpack.c.bf16 0.0, %v2257
    %s2260 = ssub.s32 4, 1
    %s2261 = scalar_lea.vmem %s1, 250
    %2262 = vst [vmem:[%s2261] sm:%s2260] %v2258
    %s2263 = scalar_lea.vmem [#allocation0], 1008
    %v2264 = vld [vmem:[%s2263] sm:%s1382]
    %v2265 = vpack.c.bf16 0.0, %v2264
    %s2267 = ssub.s32 4, 1
    %s2268 = scalar_lea.vmem %s1, 252
    %2269 = vst [vmem:[%s2268] sm:%s2267] %v2265
    %s2270 = scalar_lea.vmem [#allocation0], 1016
    %v2271 = vld [vmem:[%s2270] sm:%s1382]
    %v2272 = vpack.c.bf16 0.0, %v2271
    %s2274 = ssub.s32 4, 1
    %s2275 = scalar_lea.vmem %s1, 254
    %2276 = vst [vmem:[%s2275] sm:%s2274] %v2272

</llo_original>
